<compile_context>
chip_gen: v7x
topology: tpu7x:2x2x1
jax: 0.10.0
libtpu: 0.0.40
codegen_flags: <defaults>
</compile_context>

<pallas_src>
import jax
import jax.numpy as jnp
from jax.experimental import pallas as pl
from jax.experimental.pallas import tpu as pltpu

# ---- problem configuration (small, consistent with the module) -------------
DIM = 31            # problem dimension ("dim" in Net.__init__)
D = DIM + 1         # dim + 1 = 32  (feature width of fc_input1/2 and attention)
N = 8               # number of candidate solutions per evaluation (rows / "seq")
DIM_PAD = 32        # lane-padded output width (stripped back to DIM in wrapper)
BOUND_HI = 100.0    # test_func.Bound[1] used to replace +/-inf
MAX_BLOCK_B = 256   # VMEM-safe cap for the per-step batch block


def _round_up(x, m):
    return ((x + m - 1) // m) * m


def _softmax_rows(z):
    """Numerically-stable softmax along the last axis (== F.softmax(..., dim=1))."""
    m = jnp.max(z, axis=-1, keepdims=True)
    e = jnp.exp(z - m)
    return e / jnp.sum(e, axis=-1, keepdims=True)


def net_kernel(x1_ref, x2_ref,
               w1t_ref, b1_ref,
               w2t_ref, b2_ref,
               wst_ref, bs_ref,
               wo1_ref, wo2_ref, bo_ref,
               out_ref):
    bB = out_ref.shape[0]                       # block_b

    # x*_ref: (block_b, N*D) bf16, lane-dense packed rows [seq0 | seq1 | ... | seq7].
    x1p = x1_ref[...]
    x2p = x2_ref[...]

    # Unpack to (N*block_b, D) rows in seq-major order: 8 static 32-lane slices
    # stacked along sublanes.  Seq-major order makes the attention context sum
    # below a set of sublane-aligned slice adds.
    xs1 = jnp.concatenate([x1p[:, s * D:(s + 1) * D] for s in range(N)], axis=0)
    xs2 = jnp.concatenate([x2p[:, s * D:(s + 1) * D] for s in range(N)], axis=0)

    # fc_input1 / fc_input2: bf16 operands on the MXU, f32 accumulation.
    z1 = jnp.dot(xs1, w1t_ref[...], preferred_element_type=jnp.float32) + b1_ref[...]
    z2 = jnp.dot(xs2, w2t_ref[...], preferred_element_type=jnp.float32) + b2_ref[...]

    # One fused softmax pass over both branches (stacked along sublanes).
    z = jnp.concatenate([z1, z2], axis=0)       # (2*N*block_b, D) f32
    h = _softmax_rows(z)                        # x_1 / x_2 stacked

    # SelfAttention, shared scorer applied once to the stacked activations:
    #   scores  = softmax(scorer(x), dim=1)
    #   context = sum_over_seq(scores * x)      (dropout == identity in eval)
    s = _softmax_rows(
        jnp.dot(h.astype(jnp.bfloat16), wst_ref[...],
                preferred_element_type=jnp.float32) + bs_ref[...])
    sh = s * h                                  # (2*N*block_b, D) f32

    # Context sum over the 8 sequence rows of each batch item: with seq-major
    # stacking these are 8 sublane-aligned static slices per branch.
    ctx1 = sh[0:bB, :]
    ctx2 = sh[N * bB:(N + 1) * bB, :]
    for q in range(1, N):
        ctx1 = ctx1 + sh[q * bB:(q + 1) * bB, :]
        ctx2 = ctx2 + sh[(N + q) * bB:(N + q + 1) * bB, :]

    # fc_out as two K=D dots against the pre-split, lane-padded weight halves
    # (no lane-axis concatenate of the two 32-lane contexts).
    out = (jnp.dot(ctx1, wo1_ref[...], preferred_element_type=jnp.float32)
           + jnp.dot(ctx2, wo2_ref[...], preferred_element_type=jnp.float32)
           + bo_ref[...])                       # (block_b, DIM_PAD)

    # +/-inf -> Bound[1], nan -> 0 (matches the torch.where calls exactly).
    out = jnp.where(jnp.isinf(out), jnp.float32(BOUND_HI), out)
    out = jnp.where(jnp.isnan(out), jnp.float32(0.0), out)
    out_ref[...] = out


def net_forward(input1, input2, params, *, block_b=None):
    """Batched forward: input1/input2 are (B, N, D) f32; returns (B, DIM) f32.

    block_b (default: auto) is the number of independent GA evaluations handled
    per grid step.  Auto selection targets >=2 grid steps when B allows (so the
    'parallel' grid axis can be sharded across v7x's two TensorCores) and caps
    the block at MAX_BLOCK_B so per-step VMEM stays well under the 32 MiB
    scoped limit on every generation (v5e's 16 MiB default is raised below).
    """
    (w1, b1, w2, b2, ws, bs, wo, bo) = params
    B = input1.shape[0]
    assert input1.shape == (B, N, D) and input2.shape == (B, N, D)

    if block_b is None:
        block_b = max(16, min(MAX_BLOCK_B, _round_up((B + 1) // 2, 16)))
    assert block_b % 16 == 0, "keep the bf16 batch block sublane-tile aligned"

    # Pre-transpose weights (no in-kernel .T); fc_input/scorer weights in bf16
    # for the MXU; fc_out split into two lane-padded f32 halves.
    w1t = w1.T.astype(jnp.bfloat16)                                   # (D, D)
    w2t = w2.T.astype(jnp.bfloat16)
    wst = ws.T.astype(jnp.bfloat16)
    wo_t = wo.T                                                       # (2D, DIM)
    wo1 = jnp.zeros((D, DIM_PAD), jnp.float32).at[:, :DIM].set(wo_t[:D])
    wo2 = jnp.zeros((D, DIM_PAD), jnp.float32).at[:, :DIM].set(wo_t[D:])
    bop = jnp.zeros((1, DIM_PAD), jnp.float32).at[:, :DIM].set(bo)

    # Pad the batch to a multiple of block_b and repack each evaluation as a
    # lane-dense (N*D,) = (256,) bf16 row: no 128-lane HBM padding, half-width
    # elements -> ~8x less input DMA than the padded (., 8, 32) f32 layout.
    Bp = _round_up(B, block_b)

    def prep(x):
        if Bp != B:
            x = jnp.pad(x, ((0, Bp - B), (0, 0), (0, 0)))
        return x.reshape(Bp, N * D).astype(jnp.bfloat16)

    x1p = prep(input1)
    x2p = prep(input2)

    const2d = lambda i: (0, 0)   # weights/biases stay resident across the grid
    grid_spec = pltpu.PrefetchScalarGridSpec(
        num_scalar_prefetch=0,
        grid=(Bp // block_b,),
        in_specs=[
            pl.BlockSpec((block_b, N * D), lambda i: (i, 0)),   # input1 (packed bf16)
            pl.BlockSpec((block_b, N * D), lambda i: (i, 0)),   # input2 (packed bf16)
            pl.BlockSpec((D, D), const2d),            # w1.T (bf16)
            pl.BlockSpec((1, D), const2d),            # b1
            pl.BlockSpec((D, D), const2d),            # w2.T (bf16)
            pl.BlockSpec((1, D), const2d),            # b2
            pl.BlockSpec((D, D), const2d),            # ws.T (attention scorer, bf16)
            pl.BlockSpec((1, D), const2d),            # bs
            pl.BlockSpec((D, DIM_PAD), const2d),      # wo.T first half (lane-padded)
            pl.BlockSpec((D, DIM_PAD), const2d),      # wo.T second half (lane-padded)
            pl.BlockSpec((1, DIM_PAD), const2d),      # bo (lane-padded)
        ],
        out_specs=pl.BlockSpec((block_b, DIM_PAD), lambda i: (i, 0)),
    )
    out = pl.pallas_call(
        net_kernel,
        out_shape=jax.ShapeDtypeStruct((Bp, DIM_PAD), jnp.float32),
        grid_spec=grid_spec,
        compiler_params=pltpu.CompilerParams(
            dimension_semantics=("parallel",),        # megacore sharding on v7x
            vmem_limit_bytes=32 * 1024 * 1024),       # raise v5e's 16 MiB default
    )(x1p, x2p, w1t, b1, w2t, b2, wst, bs, wo1, wo2, bop)
    return out[:B, :DIM]


def net_forward_ref(input1, input2, params):
    """Pure-JAX f32 reference mirroring the PyTorch forward (eval mode),
    vmapped over the leading batch of independent evaluations."""
    (w1, b1, w2, b2, ws, bs, wo, bo) = params

    def one(x1, x2):
        h1 = jax.nn.softmax(x1 @ w1.T + b1, axis=1)
        h2 = jax.nn.softmax(x2 @ w2.T + b2, axis=1)
        s1 = jax.nn.softmax(h1 @ ws.T + bs, axis=1)
        s2 = jax.nn.softmax(h2 @ ws.T + bs, axis=1)
        ctx1 = jnp.sum(s1 * h1, axis=0, keepdims=True)
        ctx2 = jnp.sum(s2 * h2, axis=0, keepdims=True)
        x3 = jnp.concatenate([ctx1, ctx2], axis=1) @ wo.T + bo
        x3 = jnp.where(jnp.isinf(x3), BOUND_HI, x3)
        x3 = jnp.where(jnp.isnan(x3), 0.0, x3)
        return x3[0]

    return jax.vmap(one)(input1, input2)


def make_params(key):
    """Deterministic init: weights ~ U(0,1) (as in Net._init_weight),
    biases ~ PyTorch Linear default U(-1/sqrt(fan_in), 1/sqrt(fan_in))."""
    ks = jax.random.split(key, 8)
    u = lambda k, shape: jax.random.uniform(k, shape, dtype=jnp.float32)
    bnd = lambda fan_in: 1.0 / jnp.sqrt(jnp.float32(fan_in))

    w1 = u(ks[0], (D, D))
    b1 = jax.random.uniform(ks[1], (1, D), jnp.float32, -bnd(D), bnd(D))
    w2 = u(ks[2], (D, D))
    b2 = jax.random.uniform(ks[3], (1, D), jnp.float32, -bnd(D), bnd(D))
    ws = u(ks[4], (D, D))
    bs = jax.random.uniform(ks[5], (1, D), jnp.float32, -bnd(D), bnd(D))
    wo = u(ks[6], (DIM, 2 * D))
    bo = jax.random.uniform(ks[7], (1, DIM), jnp.float32, -bnd(2 * D), bnd(2 * D))
    return (w1, b1, w2, b2, ws, bs, wo, bo)


if __name__ == "__main__":
    key = jax.random.PRNGKey(0)
    k_p, k_x1, k_x2 = jax.random.split(key, 3)

    params = make_params(k_p)
    # B independent GA evaluations, each with two populations of (N, dim+1).
    B = 64
    input1 = jax.random.normal(k_x1, (B, N, D), dtype=jnp.float32)
    input2 = jax.random.normal(k_x2, (B, N, D), dtype=jnp.float32)

    # Auto block_b: 32 -> grid of 2 "parallel" steps (both v7x TCs busy).
    out = jax.block_until_ready(net_forward(input1, input2, params))
    ref = jax.block_until_ready(net_forward_ref(input1, input2, params))

    assert out.shape == (B, DIM), out.shape
    # bf16 MXU operands vs. the f32 reference -> loosened tolerance (per review).
    assert jnp.allclose(out, ref, rtol=2e-2, atol=2e-2), (out, ref)

    # TODO(synk): SelfAttention's nn.Dropout is modeled as eval-mode identity
    # (the deterministic forward); training-mode dropout is not implemented.
    print("KERNEL_OK")
</pallas_src>

<mosaic_0001>
module attributes {stable_mosaic.version = 11 : i64} {
  func.func @net_kernel(%arg0: i32, %arg1: memref<32x256xbf16, #tpu.memory_space<vmem>>, %arg2: memref<32x256xbf16, #tpu.memory_space<vmem>>, %arg3: memref<32x32xbf16, #tpu.memory_space<vmem>>, %arg4: memref<1x32xf32, #tpu.memory_space<vmem>>, %arg5: memref<32x32xbf16, #tpu.memory_space<vmem>>, %arg6: memref<1x32xf32, #tpu.memory_space<vmem>>, %arg7: memref<32x32xbf16, #tpu.memory_space<vmem>>, %arg8: memref<1x32xf32, #tpu.memory_space<vmem>>, %arg9: memref<32x32xf32, #tpu.memory_space<vmem>>, %arg10: memref<32x32xf32, #tpu.memory_space<vmem>>, %arg11: memref<1x32xf32, #tpu.memory_space<vmem>>, %arg12: memref<32x32xf32, #tpu.memory_space<vmem>>) attributes {dimension_semantics = [#tpu.dimension_semantics<parallel>], iteration_bounds = array<i64: 2>, scalar_prefetch = 0 : i64, scratch_operands = 0 : i64, tpu.core_type = #tpu.core_type<tc>, window_params = [{transform_indices = @transform_0, window_bounds = array<i64: 32, 256>}, {transform_indices = @transform_1, window_bounds = array<i64: 32, 256>}, {pipeline_mode = #tpu.pipeline_mode<synchronous>, transform_indices = @transform_2, window_bounds = array<i64: 32, 32>}, {pipeline_mode = #tpu.pipeline_mode<synchronous>, transform_indices = @transform_3, window_bounds = array<i64: 1, 32>}, {pipeline_mode = #tpu.pipeline_mode<synchronous>, transform_indices = @transform_4, window_bounds = array<i64: 32, 32>}, {pipeline_mode = #tpu.pipeline_mode<synchronous>, transform_indices = @transform_5, window_bounds = array<i64: 1, 32>}, {pipeline_mode = #tpu.pipeline_mode<synchronous>, transform_indices = @transform_6, window_bounds = array<i64: 32, 32>}, {pipeline_mode = #tpu.pipeline_mode<synchronous>, transform_indices = @transform_7, window_bounds = array<i64: 1, 32>}, {pipeline_mode = #tpu.pipeline_mode<synchronous>, transform_indices = @transform_8, window_bounds = array<i64: 32, 32>}, {pipeline_mode = #tpu.pipeline_mode<synchronous>, transform_indices = @transform_9, window_bounds = array<i64: 32, 32>}, {pipeline_mode = #tpu.pipeline_mode<synchronous>, transform_indices = @transform_10, window_bounds = array<i64: 1, 32>}, {transform_indices = @transform_11, window_bounds = array<i64: 32, 32>}]} {
    %c0 = arith.constant 0 : index
    %c0_0 = arith.constant 0 : index
    %0 = vector.load %arg1[%c0, %c0_0] : memref<32x256xbf16, #tpu.memory_space<vmem>>, vector<32x256xbf16>
    %c0_1 = arith.constant 0 : index
    %c0_2 = arith.constant 0 : index
    %1 = vector.load %arg2[%c0_1, %c0_2] : memref<32x256xbf16, #tpu.memory_space<vmem>>, vector<32x256xbf16>
    %2 = vector.extract_strided_slice %0 {offsets = [0, 0], sizes = [32, 32], strides = [1, 1]} : vector<32x256xbf16> to vector<32x32xbf16>
    %3 = vector.extract_strided_slice %0 {offsets = [0, 32], sizes = [32, 32], strides = [1, 1]} : vector<32x256xbf16> to vector<32x32xbf16>
    %4 = vector.extract_strided_slice %0 {offsets = [0, 64], sizes = [32, 32], strides = [1, 1]} : vector<32x256xbf16> to vector<32x32xbf16>
    %5 = vector.extract_strided_slice %0 {offsets = [0, 96], sizes = [32, 32], strides = [1, 1]} : vector<32x256xbf16> to vector<32x32xbf16>
    %6 = vector.extract_strided_slice %0 {offsets = [0, 128], sizes = [32, 32], strides = [1, 1]} : vector<32x256xbf16> to vector<32x32xbf16>
    %7 = vector.extract_strided_slice %0 {offsets = [0, 160], sizes = [32, 32], strides = [1, 1]} : vector<32x256xbf16> to vector<32x32xbf16>
    %8 = vector.extract_strided_slice %0 {offsets = [0, 192], sizes = [32, 32], strides = [1, 1]} : vector<32x256xbf16> to vector<32x32xbf16>
    %9 = vector.extract_strided_slice %0 {offsets = [0, 224], sizes = [32, 32], strides = [1, 1]} : vector<32x256xbf16> to vector<32x32xbf16>
    %10 = tpu.concatenate %2, %3, %4, %5, %6, %7, %8, %9 in 0 : vector<32x32xbf16>, vector<32x32xbf16>, vector<32x32xbf16>, vector<32x32xbf16>, vector<32x32xbf16>, vector<32x32xbf16>, vector<32x32xbf16>, vector<32x32xbf16> -> vector<256x32xbf16>
    %11 = vector.extract_strided_slice %1 {offsets = [0, 0], sizes = [32, 32], strides = [1, 1]} : vector<32x256xbf16> to vector<32x32xbf16>
    %12 = vector.extract_strided_slice %1 {offsets = [0, 32], sizes = [32, 32], strides = [1, 1]} : vector<32x256xbf16> to vector<32x32xbf16>
    %13 = vector.extract_strided_slice %1 {offsets = [0, 64], sizes = [32, 32], strides = [1, 1]} : vector<32x256xbf16> to vector<32x32xbf16>
    %14 = vector.extract_strided_slice %1 {offsets = [0, 96], sizes = [32, 32], strides = [1, 1]} : vector<32x256xbf16> to vector<32x32xbf16>
    %15 = vector.extract_strided_slice %1 {offsets = [0, 128], sizes = [32, 32], strides = [1, 1]} : vector<32x256xbf16> to vector<32x32xbf16>
    %16 = vector.extract_strided_slice %1 {offsets = [0, 160], sizes = [32, 32], strides = [1, 1]} : vector<32x256xbf16> to vector<32x32xbf16>
    %17 = vector.extract_strided_slice %1 {offsets = [0, 192], sizes = [32, 32], strides = [1, 1]} : vector<32x256xbf16> to vector<32x32xbf16>
    %18 = vector.extract_strided_slice %1 {offsets = [0, 224], sizes = [32, 32], strides = [1, 1]} : vector<32x256xbf16> to vector<32x32xbf16>
    %19 = tpu.concatenate %11, %12, %13, %14, %15, %16, %17, %18 in 0 : vector<32x32xbf16>, vector<32x32xbf16>, vector<32x32xbf16>, vector<32x32xbf16>, vector<32x32xbf16>, vector<32x32xbf16>, vector<32x32xbf16>, vector<32x32xbf16> -> vector<256x32xbf16>
    %c0_3 = arith.constant 0 : index
    %c0_4 = arith.constant 0 : index
    %20 = vector.load %arg3[%c0_3, %c0_4] : memref<32x32xbf16, #tpu.memory_space<vmem>>, vector<32x32xbf16>
    %cst = arith.constant dense<0.000000e+00> : vector<256x32xf32>
    %21 = tpu.matmul %10, %20, %cst {dimension_numbers = #tpu.dot_dimension_numbers<[1], [0], [0], [1], [0, 0, 1, 1], [], []>} : vector<256x32xbf16>, vector<32x32xbf16>, vector<256x32xf32> -> vector<256x32xf32>
    %c0_5 = arith.constant 0 : index
    %c0_6 = arith.constant 0 : index
    %22 = vector.load %arg4[%c0_5, %c0_6] : memref<1x32xf32, #tpu.memory_space<vmem>>, vector<1x32xf32>
    %23 = vector.broadcast %22 : vector<1x32xf32> to vector<256x32xf32>
    %24 = arith.addf %21, %23 : vector<256x32xf32>
    %c0_7 = arith.constant 0 : index
    %c0_8 = arith.constant 0 : index
    %25 = vector.load %arg5[%c0_7, %c0_8] : memref<32x32xbf16, #tpu.memory_space<vmem>>, vector<32x32xbf16>
    %cst_9 = arith.constant dense<0.000000e+00> : vector<256x32xf32>
    %26 = tpu.matmul %19, %25, %cst_9 {dimension_numbers = #tpu.dot_dimension_numbers<[1], [0], [0], [1], [0, 0, 1, 1], [], []>} : vector<256x32xbf16>, vector<32x32xbf16>, vector<256x32xf32> -> vector<256x32xf32>
    %c0_10 = arith.constant 0 : index
    %c0_11 = arith.constant 0 : index
    %27 = vector.load %arg6[%c0_10, %c0_11] : memref<1x32xf32, #tpu.memory_space<vmem>>, vector<1x32xf32>
    %28 = vector.broadcast %27 : vector<1x32xf32> to vector<256x32xf32>
    %29 = arith.addf %26, %28 : vector<256x32xf32>
    %30 = tpu.concatenate %24, %29 in 0 : vector<256x32xf32>, vector<256x32xf32> -> vector<512x32xf32>
    %cst_12 = arith.constant dense<0xFF800000> : vector<512xf32>
    %31 = vector.multi_reduction <maximumf>, %30, %cst_12 [1] : vector<512x32xf32> to vector<512xf32>
    %32 = vector.shape_cast %31 : vector<512xf32> to vector<512x1xf32>
    %33 = vector.broadcast %32 : vector<512x1xf32> to vector<512x32xf32>
    %34 = arith.subf %30, %33 : vector<512x32xf32>
    %35 = math.exp %34 : vector<512x32xf32>
    %cst_13 = arith.constant dense<0.000000e+00> : vector<512xf32>
    %36 = vector.multi_reduction <add>, %35, %cst_13 [1] : vector<512x32xf32> to vector<512xf32>
    %37 = vector.shape_cast %36 : vector<512xf32> to vector<512x1xf32>
    %38 = vector.broadcast %37 : vector<512x1xf32> to vector<512x32xf32>
    %39 = arith.divf %35, %38 : vector<512x32xf32>
    %40 = arith.truncf %39 : vector<512x32xf32> to vector<512x32xbf16>
    %c0_14 = arith.constant 0 : index
    %c0_15 = arith.constant 0 : index
    %41 = vector.load %arg7[%c0_14, %c0_15] : memref<32x32xbf16, #tpu.memory_space<vmem>>, vector<32x32xbf16>
    %cst_16 = arith.constant dense<0.000000e+00> : vector<512x32xf32>
    %42 = tpu.matmul %40, %41, %cst_16 {dimension_numbers = #tpu.dot_dimension_numbers<[1], [0], [0], [1], [0, 0, 1, 1], [], []>} : vector<512x32xbf16>, vector<32x32xbf16>, vector<512x32xf32> -> vector<512x32xf32>
    %c0_17 = arith.constant 0 : index
    %c0_18 = arith.constant 0 : index
    %43 = vector.load %arg8[%c0_17, %c0_18] : memref<1x32xf32, #tpu.memory_space<vmem>>, vector<1x32xf32>
    %44 = vector.broadcast %43 : vector<1x32xf32> to vector<512x32xf32>
    %45 = arith.addf %42, %44 : vector<512x32xf32>
    %cst_19 = arith.constant dense<0xFF800000> : vector<512xf32>
    %46 = vector.multi_reduction <maximumf>, %45, %cst_19 [1] : vector<512x32xf32> to vector<512xf32>
    %47 = vector.shape_cast %46 : vector<512xf32> to vector<512x1xf32>
    %48 = vector.broadcast %47 : vector<512x1xf32> to vector<512x32xf32>
    %49 = arith.subf %45, %48 : vector<512x32xf32>
    %50 = math.exp %49 : vector<512x32xf32>
    %cst_20 = arith.constant dense<0.000000e+00> : vector<512xf32>
    %51 = vector.multi_reduction <add>, %50, %cst_20 [1] : vector<512x32xf32> to vector<512xf32>
    %52 = vector.shape_cast %51 : vector<512xf32> to vector<512x1xf32>
    %53 = vector.broadcast %52 : vector<512x1xf32> to vector<512x32xf32>
    %54 = arith.divf %50, %53 : vector<512x32xf32>
    %55 = arith.mulf %54, %39 : vector<512x32xf32>
    %56 = vector.extract_strided_slice %55 {offsets = [0, 0], sizes = [32, 32], strides = [1, 1]} : vector<512x32xf32> to vector<32x32xf32>
    %57 = vector.extract_strided_slice %55 {offsets = [256, 0], sizes = [32, 32], strides = [1, 1]} : vector<512x32xf32> to vector<32x32xf32>
    %58 = vector.extract_strided_slice %55 {offsets = [32, 0], sizes = [32, 32], strides = [1, 1]} : vector<512x32xf32> to vector<32x32xf32>
    %59 = arith.addf %56, %58 : vector<32x32xf32>
    %60 = vector.extract_strided_slice %55 {offsets = [288, 0], sizes = [32, 32], strides = [1, 1]} : vector<512x32xf32> to vector<32x32xf32>
    %61 = arith.addf %57, %60 : vector<32x32xf32>
    %62 = vector.extract_strided_slice %55 {offsets = [64, 0], sizes = [32, 32], strides = [1, 1]} : vector<512x32xf32> to vector<32x32xf32>
    %63 = arith.addf %59, %62 : vector<32x32xf32>
    %64 = vector.extract_strided_slice %55 {offsets = [320, 0], sizes = [32, 32], strides = [1, 1]} : vector<512x32xf32> to vector<32x32xf32>
    %65 = arith.addf %61, %64 : vector<32x32xf32>
    %66 = vector.extract_strided_slice %55 {offsets = [96, 0], sizes = [32, 32], strides = [1, 1]} : vector<512x32xf32> to vector<32x32xf32>
    %67 = arith.addf %63, %66 : vector<32x32xf32>
    %68 = vector.extract_strided_slice %55 {offsets = [352, 0], sizes = [32, 32], strides = [1, 1]} : vector<512x32xf32> to vector<32x32xf32>
    %69 = arith.addf %65, %68 : vector<32x32xf32>
    %70 = vector.extract_strided_slice %55 {offsets = [128, 0], sizes = [32, 32], strides = [1, 1]} : vector<512x32xf32> to vector<32x32xf32>
    %71 = arith.addf %67, %70 : vector<32x32xf32>
    %72 = vector.extract_strided_slice %55 {offsets = [384, 0], sizes = [32, 32], strides = [1, 1]} : vector<512x32xf32> to vector<32x32xf32>
    %73 = arith.addf %69, %72 : vector<32x32xf32>
    %74 = vector.extract_strided_slice %55 {offsets = [160, 0], sizes = [32, 32], strides = [1, 1]} : vector<512x32xf32> to vector<32x32xf32>
    %75 = arith.addf %71, %74 : vector<32x32xf32>
    %76 = vector.extract_strided_slice %55 {offsets = [416, 0], sizes = [32, 32], strides = [1, 1]} : vector<512x32xf32> to vector<32x32xf32>
    %77 = arith.addf %73, %76 : vector<32x32xf32>
    %78 = vector.extract_strided_slice %55 {offsets = [192, 0], sizes = [32, 32], strides = [1, 1]} : vector<512x32xf32> to vector<32x32xf32>
    %79 = arith.addf %75, %78 : vector<32x32xf32>
    %80 = vector.extract_strided_slice %55 {offsets = [448, 0], sizes = [32, 32], strides = [1, 1]} : vector<512x32xf32> to vector<32x32xf32>
    %81 = arith.addf %77, %80 : vector<32x32xf32>
    %82 = vector.extract_strided_slice %55 {offsets = [224, 0], sizes = [32, 32], strides = [1, 1]} : vector<512x32xf32> to vector<32x32xf32>
    %83 = arith.addf %79, %82 : vector<32x32xf32>
    %84 = vector.extract_strided_slice %55 {offsets = [480, 0], sizes = [32, 32], strides = [1, 1]} : vector<512x32xf32> to vector<32x32xf32>
    %85 = arith.addf %81, %84 : vector<32x32xf32>
    %c0_21 = arith.constant 0 : index
    %c0_22 = arith.constant 0 : index
    %86 = vector.load %arg9[%c0_21, %c0_22] : memref<32x32xf32, #tpu.memory_space<vmem>>, vector<32x32xf32>
    %cst_23 = arith.constant dense<0.000000e+00> : vector<32x32xf32>
    %87 = tpu.matmul %83, %86, %cst_23 {dimension_numbers = #tpu.dot_dimension_numbers<[1], [0], [0], [1], [0, 0, 1, 1], [], []>} : vector<32x32xf32>, vector<32x32xf32>, vector<32x32xf32> -> vector<32x32xf32>
    %c0_24 = arith.constant 0 : index
    %c0_25 = arith.constant 0 : index
    %88 = vector.load %arg10[%c0_24, %c0_25] : memref<32x32xf32, #tpu.memory_space<vmem>>, vector<32x32xf32>
    %cst_26 = arith.constant dense<0.000000e+00> : vector<32x32xf32>
    %89 = tpu.matmul %85, %88, %cst_26 {dimension_numbers = #tpu.dot_dimension_numbers<[1], [0], [0], [1], [0, 0, 1, 1], [], []>} : vector<32x32xf32>, vector<32x32xf32>, vector<32x32xf32> -> vector<32x32xf32>
    %90 = arith.addf %87, %89 : vector<32x32xf32>
    %c0_27 = arith.constant 0 : index
    %c0_28 = arith.constant 0 : index
    %91 = vector.load %arg11[%c0_27, %c0_28] : memref<1x32xf32, #tpu.memory_space<vmem>>, vector<1x32xf32>
    %92 = vector.broadcast %91 : vector<1x32xf32> to vector<32x32xf32>
    %93 = arith.addf %90, %92 : vector<32x32xf32>
    %94 = math.absf %93 : vector<32x32xf32>
    %cst_29 = arith.constant 0x7F800000 : f32
    %95 = vector.broadcast %cst_29 : f32 to vector<32x32xf32>
    %96 = arith.cmpf oeq, %94, %95 : vector<32x32xf32>
    %cst_30 = arith.constant 1.000000e+02 : f32
    %97 = vector.broadcast %cst_30 : f32 to vector<32x32xf32>
    %98 = arith.select %96, %97, %93 : vector<32x32xi1>, vector<32x32xf32>
    %99 = arith.cmpf one, %98, %98 : vector<32x32xf32>
    %cst_31 = arith.constant 0.000000e+00 : f32
    %100 = vector.broadcast %cst_31 : f32 to vector<32x32xf32>
    %101 = arith.select %99, %100, %98 : vector<32x32xi1>, vector<32x32xf32>
    %c0_32 = arith.constant 0 : index
    %c0_33 = arith.constant 0 : index
    %102 = vector.load %arg12[%c0_32, %c0_33] : memref<32x32xf32, #tpu.memory_space<vmem>>, vector<32x32xf32>
    tpu.vector_store %arg12[%c0_32, %c0_33], %101 {strides = array<i32>} : memref<32x32xf32, #tpu.memory_space<vmem>>, vector<32x32xf32>,
    return
  }
  func.func @transform_0(%arg0: i32) -> (i32, i32) {
    %c0_i32 = arith.constant 0 : i32
    %c0_i32_0 = arith.constant 0 : i32
    return %arg0, %c0_i32 : i32, i32
  }
  func.func @transform_1(%arg0: i32) -> (i32, i32) {
    %c0_i32 = arith.constant 0 : i32
    %c0_i32_0 = arith.constant 0 : i32
    return %arg0, %c0_i32 : i32, i32
  }
  func.func @transform_2(%arg0: i32) -> (i32, i32) {
    %c0_i32 = arith.constant 0 : i32
    %c0_i32_0 = arith.constant 0 : i32
    %c0_i32_1 = arith.constant 0 : i32
    return %c0_i32, %c0_i32_0 : i32, i32
  }
  func.func @transform_3(%arg0: i32) -> (i32, i32) {
    %c0_i32 = arith.constant 0 : i32
    %c0_i32_0 = arith.constant 0 : i32
    %c0_i32_1 = arith.constant 0 : i32
    return %c0_i32, %c0_i32_0 : i32, i32
  }
  func.func @transform_4(%arg0: i32) -> (i32, i32) {
    %c0_i32 = arith.constant 0 : i32
    %c0_i32_0 = arith.constant 0 : i32
    %c0_i32_1 = arith.constant 0 : i32
    return %c0_i32, %c0_i32_0 : i32, i32
  }
  func.func @transform_5(%arg0: i32) -> (i32, i32) {
    %c0_i32 = arith.constant 0 : i32
    %c0_i32_0 = arith.constant 0 : i32
    %c0_i32_1 = arith.constant 0 : i32
    return %c0_i32, %c0_i32_0 : i32, i32
  }
  func.func @transform_6(%arg0: i32) -> (i32, i32) {
    %c0_i32 = arith.constant 0 : i32
    %c0_i32_0 = arith.constant 0 : i32
    %c0_i32_1 = arith.constant 0 : i32
    return %c0_i32, %c0_i32_0 : i32, i32
  }
  func.func @transform_7(%arg0: i32) -> (i32, i32) {
    %c0_i32 = arith.constant 0 : i32
    %c0_i32_0 = arith.constant 0 : i32
    %c0_i32_1 = arith.constant 0 : i32
    return %c0_i32, %c0_i32_0 : i32, i32
  }
  func.func @transform_8(%arg0: i32) -> (i32, i32) {
    %c0_i32 = arith.constant 0 : i32
    %c0_i32_0 = arith.constant 0 : i32
    %c0_i32_1 = arith.constant 0 : i32
    return %c0_i32, %c0_i32_0 : i32, i32
  }
  func.func @transform_9(%arg0: i32) -> (i32, i32) {
    %c0_i32 = arith.constant 0 : i32
    %c0_i32_0 = arith.constant 0 : i32
    %c0_i32_1 = arith.constant 0 : i32
    return %c0_i32, %c0_i32_0 : i32, i32
  }
  func.func @transform_10(%arg0: i32) -> (i32, i32) {
    %c0_i32 = arith.constant 0 : i32
    %c0_i32_0 = arith.constant 0 : i32
    %c0_i32_1 = arith.constant 0 : i32
    return %c0_i32, %c0_i32_0 : i32, i32
  }
  func.func @transform_11(%arg0: i32) -> (i32, i32) {
    %c0_i32 = arith.constant 0 : i32
    %c0_i32_0 = arith.constant 0 : i32
    return %arg0, %c0_i32 : i32, i32
  }
}

</mosaic_0001>

<llo_original>
// kernel: tpu_custom_call.1
$region0: #{tpu_custom_call.1}
  #allocation0 [shape = 'u32[]', space=smem, size = 0x4, offset = 0x4, fixed_abs, tag = 'smem constant byte address 0x4 - core index']
  #allocation1 [shape = 'u32[144,128]{1,0:T(1,128)}', space=vmem, size = 0x12000, scoped, tag = 'internal scratch']
  %s0 = inlined_call_operand.hbm [shape: bf16[64,256], index: 0, kind: input, shape index: {}]
  %s1 = inlined_call_operand.hbm [shape: bf16[64,256], index: 1, kind: input, shape index: {}]
  %s2 = inlined_call_operand.hbm [shape: bf16[32,32], index: 2, kind: input, shape index: {}]
  %s3 = inlined_call_operand.vmem [shape: f32[1,32], index: 3, kind: input, shape index: {}]
  %s4 = inlined_call_operand.hbm [shape: bf16[32,32], index: 4, kind: input, shape index: {}]
  %s5 = inlined_call_operand.vmem [shape: f32[1,32], index: 5, kind: input, shape index: {}]
  %s6 = inlined_call_operand.hbm [shape: bf16[32,32], index: 6, kind: input, shape index: {}]
  %s7 = inlined_call_operand.hbm [shape: f32[1,32], index: 7, kind: input, shape index: {}]
  %s8 = inlined_call_operand.hbm [shape: f32[32,32], index: 8, kind: input, shape index: {}]
  %s9 = inlined_call_operand.vmem [shape: f32[32,32], index: 9, kind: input, shape index: {}]
  %s10 = inlined_call_operand.vmem [shape: f32[1,32], index: 10, kind: input, shape index: {}]
  %s11 = inlined_call_operand.vmem [shape: f32[64,32], index: 11, kind: output, shape index: {}]
  %s12 = sld [smem:[#allocation0]]
  $region105: #{tpu_custom_call.1} parent=0
    _
  %s14 = ssub.s32 1, %s12
  %s15 = scalar_select 0, %s14, %s12
  $region1: #{tpu_custom_call.1} parent=0
    #allocation2 [shape = 'u8[32768]{0}', space=vmem, size = 0x8000, scoped, tag = 'input window, operand 0']
    #allocation3 [shape = 's32[2]{0}', space=sflag, size = 0x8, scoped, tag = 'scoped memory for tpu_custom_call.1']
    #allocation4 [shape = 'u8[32768]{0}', space=vmem, size = 0x8000, scoped, tag = 'input window, operand 1']
    #allocation5 [shape = 's32[2]{0}', space=sflag, size = 0x8, scoped, tag = 'scoped memory for tpu_custom_call.1']
    #allocation6 [shape = 'u8[8192]{0}', space=vmem, size = 0x2000, scoped, tag = 'input window, operand 2, single buffered']
    #allocation7 [shape = 'u8[8192]{0}', space=vmem, size = 0x2000, scoped, tag = 'input window, operand 4, single buffered']
    #allocation8 [shape = 's32[1]{0}', space=sflag, size = 0x4, scoped, tag = 'scoped memory for tpu_custom_call.1']
    #allocation9 [shape = 'u8[8192]{0}', space=vmem, size = 0x2000, scoped, tag = 'input window, operand 6, single buffered']
    #allocation10 [shape = 'u8[512]{0}', space=vmem, size = 0x400, scoped, tag = 'input window, operand 7, single buffered']
    #allocation11 [shape = 's32[1]{0}', space=sflag, size = 0x4, scoped, tag = 'scoped memory for tpu_custom_call.1']
    #allocation12 [shape = 'u8[16384]{0}', space=vmem, size = 0x4000, scoped, tag = 'input window, operand 8, single buffered']
    %16 = vsyncpa [#allocation3], 0
    %s17 = scalar_lea.sflag [#allocation3], 1
    %18 = vsyncpa %s17, 0
    %19 = vsyncpa [#allocation5], 0
    %s20 = scalar_lea.sflag [#allocation5], 1
    %21 = vsyncpa %s20, 0
    %22 = vsyncpa [#allocation8], 0
    %23 = vsyncpa [#allocation11], 0
    loop: start=0, step=1, limit=4
    $region2: #{tpu_custom_call.1} parent=1 // loop_pre_header
      _
    $region3: #{tpu_custom_call.1} parent=1 // loop_header
      %s25 = sphi 0, %s29
      %p26 = scmp.ge.s32.totalorder %s25, 4
      %s35 = sphi 0, %s37
      %s38 = sphi 0, %s35
      %s39 = sphi 0, %s38
      %s55 = sphi 0, %s39
      %s61 = sphi 0, %s63
      %s64 = sphi 0, %s61
      %s65 = sphi 0, %s64
      %s81 = sphi 0, %s65
      %s85 = sphi 0, %s85
      %s87 = sphi 0, %s85
      %s88 = sphi 0, %s87
      %s102 = sphi 0, %s88
      %s106 = sphi 0, %s106
      %s108 = sphi 0, %s106
      %s109 = sphi 0, %s108
      %s123 = sphi 0, %s109
      %s127 = sphi 0, %s127
      %s129 = sphi 0, %s127
      %s130 = sphi 0, %s129
      %s144 = sphi 0, %s130
      %s148 = sphi 0, %s148
      %s150 = sphi 0, %s148
      %s151 = sphi 0, %s150
      %s165 = sphi 0, %s151
      %s169 = sphi 0, %s169
      %s171 = sphi 0, %s169
      %s172 = sphi 0, %s171
      %s186 = sphi 0, %s172
      %s190 = sphi 0, %s190
      %s192 = sphi 0, %s190
      %s193 = sphi 0, %s192
      %s207 = sphi 0, %s193
      %s211 = sphi 0, %s211
      %s213 = sphi 0, %s211
      %s214 = sphi 0, %s213
      %s228 = sphi 0, %s214
      %s232 = sphi 0, %s232
      %s234 = sphi 0, %s232
      %s235 = sphi 0, %s234
      %s249 = sphi 0, %s235
      %s253 = sphi 0, %s253
      %s255 = sphi 0, %s253
      %s256 = sphi 0, %s255
      %s270 = sphi 0, %s256
      %s276 = sphi 0, %s278
      %s279 = sphi 0, %s276
      %s280 = sphi 0, %s279
      %s296 = sphi 0, %s280
    $region4: #{tpu_custom_call.1} parent=1 // loop_header_branch
      %28 = sbr.rel (%p26) target = $region8
    $region5: #{tpu_custom_call.1} parent=1 // loop_body
      %s30 = ssub.s32 %s25, 1
      %s31 = ssub.s32 %s25, 2
      %s32 = sadd.s32 %s25, 1
      %s33 = ssub.s32 %s25, %s32
      %p34 = scmp.eq.s32.totalorder %s33, 0
      %s36 = sadd.s32 %s35, 1
      %s37 = scalar_select %p34, %s35, %s36
      %p40 = pneg %p34
      %p41 = scmp.eq.s32.totalorder %s25, 1
      %p42 = por %p40, %p41
      %p43 = scmp.ne.s32.totalorder %s35, %s38
      %p44 = scmp.eq.s32.totalorder %s25, 0
      %p45 = por %p43, %p44
      %p46 = scmp.ne.s32.totalorder %s35, %s38
      %p47 = scmp.eq.s32.totalorder %s30, 1
      %p48 = por %p46, %p47
      %p49 = scmp.ne.s32.totalorder %s38, %s39
      %p50 = scmp.eq.s32.totalorder %s30, 0
      %p51 = por %p49, %p50
      %p52 = scmp.ne.s32.totalorder %s38, %s39
      %p53 = scmp.eq.s32.totalorder %s31, 1
      %p54 = por %p52, %p53
      %p56 = scmp.ne.s32.totalorder %s39, %s55
      %p57 = scmp.eq.s32.totalorder %s31, 0
      %p58 = por %p56, %p57
      %s59 = ssub.s32 %s25, %s32
      %p60 = scmp.eq.s32.totalorder %s59, 0
      %s62 = sadd.s32 %s61, 1
      %s63 = scalar_select %p60, %s61, %s62
      %p66 = pneg %p60
      %p67 = scmp.eq.s32.totalorder %s25, 1
      %p68 = por %p66, %p67
      %p69 = scmp.ne.s32.totalorder %s61, %s64
      %p70 = scmp.eq.s32.totalorder %s25, 0
      %p71 = por %p69, %p70
      %p72 = scmp.ne.s32.totalorder %s61, %s64
      %p73 = scmp.eq.s32.totalorder %s30, 1
      %p74 = por %p72, %p73
      %p75 = scmp.ne.s32.totalorder %s64, %s65
      %p76 = scmp.eq.s32.totalorder %s30, 0
      %p77 = por %p75, %p76
      %p78 = scmp.ne.s32.totalorder %s64, %s65
      %p79 = scmp.eq.s32.totalorder %s31, 1
      %p80 = por %p78, %p79
      %p82 = scmp.ne.s32.totalorder %s65, %s81
      %p83 = scmp.eq.s32.totalorder %s31, 0
      %p84 = por %p82, %p83
      %s86 = sadd.s32 %s85, 1
      %p89 = scmp.eq.s32.totalorder %s25, 1
      %p90 = scmp.ne.s32.totalorder %s85, %s87
      %p91 = scmp.eq.s32.totalorder %s25, 0
      %p92 = por %p90, %p91
      %p93 = scmp.ne.s32.totalorder %s85, %s87
      %p94 = scmp.eq.s32.totalorder %s30, 1
      %p95 = por %p93, %p94
      %p96 = scmp.ne.s32.totalorder %s87, %s88
      %p97 = scmp.eq.s32.totalorder %s30, 0
      %p98 = por %p96, %p97
      %p99 = scmp.ne.s32.totalorder %s87, %s88
      %p100 = scmp.eq.s32.totalorder %s31, 1
      %p101 = por %p99, %p100
      %p103 = scmp.ne.s32.totalorder %s88, %s102
      %p104 = scmp.eq.s32.totalorder %s31, 0
      %p105 = por %p103, %p104
      %s107 = sadd.s32 %s106, 1
      %p110 = scmp.eq.s32.totalorder %s25, 1
      %p111 = scmp.ne.s32.totalorder %s106, %s108
      %p112 = scmp.eq.s32.totalorder %s25, 0
      %p113 = por %p111, %p112
      %p114 = scmp.ne.s32.totalorder %s106, %s108
      %p115 = scmp.eq.s32.totalorder %s30, 1
      %p116 = por %p114, %p115
      %p117 = scmp.ne.s32.totalorder %s108, %s109
      %p118 = scmp.eq.s32.totalorder %s30, 0
      %p119 = por %p117, %p118
      %p120 = scmp.ne.s32.totalorder %s108, %s109
      %p121 = scmp.eq.s32.totalorder %s31, 1
      %p122 = por %p120, %p121
      %p124 = scmp.ne.s32.totalorder %s109, %s123
      %p125 = scmp.eq.s32.totalorder %s31, 0
      %p126 = por %p124, %p125
      %s128 = sadd.s32 %s127, 1
      %p131 = scmp.eq.s32.totalorder %s25, 1
      %p132 = scmp.ne.s32.totalorder %s127, %s129
      %p133 = scmp.eq.s32.totalorder %s25, 0
      %p134 = por %p132, %p133
      %p135 = scmp.ne.s32.totalorder %s127, %s129
      %p136 = scmp.eq.s32.totalorder %s30, 1
      %p137 = por %p135, %p136
      %p138 = scmp.ne.s32.totalorder %s129, %s130
      %p139 = scmp.eq.s32.totalorder %s30, 0
      %p140 = por %p138, %p139
      %p141 = scmp.ne.s32.totalorder %s129, %s130
      %p142 = scmp.eq.s32.totalorder %s31, 1
      %p143 = por %p141, %p142
      %p145 = scmp.ne.s32.totalorder %s130, %s144
      %p146 = scmp.eq.s32.totalorder %s31, 0
      %p147 = por %p145, %p146
      %s149 = sadd.s32 %s148, 1
      %p152 = scmp.eq.s32.totalorder %s25, 1
      %p153 = scmp.ne.s32.totalorder %s148, %s150
      %p154 = scmp.eq.s32.totalorder %s25, 0
      %p155 = por %p153, %p154
      %p156 = scmp.ne.s32.totalorder %s148, %s150
      %p157 = scmp.eq.s32.totalorder %s30, 1
      %p158 = por %p156, %p157
      %p159 = scmp.ne.s32.totalorder %s150, %s151
      %p160 = scmp.eq.s32.totalorder %s30, 0
      %p161 = por %p159, %p160
      %p162 = scmp.ne.s32.totalorder %s150, %s151
      %p163 = scmp.eq.s32.totalorder %s31, 1
      %p164 = por %p162, %p163
      %p166 = scmp.ne.s32.totalorder %s151, %s165
      %p167 = scmp.eq.s32.totalorder %s31, 0
      %p168 = por %p166, %p167
      %s170 = sadd.s32 %s169, 1
      %p173 = scmp.eq.s32.totalorder %s25, 1
      %p174 = scmp.ne.s32.totalorder %s169, %s171
      %p175 = scmp.eq.s32.totalorder %s25, 0
      %p176 = por %p174, %p175
      %p177 = scmp.ne.s32.totalorder %s169, %s171
      %p178 = scmp.eq.s32.totalorder %s30, 1
      %p179 = por %p177, %p178
      %p180 = scmp.ne.s32.totalorder %s171, %s172
      %p181 = scmp.eq.s32.totalorder %s30, 0
      %p182 = por %p180, %p181
      %p183 = scmp.ne.s32.totalorder %s171, %s172
      %p184 = scmp.eq.s32.totalorder %s31, 1
      %p185 = por %p183, %p184
      %p187 = scmp.ne.s32.totalorder %s172, %s186
      %p188 = scmp.eq.s32.totalorder %s31, 0
      %p189 = por %p187, %p188
      %s191 = sadd.s32 %s190, 1
      %p194 = scmp.eq.s32.totalorder %s25, 1
      %p195 = scmp.ne.s32.totalorder %s190, %s192
      %p196 = scmp.eq.s32.totalorder %s25, 0
      %p197 = por %p195, %p196
      %p198 = scmp.ne.s32.totalorder %s190, %s192
      %p199 = scmp.eq.s32.totalorder %s30, 1
      %p200 = por %p198, %p199
      %p201 = scmp.ne.s32.totalorder %s192, %s193
      %p202 = scmp.eq.s32.totalorder %s30, 0
      %p203 = por %p201, %p202
      %p204 = scmp.ne.s32.totalorder %s192, %s193
      %p205 = scmp.eq.s32.totalorder %s31, 1
      %p206 = por %p204, %p205
      %p208 = scmp.ne.s32.totalorder %s193, %s207
      %p209 = scmp.eq.s32.totalorder %s31, 0
      %p210 = por %p208, %p209
      %s212 = sadd.s32 %s211, 1
      %p215 = scmp.eq.s32.totalorder %s25, 1
      %p216 = scmp.ne.s32.totalorder %s211, %s213
      %p217 = scmp.eq.s32.totalorder %s25, 0
      %p218 = por %p216, %p217
      %p219 = scmp.ne.s32.totalorder %s211, %s213
      %p220 = scmp.eq.s32.totalorder %s30, 1
      %p221 = por %p219, %p220
      %p222 = scmp.ne.s32.totalorder %s213, %s214
      %p223 = scmp.eq.s32.totalorder %s30, 0
      %p224 = por %p222, %p223
      %p225 = scmp.ne.s32.totalorder %s213, %s214
      %p226 = scmp.eq.s32.totalorder %s31, 1
      %p227 = por %p225, %p226
      %p229 = scmp.ne.s32.totalorder %s214, %s228
      %p230 = scmp.eq.s32.totalorder %s31, 0
      %p231 = por %p229, %p230
      %s233 = sadd.s32 %s232, 1
      %p236 = scmp.eq.s32.totalorder %s25, 1
      %p237 = scmp.ne.s32.totalorder %s232, %s234
      %p238 = scmp.eq.s32.totalorder %s25, 0
      %p239 = por %p237, %p238
      %p240 = scmp.ne.s32.totalorder %s232, %s234
      %p241 = scmp.eq.s32.totalorder %s30, 1
      %p242 = por %p240, %p241
      %p243 = scmp.ne.s32.totalorder %s234, %s235
      %p244 = scmp.eq.s32.totalorder %s30, 0
      %p245 = por %p243, %p244
      %p246 = scmp.ne.s32.totalorder %s234, %s235
      %p247 = scmp.eq.s32.totalorder %s31, 1
      %p248 = por %p246, %p247
      %p250 = scmp.ne.s32.totalorder %s235, %s249
      %p251 = scmp.eq.s32.totalorder %s31, 0
      %p252 = por %p250, %p251
      %s254 = sadd.s32 %s253, 1
      %p257 = scmp.eq.s32.totalorder %s25, 1
      %p258 = scmp.ne.s32.totalorder %s253, %s255
      %p259 = scmp.eq.s32.totalorder %s25, 0
      %p260 = por %p258, %p259
      %p261 = scmp.ne.s32.totalorder %s253, %s255
      %p262 = scmp.eq.s32.totalorder %s30, 1
      %p263 = por %p261, %p262
      %p264 = scmp.ne.s32.totalorder %s255, %s256
      %p265 = scmp.eq.s32.totalorder %s30, 0
      %p266 = por %p264, %p265
      %p267 = scmp.ne.s32.totalorder %s255, %s256
      %p268 = scmp.eq.s32.totalorder %s31, 1
      %p269 = por %p267, %p268
      %p271 = scmp.ne.s32.totalorder %s256, %s270
      %p272 = scmp.eq.s32.totalorder %s31, 0
      %p273 = por %p271, %p272
      %s274 = ssub.s32 %s25, %s32
      %p275 = scmp.eq.s32.totalorder %s274, 0
      %s277 = sadd.s32 %s276, 1
      %s278 = scalar_select %p275, %s276, %s277
      %p281 = pneg %p275
      %p282 = scmp.eq.s32.totalorder %s25, 1
      %p283 = por %p281, %p282
      %p284 = scmp.ne.s32.totalorder %s276, %s279
      %p285 = scmp.eq.s32.totalorder %s25, 0
      %p286 = por %p284, %p285
      %p287 = scmp.ne.s32.totalorder %s276, %s279
      %p288 = scmp.eq.s32.totalorder %s30, 1
      %p289 = por %p287, %p288
      %p290 = scmp.ne.s32.totalorder %s279, %s280
      %p291 = scmp.eq.s32.totalorder %s30, 0
      %p292 = por %p290, %p291
      %p293 = scmp.ne.s32.totalorder %s279, %s280
      %p294 = scmp.eq.s32.totalorder %s31, 1
      %p295 = por %p293, %p294
      %p297 = scmp.ne.s32.totalorder %s280, %s296
      %p298 = scmp.eq.s32.totalorder %s31, 0
      %p299 = por %p297, %p298
      %p300 = scmp.le.s32.totalorder 1, %s25
      %p301 = scmp.lt.s32.totalorder %s25, 3
      %p302 = pnand %p300, %p301
      %p303 = pneg %p302
      // Predicated region
      $region9: #{tpu_custom_call.1} parent=5 // pred_check
        _
      $region10: #{tpu_custom_call.1} parent=5 // pred_check_branch
        %305 = sbr.rel (%p302) target = $region12
      $region11: #{tpu_custom_call.1} parent=5 // pred_region
        %s306 = ssub.s32 %s25, 1
        // Predicated region
        $region13: #{tpu_custom_call.1} parent=11 // pred_check
          %p307 = pneg %p98
        $region14: #{tpu_custom_call.1} parent=11 // pred_check_branch
          %309 = sbr.rel (%p307) target = $region16
        $region15: #{tpu_custom_call.1} parent=11 // pred_region
          %s311 = ssub.s32 256, 256
          %312 = vsyncadd [#allocation5], %s311
          %s313 = sshll.u32 [#allocation6], 4
          %s314 = int_to_ptr.vmem [resolvable:$true] %s313
          %319 = dma.hbm_to_vmem [thread:$0]  %s2, 256, %s314, [#allocation5], 64, 64, 4
        $region16: #{tpu_custom_call.1} parent=11 // pred_fallthru
          _
        // Predicated region
        $region17: #{tpu_custom_call.1} parent=11 // pred_check
          %p320 = pneg %p119
        $region18: #{tpu_custom_call.1} parent=11 // pred_check_branch
          %322 = sbr.rel (%p320) target = $region20
        $region19: #{tpu_custom_call.1} parent=11 // pred_region
          _
        $region20: #{tpu_custom_call.1} parent=11 // pred_fallthru
          _
        // Predicated region
        $region21: #{tpu_custom_call.1} parent=11 // pred_check
          %p323 = pneg %p140
        $region22: #{tpu_custom_call.1} parent=11 // pred_check_branch
          %325 = sbr.rel (%p323) target = $region24
        $region23: #{tpu_custom_call.1} parent=11 // pred_region
          %s327 = ssub.s32 256, 256
          %328 = vsyncadd [#allocation8], %s327
          %s329 = sshll.u32 [#allocation7], 4
          %s330 = int_to_ptr.vmem [resolvable:$true] %s329
          %335 = dma.hbm_to_vmem [thread:$0]  %s4, 256, %s330, [#allocation8], 64, 64, 4
        $region24: #{tpu_custom_call.1} parent=11 // pred_fallthru
          _
        // Predicated region
        $region25: #{tpu_custom_call.1} parent=11 // pred_check
          %p336 = pneg %p161
        $region26: #{tpu_custom_call.1} parent=11 // pred_check_branch
          %338 = sbr.rel (%p336) target = $region28
        $region27: #{tpu_custom_call.1} parent=11 // pred_region
          _
        $region28: #{tpu_custom_call.1} parent=11 // pred_fallthru
          _
        // Predicated region
        $region29: #{tpu_custom_call.1} parent=11 // pred_check
          %p339 = pneg %p182
        $region30: #{tpu_custom_call.1} parent=11 // pred_check_branch
          %341 = sbr.rel (%p339) target = $region32
        $region31: #{tpu_custom_call.1} parent=11 // pred_region
          %s343 = ssub.s32 256, 256
          %344 = vsyncadd [#allocation8], %s343
          %s345 = sshll.u32 [#allocation9], 4
          %s346 = int_to_ptr.vmem [resolvable:$true] %s345
          %351 = dma.hbm_to_vmem [thread:$0]  %s6, 256, %s346, [#allocation8], 64, 64, 4
        $region32: #{tpu_custom_call.1} parent=11 // pred_fallthru
          _
        // Predicated region
        $region33: #{tpu_custom_call.1} parent=11 // pred_check
          %p352 = pneg %p203
        $region34: #{tpu_custom_call.1} parent=11 // pred_check_branch
          %354 = sbr.rel (%p352) target = $region36
        $region35: #{tpu_custom_call.1} parent=11 // pred_region
          %s356 = ssub.s32 16, 16
          %357 = vsyncadd [#allocation11], %s356
          %s359 = sshll.u32 [#allocation10], 4
          %s360 = int_to_ptr.vmem [resolvable:$true] %s359
          %362 = dma.hbm_to_vmem [thread:$0]  %s7, 16, %s360, [#allocation11]
        $region36: #{tpu_custom_call.1} parent=11 // pred_fallthru
          _
        // Predicated region
        $region37: #{tpu_custom_call.1} parent=11 // pred_check
          %p363 = pneg %p224
        $region38: #{tpu_custom_call.1} parent=11 // pred_check_branch
          %365 = sbr.rel (%p363) target = $region40
        $region39: #{tpu_custom_call.1} parent=11 // pred_region
          %s367 = ssub.s32 512, 512
          %368 = vsyncadd [#allocation11], %s367
          %s369 = sshll.u32 [#allocation12], 4
          %s370 = int_to_ptr.vmem [resolvable:$true] %s369
          %375 = dma.hbm_to_vmem [thread:$0]  %s8, 512, %s370, [#allocation11], 128, 128, 8
        $region40: #{tpu_custom_call.1} parent=11 // pred_fallthru
          _
        // Predicated region
        $region41: #{tpu_custom_call.1} parent=11 // pred_check
          %p376 = pneg %p245
        $region42: #{tpu_custom_call.1} parent=11 // pred_check_branch
          %378 = sbr.rel (%p376) target = $region44
        $region43: #{tpu_custom_call.1} parent=11 // pred_region
          _
        $region44: #{tpu_custom_call.1} parent=11 // pred_fallthru
          _
        // Predicated region
        $region45: #{tpu_custom_call.1} parent=11 // pred_check
          %p379 = pneg %p266
        $region46: #{tpu_custom_call.1} parent=11 // pred_check_branch
          %381 = sbr.rel (%p379) target = $region48
        $region47: #{tpu_custom_call.1} parent=11 // pred_region
          _
        $region48: #{tpu_custom_call.1} parent=11 // pred_fallthru
          _
      $region12: #{tpu_custom_call.1} parent=5 // pred_fallthru
        _
      %p382 = scmp.lt.s32.totalorder %s25, 2
      // Predicated region
      $region49: #{tpu_custom_call.1} parent=5 // pred_check
        %p383 = pneg %p382
      $region50: #{tpu_custom_call.1} parent=5 // pred_check_branch
        %385 = sbr.rel (%p383) target = $region52
      $region51: #{tpu_custom_call.1} parent=5 // pred_region
        // Predicated region
        $region53: #{tpu_custom_call.1} parent=51 // pred_check
          %p386 = pneg %p45
        $region54: #{tpu_custom_call.1} parent=51 // pred_check_branch
          %388 = sbr.rel (%p386) target = $region56
        $region55: #{tpu_custom_call.1} parent=51 // pred_region
          %s389 = sand.u32 %s35, 1
          %s390 = scalar_lea.sflag [#allocation3], %s389
          %s391 = sand.u32 %s35, 1
          %s392 = smul.addr %s391, 32
          %s393 = scalar_lea.vmem [#allocation2], %s392
          %s394 = smul.u32 4, %s25
          %s396 = ssub.s32 512, 512
          %397 = vsyncadd %s390, %s396
          %s398 = smul.addr %s394, 2
          %s399 = smul.addr %s398, 64
          %s400 = scalar_lea.hbm %s0, %s399
          %s401 = sshll.u32 %s393, 4
          %s402 = int_to_ptr.vmem [resolvable:$true] %s401
          %407 = dma.hbm_to_vmem [thread:$0]  %s400, 512, %s402, %s390, 128, 128, 8
        $region56: #{tpu_custom_call.1} parent=51 // pred_fallthru
          _
        // Predicated region
        $region57: #{tpu_custom_call.1} parent=51 // pred_check
          %p408 = pneg %p71
        $region58: #{tpu_custom_call.1} parent=51 // pred_check_branch
          %410 = sbr.rel (%p408) target = $region60
        $region59: #{tpu_custom_call.1} parent=51 // pred_region
          %s411 = sand.u32 %s25, 1
          %s412 = scalar_lea.sflag [#allocation5], %s411
          %s413 = sand.u32 %s61, 1
          %s414 = smul.addr %s413, 32
          %s415 = scalar_lea.vmem [#allocation4], %s414
          %s416 = smul.u32 4, %s25
          %s418 = ssub.s32 512, 512
          %419 = vsyncadd %s412, %s418
          %s420 = smul.addr %s416, 2
          %s421 = smul.addr %s420, 64
          %s422 = scalar_lea.hbm %s1, %s421
          %s423 = sshll.u32 %s415, 4
          %s424 = int_to_ptr.vmem [resolvable:$true] %s423
          %429 = dma.hbm_to_vmem [thread:$0]  %s422, 512, %s424, %s412, 128, 128, 8
        $region60: #{tpu_custom_call.1} parent=51 // pred_fallthru
          _
      $region52: #{tpu_custom_call.1} parent=5 // pred_fallthru
        _
      %p430 = scmp.le.s32.totalorder 1, %s25
      %p431 = scmp.lt.s32.totalorder %s25, 3
      %p432 = pnand %p430, %p431
      %p433 = pneg %p432
      // Predicated region
      $region61: #{tpu_custom_call.1} parent=5 // pred_check
        _
      $region62: #{tpu_custom_call.1} parent=5 // pred_check_branch
        %435 = sbr.rel (%p432) target = $region64
      $region63: #{tpu_custom_call.1} parent=5 // pred_region
        %s436 = ssub.s32 %s25, 1
        %s437 = sand.u32 %s38, 1
        %s438 = scalar_lea.sflag [#allocation3], %s437
        %s439 = sand.u32 %s38, 1
        %s440 = smul.addr %s439, 32
        %s441 = scalar_lea.vmem [#allocation2], %s440
        // Predicated region
        $region65: #{tpu_custom_call.1} parent=63 // pred_check
          %p442 = pneg %p51
        $region66: #{tpu_custom_call.1} parent=63 // pred_check_branch
          %444 = sbr.rel (%p442) target = $region68
        $region67: #{tpu_custom_call.1} parent=63 // pred_region
          %445 = dma.done %s438, 512
        $region68: #{tpu_custom_call.1} parent=63 // pred_fallthru
          _
        %s446 = sand.u32 %s30, 1
        %s447 = scalar_lea.sflag [#allocation5], %s446
        %s448 = sand.u32 %s64, 1
        %s449 = smul.addr %s448, 32
        %s450 = scalar_lea.vmem [#allocation4], %s449
        // Predicated region
        $region69: #{tpu_custom_call.1} parent=63 // pred_check
          %p451 = pneg %p77
        $region70: #{tpu_custom_call.1} parent=63 // pred_check_branch
          %453 = sbr.rel (%p451) target = $region72
        $region71: #{tpu_custom_call.1} parent=63 // pred_region
          %454 = dma.done %s447, 512
        $region72: #{tpu_custom_call.1} parent=63 // pred_fallthru
          _
        // Predicated region
        $region73: #{tpu_custom_call.1} parent=63 // pred_check
          %p455 = pneg %p98
        $region74: #{tpu_custom_call.1} parent=63 // pred_check_branch
          %457 = sbr.rel (%p455) target = $region76
        $region75: #{tpu_custom_call.1} parent=63 // pred_region
          %458 = dma.done [#allocation5], 256
        $region76: #{tpu_custom_call.1} parent=63 // pred_fallthru
          _
        // Predicated region
        $region77: #{tpu_custom_call.1} parent=63 // pred_check
          %p459 = pneg %p140
        $region78: #{tpu_custom_call.1} parent=63 // pred_check_branch
          %461 = sbr.rel (%p459) target = $region80
        $region79: #{tpu_custom_call.1} parent=63 // pred_region
          %462 = dma.done [#allocation8], 256
        $region80: #{tpu_custom_call.1} parent=63 // pred_fallthru
          _
        // Predicated region
        $region81: #{tpu_custom_call.1} parent=63 // pred_check
          %p463 = pneg %p182
        $region82: #{tpu_custom_call.1} parent=63 // pred_check_branch
          %465 = sbr.rel (%p463) target = $region84
        $region83: #{tpu_custom_call.1} parent=63 // pred_region
          %466 = dma.done [#allocation8], 256
        $region84: #{tpu_custom_call.1} parent=63 // pred_fallthru
          _
        // Predicated region
        $region85: #{tpu_custom_call.1} parent=63 // pred_check
          %p467 = pneg %p203
        $region86: #{tpu_custom_call.1} parent=63 // pred_check_branch
          %469 = sbr.rel (%p467) target = $region88
        $region87: #{tpu_custom_call.1} parent=63 // pred_region
          %470 = dma.done [#allocation11], 16
        $region88: #{tpu_custom_call.1} parent=63 // pred_fallthru
          _
        // Predicated region
        $region89: #{tpu_custom_call.1} parent=63 // pred_check
          %p471 = pneg %p224
        $region90: #{tpu_custom_call.1} parent=63 // pred_check_branch
          %473 = sbr.rel (%p471) target = $region92
        $region91: #{tpu_custom_call.1} parent=63 // pred_region
          %474 = dma.done [#allocation11], 512
        $region92: #{tpu_custom_call.1} parent=63 // pred_fallthru
          _
        %s475 = sand.u32 %s38, 1
        %s476 = scalar_lea.sflag [#allocation3], %s475
        %s477 = sand.u32 %s38, 1
        %s478 = smul.addr %s477, 32
        %s479 = scalar_lea.vmem [#allocation2], %s478
        %p480 = pneg %p51
        %p481 = pneg %p48
        %s482 = sand.u32 %s30, 1
        %s483 = scalar_lea.sflag [#allocation5], %s482
        %s484 = sand.u32 %s64, 1
        %s485 = smul.addr %s484, 32
        %s486 = scalar_lea.vmem [#allocation4], %s485
        %p487 = pneg %p77
        %p488 = pneg %p74
        %p489 = pneg %p98
        %p490 = pneg %p95
        %p491 = pneg %p119
        %p492 = pneg %p116
        %p493 = pneg %p140
        %p494 = pneg %p137
        %p495 = pneg %p161
        %p496 = pneg %p158
        %p497 = pneg %p182
        %p498 = pneg %p179
        %p499 = pneg %p203
        %p500 = pneg %p200
        %p501 = pneg %p224
        %p502 = pneg %p221
        %p503 = pneg %p245
        %p504 = pneg %p242
        %p505 = pneg %p266
        %p506 = pneg %p263
        %p507 = pneg %p292
        %p508 = pneg %p289
        %s509 = smul.u32 4, %s30
        %p510 = scmp.lt.s32.totalorder %s509, 7
        %s511 = scalar_select %p510, %s509, 7
        %s512 = smul.addr %s511, 8
        %s513 = scalar_lea.vmem %s11, %s512
        %s514 = smul.u32 4, %s30
        %s515 = smul.u32 4, %s30
        %s516 = smul.u32 4, %s30
        %p517 = scmp.lt.s32.totalorder %s516, 7
        %s518 = scalar_select %p517, %s516, 7
        %s519 = smul.addr %s518, 8
        %s520 = scalar_lea.vmem %s11, %s519
        %s521 = smul.u32 4, %s30
        %v523 = vld [vmem:[%s441] sm:$0xff]
        %v524 = vld [vmem:[%s441 + $0x8] sm:$0xff]
        %v525 = vld [vmem:[%s441 + $0x10] sm:$0xff]
        %v526 = vld [vmem:[%s441 + $0x18] sm:$0xff]
        %v527 = vld [vmem:[%s450] sm:$0xff]
        %v528 = vld [vmem:[%s450 + $0x8] sm:$0xff]
        %v529 = vld [vmem:[%s450 + $0x10] sm:$0xff]
        %v530 = vld [vmem:[%s450 + $0x18] sm:$0xff]
        %v535 = vunpack.c.l.b16 %v523
        %v536 = vunpack.c.l.b16 %v524
        %v537 = vunpack.c.l.b16 %v525
        %v538 = vunpack.c.l.b16 %v526
        %v539 = vpack.c.b16 %v536, %v535
        %v540 = vpack.c.b16 %v538, %v537
        %541 = vrot.lane.b32.xlu0 %v539, 96
        %v542 = vpop.permute.xlu0 %541
        %543 = vrot.lane.b32.xlu0 %v540, 96
        %v544 = vpop.permute.xlu0 %543
        %545 = vrot.lane.b32.xlu0 %v539, 64
        %v546 = vpop.permute.xlu0 %545
        %547 = vrot.lane.b32.xlu0 %v540, 64
        %v548 = vpop.permute.xlu0 %547
        %549 = vrot.lane.b32.xlu0 %v539, 32
        %v550 = vpop.permute.xlu0 %549
        %551 = vrot.lane.b32.xlu0 %v540, 32
        %v552 = vpop.permute.xlu0 %551
        %v553 = vunpack.c.h.b16 %v523
        %v554 = vunpack.c.h.b16 %v524
        %v555 = vunpack.c.h.b16 %v525
        %v556 = vunpack.c.h.b16 %v526
        %v557 = vpack.c.b16 %v554, %v553
        %v558 = vpack.c.b16 %v556, %v555
        %559 = vrot.lane.b32.xlu0 %v557, 96
        %v560 = vpop.permute.xlu0 %559
        %561 = vrot.lane.b32.xlu0 %v558, 96
        %v562 = vpop.permute.xlu0 %561
        %563 = vrot.lane.b32.xlu0 %v557, 64
        %v564 = vpop.permute.xlu0 %563
        %565 = vrot.lane.b32.xlu0 %v558, 64
        %v566 = vpop.permute.xlu0 %565
        %567 = vrot.lane.b32.xlu0 %v557, 32
        %v568 = vpop.permute.xlu0 %567
        %569 = vrot.lane.b32.xlu0 %v558, 32
        %v570 = vpop.permute.xlu0 %569
        %v575 = vunpack.c.l.b16 %v527
        %v576 = vunpack.c.l.b16 %v528
        %v577 = vunpack.c.l.b16 %v529
        %v578 = vunpack.c.l.b16 %v530
        %v579 = vpack.c.b16 %v576, %v575
        %v580 = vpack.c.b16 %v578, %v577
        %581 = vrot.lane.b32.xlu0 %v579, 96
        %v582 = vpop.permute.xlu0 %581
        %583 = vrot.lane.b32.xlu0 %v580, 96
        %v584 = vpop.permute.xlu0 %583
        %585 = vrot.lane.b32.xlu0 %v579, 64
        %v586 = vpop.permute.xlu0 %585
        %587 = vrot.lane.b32.xlu0 %v580, 64
        %v588 = vpop.permute.xlu0 %587
        %589 = vrot.lane.b32.xlu0 %v579, 32
        %v590 = vpop.permute.xlu0 %589
        %591 = vrot.lane.b32.xlu0 %v580, 32
        %v592 = vpop.permute.xlu0 %591
        %v593 = vunpack.c.h.b16 %v527
        %v594 = vunpack.c.h.b16 %v528
        %v595 = vunpack.c.h.b16 %v529
        %v596 = vunpack.c.h.b16 %v530
        %v597 = vpack.c.b16 %v594, %v593
        %v598 = vpack.c.b16 %v596, %v595
        %599 = vrot.lane.b32.xlu0 %v597, 96
        %v600 = vpop.permute.xlu0 %599
        %601 = vrot.lane.b32.xlu0 %v598, 96
        %v602 = vpop.permute.xlu0 %601
        %603 = vrot.lane.b32.xlu0 %v597, 64
        %v604 = vpop.permute.xlu0 %603
        %605 = vrot.lane.b32.xlu0 %v598, 64
        %v606 = vpop.permute.xlu0 %605
        %607 = vrot.lane.b32.xlu0 %v597, 32
        %v608 = vpop.permute.xlu0 %607
        %609 = vrot.lane.b32.xlu0 %v598, 32
        %v610 = vpop.permute.xlu0 %609
        %v611 = vld [vmem:[#allocation6] sm:$0xf]
        %v612 = vld [vmem:[#allocation6 + $0x4] sm:$0xf]
        %v613 = vld [vmem:[#allocation6 + $0x8] sm:$0xf]
        %v614 = vld [vmem:[#allocation6 + $0xc] sm:$0xf]
        %v615 = vld [vmem:[%s3] sm:$0x1]
        %v617 = vlaneseq
        %v618 = vshrl.u32 %v617, 7
        %v619 = vsub.s32 0, %v618
        %v620 = vrot.slane %v615, %v619
        %v626 = vunpack.c.l.b16 %v611
        %v627 = vunpack.c.l.b16 %v612
        %v628 = vunpack.c.l.b16 %v613
        %v629 = vunpack.c.l.b16 %v614
        %v630 = vpack.c.b16 %v627, %v626
        %v631 = vpack.c.b16 %v629, %v628
        %vm634 = vcmask 261120
        %v636 = vsel %vm634, %v539, 0
        %v639 = vsel %vm634, %v540, 0
        %v642 = vsel %vm634, %v542, 0
        %v645 = vsel %vm634, %v544, 0
        %v648 = vsel %vm634, %v546, 0
        %v651 = vsel %vm634, %v548, 0
        %v654 = vsel %vm634, %v550, 0
        %v657 = vsel %vm634, %v552, 0
        %v660 = vsel %vm634, %v557, 0
        %v663 = vsel %vm634, %v558, 0
        %v666 = vsel %vm634, %v560, 0
        %v669 = vsel %vm634, %v562, 0
        %v672 = vsel %vm634, %v564, 0
        %v675 = vsel %vm634, %v566, 0
        %v678 = vsel %vm634, %v568, 0
        %v681 = vsel %vm634, %v570, 0
        %683 = vmatprep.subr.bf16.mxu0 0
        %684 = vmatpush1.bf16.msra.mxu0 %v630
        %685 = vmatprep.subr.bf16.mxu0 0
        %686 = vmatpush1.bf16.msra.mxu0 %v631
        %687 = vmatprep.subr.bf16.mxu0 0
        %688 = vmatpush1.bf16.msra.mxu0 0
        %689 = vmatprep.subr.bf16.mxu0 0
        %690 = vmatpush1.bf16.msra.mxu0 0
        %691 = vmatprep.subr.bf16.mxu0 0
        %692 = vmatpush1.bf16.msra.mxu0 0
        %693 = vmatprep.subr.bf16.mxu0 0
        %694 = vmatpush1.bf16.msra.mxu0 0
        %695 = vmatprep.subr.bf16.mxu0 0
        %696 = vmatpush1.bf16.msra.mxu0 0
        %697 = vmatprep.subr.bf16.mxu0 0
        %698 = vmatpush1.bf16.msra.mxu0 0
        %699 = vmatprep.subr.bf16.mxu0 0
        %700 = vmatpush1.bf16.msra.mxu0 0
        %701 = vmatprep.subr.bf16.mxu0 0
        %702 = vmatpush1.bf16.msra.mxu0 0
        %703 = vmatprep.subr.bf16.mxu0 0
        %704 = vmatpush1.bf16.msra.mxu0 0
        %705 = vmatprep.subr.bf16.mxu0 0
        %706 = vmatpush1.bf16.msra.mxu0 0
        %707 = vmatprep.subr.bf16.mxu0 0
        %708 = vmatpush1.bf16.msra.mxu0 0
        %709 = vmatprep.subr.bf16.mxu0 0
        %710 = vmatpush1.bf16.msra.mxu0 0
        %711 = vmatprep.subr.bf16.mxu0 0
        %712 = vmatpush1.bf16.msra.mxu0 0
        %713 = vmatprep.subr.bf16.mxu0 0
        %714 = vmatpush1.bf16.msra.mxu0 0
        %715 = vmatprep.mubr.bf16.mxu0 0
        %716 = vmatmul.mubr.bf16.gmra.mrb[0].mxu0 %v636
        %v717 = vpop.f32.mrb[0].mxu0
        %v718 = vadd.f32 %v620, %v717
        %v719 = vpop.f32.mrb[0].mxu0
        %v720 = vpop.f32.mrb[0].mxu0
        %v721 = vadd.f32 %v620, %v720
        %v722 = vpop.f32.mrb[0].mxu0
        %723 = vmatprep.mubr.bf16.mxu0 0
        %724 = vmatmul.mubr.bf16.gmra.mrb[0].mxu0 %v639
        %v725 = vpop.f32.mrb[0].mxu0
        %v726 = vadd.f32 %v620, %v725
        %v727 = vpop.f32.mrb[0].mxu0
        %v728 = vpop.f32.mrb[0].mxu0
        %v729 = vadd.f32 %v620, %v728
        %v730 = vpop.f32.mrb[0].mxu0
        %731 = vmatprep.mubr.bf16.mxu0 0
        %732 = vmatmul.mubr.bf16.gmra.mrb[0].mxu0 %v642
        %v733 = vpop.f32.mrb[0].mxu0
        %v734 = vadd.f32 %v620, %v733
        %v735 = vpop.f32.mrb[0].mxu0
        %v736 = vpop.f32.mrb[0].mxu0
        %v737 = vadd.f32 %v620, %v736
        %v738 = vpop.f32.mrb[0].mxu0
        %739 = vmatprep.mubr.bf16.mxu0 0
        %740 = vmatmul.mubr.bf16.gmra.mrb[0].mxu0 %v645
        %v741 = vpop.f32.mrb[0].mxu0
        %v742 = vadd.f32 %v620, %v741
        %v743 = vpop.f32.mrb[0].mxu0
        %v744 = vpop.f32.mrb[0].mxu0
        %v745 = vadd.f32 %v620, %v744
        %v746 = vpop.f32.mrb[0].mxu0
        %747 = vmatprep.mubr.bf16.mxu0 0
        %748 = vmatmul.mubr.bf16.gmra.mrb[0].mxu0 %v648
        %v749 = vpop.f32.mrb[0].mxu0
        %v750 = vadd.f32 %v620, %v749
        %v751 = vpop.f32.mrb[0].mxu0
        %v752 = vpop.f32.mrb[0].mxu0
        %v753 = vadd.f32 %v620, %v752
        %v754 = vpop.f32.mrb[0].mxu0
        %755 = vmatprep.mubr.bf16.mxu0 0
        %756 = vmatmul.mubr.bf16.gmra.mrb[0].mxu0 %v651
        %v757 = vpop.f32.mrb[0].mxu0
        %v758 = vadd.f32 %v620, %v757
        %v759 = vpop.f32.mrb[0].mxu0
        %v760 = vpop.f32.mrb[0].mxu0
        %v761 = vadd.f32 %v620, %v760
        %v762 = vpop.f32.mrb[0].mxu0
        %763 = vmatprep.mubr.bf16.mxu0 0
        %764 = vmatmul.mubr.bf16.gmra.mrb[0].mxu0 %v654
        %v765 = vpop.f32.mrb[0].mxu0
        %v766 = vadd.f32 %v620, %v765
        %v767 = vpop.f32.mrb[0].mxu0
        %v768 = vpop.f32.mrb[0].mxu0
        %v769 = vadd.f32 %v620, %v768
        %v770 = vpop.f32.mrb[0].mxu0
        %771 = vmatprep.mubr.bf16.mxu0 0
        %772 = vmatmul.mubr.bf16.gmra.mrb[0].mxu0 %v657
        %v773 = vpop.f32.mrb[0].mxu0
        %v774 = vadd.f32 %v620, %v773
        %v775 = vpop.f32.mrb[0].mxu0
        %v776 = vpop.f32.mrb[0].mxu0
        %v777 = vadd.f32 %v620, %v776
        %v778 = vpop.f32.mrb[0].mxu0
        %779 = vmatprep.mubr.bf16.mxu0 0
        %780 = vmatmul.mubr.bf16.gmra.mrb[0].mxu0 %v660
        %v781 = vpop.f32.mrb[0].mxu0
        %v782 = vadd.f32 %v620, %v781
        %v783 = vpop.f32.mrb[0].mxu0
        %v784 = vpop.f32.mrb[0].mxu0
        %v785 = vadd.f32 %v620, %v784
        %v786 = vpop.f32.mrb[0].mxu0
        %787 = vmatprep.mubr.bf16.mxu0 0
        %788 = vmatmul.mubr.bf16.gmra.mrb[0].mxu0 %v663
        %v789 = vpop.f32.mrb[0].mxu0
        %v790 = vadd.f32 %v620, %v789
        %v791 = vpop.f32.mrb[0].mxu0
        %v792 = vpop.f32.mrb[0].mxu0
        %v793 = vadd.f32 %v620, %v792
        %v794 = vpop.f32.mrb[0].mxu0
        %795 = vmatprep.mubr.bf16.mxu0 0
        %796 = vmatmul.mubr.bf16.gmra.mrb[0].mxu0 %v666
        %v797 = vpop.f32.mrb[0].mxu0
        %v798 = vadd.f32 %v620, %v797
        %v799 = vpop.f32.mrb[0].mxu0
        %v800 = vpop.f32.mrb[0].mxu0
        %v801 = vadd.f32 %v620, %v800
        %v802 = vpop.f32.mrb[0].mxu0
        %803 = vmatprep.mubr.bf16.mxu0 0
        %804 = vmatmul.mubr.bf16.gmra.mrb[0].mxu0 %v669
        %v805 = vpop.f32.mrb[0].mxu0
        %v806 = vadd.f32 %v620, %v805
        %v807 = vpop.f32.mrb[0].mxu0
        %v808 = vpop.f32.mrb[0].mxu0
        %v809 = vadd.f32 %v620, %v808
        %v810 = vpop.f32.mrb[0].mxu0
        %811 = vmatprep.mubr.bf16.mxu0 0
        %812 = vmatmul.mubr.bf16.gmra.mrb[0].mxu0 %v672
        %v813 = vpop.f32.mrb[0].mxu0
        %v814 = vadd.f32 %v620, %v813
        %v815 = vpop.f32.mrb[0].mxu0
        %v816 = vpop.f32.mrb[0].mxu0
        %v817 = vadd.f32 %v620, %v816
        %v818 = vpop.f32.mrb[0].mxu0
        %819 = vmatprep.mubr.bf16.mxu0 0
        %820 = vmatmul.mubr.bf16.gmra.mrb[0].mxu0 %v675
        %v821 = vpop.f32.mrb[0].mxu0
        %v822 = vadd.f32 %v620, %v821
        %v823 = vpop.f32.mrb[0].mxu0
        %v824 = vpop.f32.mrb[0].mxu0
        %v825 = vadd.f32 %v620, %v824
        %v826 = vpop.f32.mrb[0].mxu0
        %827 = vmatprep.mubr.bf16.mxu0 0
        %828 = vmatmul.mubr.bf16.gmra.mrb[0].mxu0 %v678
        %v829 = vpop.f32.mrb[0].mxu0
        %v830 = vadd.f32 %v620, %v829
        %v831 = vpop.f32.mrb[0].mxu0
        %v832 = vpop.f32.mrb[0].mxu0
        %v833 = vadd.f32 %v620, %v832
        %v834 = vpop.f32.mrb[0].mxu0
        %835 = vmatprep.mubr.bf16.mxu0 0
        %836 = vmatmul.mubr.bf16.gmra.mrb[0].mxu0 %v681
        %v837 = vpop.f32.mrb[0].mxu0
        %v838 = vadd.f32 %v620, %v837
        %v839 = vpop.f32.mrb[0].mxu0
        %v840 = vpop.f32.mrb[0].mxu0
        %v841 = vadd.f32 %v620, %v840
        %v842 = vpop.f32.mrb[0].mxu0
        %843 = vdwg.mxu0
        %v844 = vld [vmem:[#allocation7] sm:$0xf]
        %v845 = vld [vmem:[#allocation7 + $0x4] sm:$0xf]
        %v846 = vld [vmem:[#allocation7 + $0x8] sm:$0xf]
        %v847 = vld [vmem:[#allocation7 + $0xc] sm:$0xf]
        %v848 = vld [vmem:[%s5] sm:$0x1]
        %v850 = vlaneseq
        %v851 = vshrl.u32 %v850, 7
        %v852 = vsub.s32 0, %v851
        %v853 = vrot.slane %v848, %v852
        %v859 = vunpack.c.l.b16 %v844
        %v860 = vunpack.c.l.b16 %v845
        %v861 = vunpack.c.l.b16 %v846
        %v862 = vunpack.c.l.b16 %v847
        %v863 = vpack.c.b16 %v860, %v859
        %v864 = vpack.c.b16 %v862, %v861
        %v868 = vsel %vm634, %v579, 0
        %v871 = vsel %vm634, %v580, 0
        %v874 = vsel %vm634, %v582, 0
        %v877 = vsel %vm634, %v584, 0
        %v880 = vsel %vm634, %v586, 0
        %v883 = vsel %vm634, %v588, 0
        %v886 = vsel %vm634, %v590, 0
        %v889 = vsel %vm634, %v592, 0
        %v892 = vsel %vm634, %v597, 0
        %v895 = vsel %vm634, %v598, 0
        %v898 = vsel %vm634, %v600, 0
        %v901 = vsel %vm634, %v602, 0
        %v904 = vsel %vm634, %v604, 0
        %v907 = vsel %vm634, %v606, 0
        %v910 = vsel %vm634, %v608, 0
        %v913 = vsel %vm634, %v610, 0
        %915 = vmatprep.subr.bf16.mxu0 0
        %916 = vmatpush1.bf16.msra.mxu0 %v863
        %917 = vmatprep.subr.bf16.mxu0 0
        %918 = vmatpush1.bf16.msra.mxu0 %v864
        %919 = vmatprep.subr.bf16.mxu0 0
        %920 = vmatpush1.bf16.msra.mxu0 0
        %921 = vmatprep.subr.bf16.mxu0 0
        %922 = vmatpush1.bf16.msra.mxu0 0
        %923 = vmatprep.subr.bf16.mxu0 0
        %924 = vmatpush1.bf16.msra.mxu0 0
        %925 = vmatprep.subr.bf16.mxu0 0
        %926 = vmatpush1.bf16.msra.mxu0 0
        %927 = vmatprep.subr.bf16.mxu0 0
        %928 = vmatpush1.bf16.msra.mxu0 0
        %929 = vmatprep.subr.bf16.mxu0 0
        %930 = vmatpush1.bf16.msra.mxu0 0
        %931 = vmatprep.subr.bf16.mxu0 0
        %932 = vmatpush1.bf16.msra.mxu0 0
        %933 = vmatprep.subr.bf16.mxu0 0
        %934 = vmatpush1.bf16.msra.mxu0 0
        %935 = vmatprep.subr.bf16.mxu0 0
        %936 = vmatpush1.bf16.msra.mxu0 0
        %937 = vmatprep.subr.bf16.mxu0 0
        %938 = vmatpush1.bf16.msra.mxu0 0
        %939 = vmatprep.subr.bf16.mxu0 0
        %940 = vmatpush1.bf16.msra.mxu0 0
        %941 = vmatprep.subr.bf16.mxu0 0
        %942 = vmatpush1.bf16.msra.mxu0 0
        %943 = vmatprep.subr.bf16.mxu0 0
        %944 = vmatpush1.bf16.msra.mxu0 0
        %945 = vmatprep.subr.bf16.mxu0 0
        %946 = vmatpush1.bf16.msra.mxu0 0
        %947 = vmatprep.mubr.bf16.mxu0 0
        %948 = vmatmul.mubr.bf16.gmra.mrb[0].mxu0 %v868
        %v949 = vpop.f32.mrb[0].mxu0
        %v950 = vadd.f32 %v853, %v949
        %v951 = vpop.f32.mrb[0].mxu0
        %v952 = vpop.f32.mrb[0].mxu0
        %v953 = vadd.f32 %v853, %v952
        %v954 = vpop.f32.mrb[0].mxu0
        %955 = vmatprep.mubr.bf16.mxu0 0
        %956 = vmatmul.mubr.bf16.gmra.mrb[0].mxu0 %v871
        %v957 = vpop.f32.mrb[0].mxu0
        %v958 = vadd.f32 %v853, %v957
        %v959 = vpop.f32.mrb[0].mxu0
        %v960 = vpop.f32.mrb[0].mxu0
        %v961 = vadd.f32 %v853, %v960
        %v962 = vpop.f32.mrb[0].mxu0
        %963 = vmatprep.mubr.bf16.mxu0 0
        %964 = vmatmul.mubr.bf16.gmra.mrb[0].mxu0 %v874
        %v965 = vpop.f32.mrb[0].mxu0
        %v966 = vadd.f32 %v853, %v965
        %v967 = vpop.f32.mrb[0].mxu0
        %v968 = vpop.f32.mrb[0].mxu0
        %v969 = vadd.f32 %v853, %v968
        %v970 = vpop.f32.mrb[0].mxu0
        %971 = vmatprep.mubr.bf16.mxu0 0
        %972 = vmatmul.mubr.bf16.gmra.mrb[0].mxu0 %v877
        %v973 = vpop.f32.mrb[0].mxu0
        %v974 = vadd.f32 %v853, %v973
        %v975 = vpop.f32.mrb[0].mxu0
        %v976 = vpop.f32.mrb[0].mxu0
        %v977 = vadd.f32 %v853, %v976
        %v978 = vpop.f32.mrb[0].mxu0
        %979 = vmatprep.mubr.bf16.mxu0 0
        %980 = vmatmul.mubr.bf16.gmra.mrb[0].mxu0 %v880
        %v981 = vpop.f32.mrb[0].mxu0
        %v982 = vadd.f32 %v853, %v981
        %v983 = vpop.f32.mrb[0].mxu0
        %v984 = vpop.f32.mrb[0].mxu0
        %v985 = vadd.f32 %v853, %v984
        %v986 = vpop.f32.mrb[0].mxu0
        %987 = vmatprep.mubr.bf16.mxu0 0
        %988 = vmatmul.mubr.bf16.gmra.mrb[0].mxu0 %v883
        %v989 = vpop.f32.mrb[0].mxu0
        %v990 = vadd.f32 %v853, %v989
        %v991 = vpop.f32.mrb[0].mxu0
        %v992 = vpop.f32.mrb[0].mxu0
        %v993 = vadd.f32 %v853, %v992
        %v994 = vpop.f32.mrb[0].mxu0
        %995 = vmatprep.mubr.bf16.mxu0 0
        %996 = vmatmul.mubr.bf16.gmra.mrb[0].mxu0 %v886
        %v997 = vpop.f32.mrb[0].mxu0
        %v998 = vadd.f32 %v853, %v997
        %v999 = vpop.f32.mrb[0].mxu0
        %v1000 = vpop.f32.mrb[0].mxu0
        %v1001 = vadd.f32 %v853, %v1000
        %v1002 = vpop.f32.mrb[0].mxu0
        %1003 = vmatprep.mubr.bf16.mxu0 0
        %1004 = vmatmul.mubr.bf16.gmra.mrb[0].mxu0 %v889
        %v1005 = vpop.f32.mrb[0].mxu0
        %v1006 = vadd.f32 %v853, %v1005
        %v1007 = vpop.f32.mrb[0].mxu0
        %v1008 = vpop.f32.mrb[0].mxu0
        %v1009 = vadd.f32 %v853, %v1008
        %v1010 = vpop.f32.mrb[0].mxu0
        %1011 = vmatprep.mubr.bf16.mxu0 0
        %1012 = vmatmul.mubr.bf16.gmra.mrb[0].mxu0 %v892
        %v1013 = vpop.f32.mrb[0].mxu0
        %v1014 = vadd.f32 %v853, %v1013
        %v1015 = vpop.f32.mrb[0].mxu0
        %v1016 = vpop.f32.mrb[0].mxu0
        %v1017 = vadd.f32 %v853, %v1016
        %v1018 = vpop.f32.mrb[0].mxu0
        %1019 = vmatprep.mubr.bf16.mxu0 0
        %1020 = vmatmul.mubr.bf16.gmra.mrb[0].mxu0 %v895
        %v1021 = vpop.f32.mrb[0].mxu0
        %v1022 = vadd.f32 %v853, %v1021
        %v1023 = vpop.f32.mrb[0].mxu0
        %v1024 = vpop.f32.mrb[0].mxu0
        %v1025 = vadd.f32 %v853, %v1024
        %v1026 = vpop.f32.mrb[0].mxu0
        %1027 = vmatprep.mubr.bf16.mxu0 0
        %1028 = vmatmul.mubr.bf16.gmra.mrb[0].mxu0 %v898
        %v1029 = vpop.f32.mrb[0].mxu0
        %v1030 = vadd.f32 %v853, %v1029
        %v1031 = vpop.f32.mrb[0].mxu0
        %v1032 = vpop.f32.mrb[0].mxu0
        %v1033 = vadd.f32 %v853, %v1032
        %v1034 = vpop.f32.mrb[0].mxu0
        %1035 = vmatprep.mubr.bf16.mxu0 0
        %1036 = vmatmul.mubr.bf16.gmra.mrb[0].mxu0 %v901
        %v1037 = vpop.f32.mrb[0].mxu0
        %v1038 = vadd.f32 %v853, %v1037
        %v1039 = vpop.f32.mrb[0].mxu0
        %v1040 = vpop.f32.mrb[0].mxu0
        %v1041 = vadd.f32 %v853, %v1040
        %v1042 = vpop.f32.mrb[0].mxu0
        %1043 = vmatprep.mubr.bf16.mxu0 0
        %1044 = vmatmul.mubr.bf16.gmra.mrb[0].mxu0 %v904
        %v1045 = vpop.f32.mrb[0].mxu0
        %v1046 = vadd.f32 %v853, %v1045
        %v1047 = vpop.f32.mrb[0].mxu0
        %v1048 = vpop.f32.mrb[0].mxu0
        %v1049 = vadd.f32 %v853, %v1048
        %v1050 = vpop.f32.mrb[0].mxu0
        %1051 = vmatprep.mubr.bf16.mxu0 0
        %1052 = vmatmul.mubr.bf16.gmra.mrb[0].mxu0 %v907
        %v1053 = vpop.f32.mrb[0].mxu0
        %v1054 = vadd.f32 %v853, %v1053
        %v1055 = vpop.f32.mrb[0].mxu0
        %v1056 = vpop.f32.mrb[0].mxu0
        %v1057 = vadd.f32 %v853, %v1056
        %v1058 = vpop.f32.mrb[0].mxu0
        %1059 = vmatprep.mubr.bf16.mxu0 0
        %1060 = vmatmul.mubr.bf16.gmra.mrb[0].mxu0 %v910
        %v1061 = vpop.f32.mrb[0].mxu0
        %v1062 = vadd.f32 %v853, %v1061
        %v1063 = vpop.f32.mrb[0].mxu0
        %v1064 = vpop.f32.mrb[0].mxu0
        %v1065 = vadd.f32 %v853, %v1064
        %v1066 = vpop.f32.mrb[0].mxu0
        %1067 = vmatprep.mubr.bf16.mxu0 0
        %1068 = vmatmul.mubr.bf16.gmra.mrb[0].mxu0 %v913
        %v1069 = vpop.f32.mrb[0].mxu0
        %v1070 = vadd.f32 %v853, %v1069
        %v1071 = vpop.f32.mrb[0].mxu0
        %v1072 = vpop.f32.mrb[0].mxu0
        %v1073 = vadd.f32 %v853, %v1072
        %v1074 = vpop.f32.mrb[0].mxu0
        %1075 = vdwg.mxu0
        %v1076 = vsel %vm634, %v718, -inf
        %1077 = vmax.xlane.f32.xlu0 %v1076
        %v1078 = vpop.xlane.xlu0 %1077
        %v1079 = vsel %vm634, %v721, -inf
        %1080 = vmax.xlane.f32.xlu0 %v1079
        %v1081 = vpop.xlane.xlu0 %1080
        %v1082 = vsel %vm634, %v726, -inf
        %1083 = vmax.xlane.f32.xlu0 %v1082
        %v1084 = vpop.xlane.xlu0 %1083
        %v1085 = vsel %vm634, %v729, -inf
        %1086 = vmax.xlane.f32.xlu0 %v1085
        %v1087 = vpop.xlane.xlu0 %1086
        %v1088 = vsel %vm634, %v734, -inf
        %1089 = vmax.xlane.f32.xlu0 %v1088
        %v1090 = vpop.xlane.xlu0 %1089
        %v1091 = vsel %vm634, %v737, -inf
        %1092 = vmax.xlane.f32.xlu0 %v1091
        %v1093 = vpop.xlane.xlu0 %1092
        %v1094 = vsel %vm634, %v742, -inf
        %1095 = vmax.xlane.f32.xlu0 %v1094
        %v1096 = vpop.xlane.xlu0 %1095
        %v1097 = vsel %vm634, %v745, -inf
        %1098 = vmax.xlane.f32.xlu0 %v1097
        %v1099 = vpop.xlane.xlu0 %1098
        %v1100 = vsel %vm634, %v750, -inf
        %1101 = vmax.xlane.f32.xlu0 %v1100
        %v1102 = vpop.xlane.xlu0 %1101
        %v1103 = vsel %vm634, %v753, -inf
        %1104 = vmax.xlane.f32.xlu0 %v1103
        %v1105 = vpop.xlane.xlu0 %1104
        %v1106 = vsel %vm634, %v758, -inf
        %1107 = vmax.xlane.f32.xlu0 %v1106
        %v1108 = vpop.xlane.xlu0 %1107
        %v1109 = vsel %vm634, %v761, -inf
        %1110 = vmax.xlane.f32.xlu0 %v1109
        %v1111 = vpop.xlane.xlu0 %1110
        %v1112 = vsel %vm634, %v766, -inf
        %1113 = vmax.xlane.f32.xlu0 %v1112
        %v1114 = vpop.xlane.xlu0 %1113
        %v1115 = vsel %vm634, %v769, -inf
        %1116 = vmax.xlane.f32.xlu0 %v1115
        %v1117 = vpop.xlane.xlu0 %1116
        %v1118 = vsel %vm634, %v774, -inf
        %1119 = vmax.xlane.f32.xlu0 %v1118
        %v1120 = vpop.xlane.xlu0 %1119
        %v1121 = vsel %vm634, %v777, -inf
        %1122 = vmax.xlane.f32.xlu0 %v1121
        %v1123 = vpop.xlane.xlu0 %1122
        %v1124 = vsel %vm634, %v782, -inf
        %1125 = vmax.xlane.f32.xlu0 %v1124
        %v1126 = vpop.xlane.xlu0 %1125
        %v1127 = vsel %vm634, %v785, -inf
        %1128 = vmax.xlane.f32.xlu0 %v1127
        %v1129 = vpop.xlane.xlu0 %1128
        %v1130 = vsel %vm634, %v790, -inf
        %1131 = vmax.xlane.f32.xlu0 %v1130
        %v1132 = vpop.xlane.xlu0 %1131
        %v1133 = vsel %vm634, %v793, -inf
        %1134 = vmax.xlane.f32.xlu0 %v1133
        %v1135 = vpop.xlane.xlu0 %1134
        %v1136 = vsel %vm634, %v798, -inf
        %1137 = vmax.xlane.f32.xlu0 %v1136
        %v1138 = vpop.xlane.xlu0 %1137
        %v1139 = vsel %vm634, %v801, -inf
        %1140 = vmax.xlane.f32.xlu0 %v1139
        %v1141 = vpop.xlane.xlu0 %1140
        %v1142 = vsel %vm634, %v806, -inf
        %1143 = vmax.xlane.f32.xlu0 %v1142
        %v1144 = vpop.xlane.xlu0 %1143
        %v1145 = vsel %vm634, %v809, -inf
        %1146 = vmax.xlane.f32.xlu0 %v1145
        %v1147 = vpop.xlane.xlu0 %1146
        %v1148 = vsel %vm634, %v814, -inf
        %1149 = vmax.xlane.f32.xlu0 %v1148
        %v1150 = vpop.xlane.xlu0 %1149
        %v1151 = vsel %vm634, %v817, -inf
        %1152 = vmax.xlane.f32.xlu0 %v1151
        %v1153 = vpop.xlane.xlu0 %1152
        %v1154 = vsel %vm634, %v822, -inf
        %1155 = vmax.xlane.f32.xlu0 %v1154
        %v1156 = vpop.xlane.xlu0 %1155
        %v1157 = vsel %vm634, %v825, -inf
        %1158 = vmax.xlane.f32.xlu0 %v1157
        %v1159 = vpop.xlane.xlu0 %1158
        %v1160 = vsel %vm634, %v830, -inf
        %1161 = vmax.xlane.f32.xlu0 %v1160
        %v1162 = vpop.xlane.xlu0 %1161
        %v1163 = vsel %vm634, %v833, -inf
        %1164 = vmax.xlane.f32.xlu0 %v1163
        %v1165 = vpop.xlane.xlu0 %1164
        %v1166 = vsel %vm634, %v838, -inf
        %1167 = vmax.xlane.f32.xlu0 %v1166
        %v1168 = vpop.xlane.xlu0 %1167
        %v1169 = vsel %vm634, %v841, -inf
        %1170 = vmax.xlane.f32.xlu0 %v1169
        %v1171 = vpop.xlane.xlu0 %1170
        %v1172 = vsel %vm634, %v950, -inf
        %1173 = vmax.xlane.f32.xlu0 %v1172
        %v1174 = vpop.xlane.xlu0 %1173
        %v1175 = vsel %vm634, %v953, -inf
        %1176 = vmax.xlane.f32.xlu0 %v1175
        %v1177 = vpop.xlane.xlu0 %1176
        %v1178 = vsel %vm634, %v958, -inf
        %1179 = vmax.xlane.f32.xlu0 %v1178
        %v1180 = vpop.xlane.xlu0 %1179
        %v1181 = vsel %vm634, %v961, -inf
        %1182 = vmax.xlane.f32.xlu0 %v1181
        %v1183 = vpop.xlane.xlu0 %1182
        %v1184 = vsel %vm634, %v966, -inf
        %1185 = vmax.xlane.f32.xlu0 %v1184
        %v1186 = vpop.xlane.xlu0 %1185
        %v1187 = vsel %vm634, %v969, -inf
        %1188 = vmax.xlane.f32.xlu0 %v1187
        %v1189 = vpop.xlane.xlu0 %1188
        %v1190 = vsel %vm634, %v974, -inf
        %1191 = vmax.xlane.f32.xlu0 %v1190
        %v1192 = vpop.xlane.xlu0 %1191
        %v1193 = vsel %vm634, %v977, -inf
        %1194 = vmax.xlane.f32.xlu0 %v1193
        %v1195 = vpop.xlane.xlu0 %1194
        %v1196 = vsel %vm634, %v982, -inf
        %1197 = vmax.xlane.f32.xlu0 %v1196
        %v1198 = vpop.xlane.xlu0 %1197
        %v1199 = vsel %vm634, %v985, -inf
        %1200 = vmax.xlane.f32.xlu0 %v1199
        %v1201 = vpop.xlane.xlu0 %1200
        %v1202 = vsel %vm634, %v990, -inf
        %1203 = vmax.xlane.f32.xlu0 %v1202
        %v1204 = vpop.xlane.xlu0 %1203
        %v1205 = vsel %vm634, %v993, -inf
        %1206 = vmax.xlane.f32.xlu0 %v1205
        %v1207 = vpop.xlane.xlu0 %1206
        %v1208 = vsel %vm634, %v998, -inf
        %1209 = vmax.xlane.f32.xlu0 %v1208
        %v1210 = vpop.xlane.xlu0 %1209
        %v1211 = vsel %vm634, %v1001, -inf
        %1212 = vmax.xlane.f32.xlu0 %v1211
        %v1213 = vpop.xlane.xlu0 %1212
        %v1214 = vsel %vm634, %v1006, -inf
        %1215 = vmax.xlane.f32.xlu0 %v1214
        %v1216 = vpop.xlane.xlu0 %1215
        %v1217 = vsel %vm634, %v1009, -inf
        %1218 = vmax.xlane.f32.xlu0 %v1217
        %v1219 = vpop.xlane.xlu0 %1218
        %v1220 = vsel %vm634, %v1014, -inf
        %1221 = vmax.xlane.f32.xlu0 %v1220
        %v1222 = vpop.xlane.xlu0 %1221
        %v1223 = vsel %vm634, %v1017, -inf
        %1224 = vmax.xlane.f32.xlu0 %v1223
        %v1225 = vpop.xlane.xlu0 %1224
        %v1226 = vsel %vm634, %v1022, -inf
        %1227 = vmax.xlane.f32.xlu0 %v1226
        %v1228 = vpop.xlane.xlu0 %1227
        %v1229 = vsel %vm634, %v1025, -inf
        %1230 = vmax.xlane.f32.xlu0 %v1229
        %v1231 = vpop.xlane.xlu0 %1230
        %v1232 = vsel %vm634, %v1030, -inf
        %1233 = vmax.xlane.f32.xlu0 %v1232
        %v1234 = vpop.xlane.xlu0 %1233
        %v1235 = vsel %vm634, %v1033, -inf
        %1236 = vmax.xlane.f32.xlu0 %v1235
        %v1237 = vpop.xlane.xlu0 %1236
        %v1238 = vsel %vm634, %v1038, -inf
        %1239 = vmax.xlane.f32.xlu0 %v1238
        %v1240 = vpop.xlane.xlu0 %1239
        %v1241 = vsel %vm634, %v1041, -inf
        %1242 = vmax.xlane.f32.xlu0 %v1241
        %v1243 = vpop.xlane.xlu0 %1242
        %v1244 = vsel %vm634, %v1046, -inf
        %1245 = vmax.xlane.f32.xlu0 %v1244
        %v1246 = vpop.xlane.xlu0 %1245
        %v1247 = vsel %vm634, %v1049, -inf
        %1248 = vmax.xlane.f32.xlu0 %v1247
        %v1249 = vpop.xlane.xlu0 %1248
        %v1250 = vsel %vm634, %v1054, -inf
        %1251 = vmax.xlane.f32.xlu0 %v1250
        %v1252 = vpop.xlane.xlu0 %1251
        %v1253 = vsel %vm634, %v1057, -inf
        %1254 = vmax.xlane.f32.xlu0 %v1253
        %v1255 = vpop.xlane.xlu0 %1254
        %v1256 = vsel %vm634, %v1062, -inf
        %1257 = vmax.xlane.f32.xlu0 %v1256
        %v1258 = vpop.xlane.xlu0 %1257
        %v1259 = vsel %vm634, %v1065, -inf
        %1260 = vmax.xlane.f32.xlu0 %v1259
        %v1261 = vpop.xlane.xlu0 %1260
        %v1262 = vsel %vm634, %v1070, -inf
        %1263 = vmax.xlane.f32.xlu0 %v1262
        %v1264 = vpop.xlane.xlu0 %1263
        %v1265 = vsel %vm634, %v1073, -inf
        %1266 = vmax.xlane.f32.xlu0 %v1265
        %v1267 = vpop.xlane.xlu0 %1266
        %v1268 = vsub.f32 %v718, %v1078
        %v1269 = vsub.f32 %v721, %v1081
        %v1270 = vsub.f32 %v726, %v1084
        %v1271 = vsub.f32 %v729, %v1087
        %v1272 = vsub.f32 %v734, %v1090
        %v1273 = vsub.f32 %v737, %v1093
        %v1274 = vsub.f32 %v742, %v1096
        %v1275 = vsub.f32 %v745, %v1099
        %v1276 = vsub.f32 %v750, %v1102
        %v1277 = vsub.f32 %v753, %v1105
        %v1278 = vsub.f32 %v758, %v1108
        %v1279 = vsub.f32 %v761, %v1111
        %v1280 = vsub.f32 %v766, %v1114
        %v1281 = vsub.f32 %v769, %v1117
        %v1282 = vsub.f32 %v774, %v1120
        %v1283 = vsub.f32 %v777, %v1123
        %v1284 = vsub.f32 %v782, %v1126
        %v1285 = vsub.f32 %v785, %v1129
        %v1286 = vsub.f32 %v790, %v1132
        %v1287 = vsub.f32 %v793, %v1135
        %v1288 = vsub.f32 %v798, %v1138
        %v1289 = vsub.f32 %v801, %v1141
        %v1290 = vsub.f32 %v806, %v1144
        %v1291 = vsub.f32 %v809, %v1147
        %v1292 = vsub.f32 %v814, %v1150
        %v1293 = vsub.f32 %v817, %v1153
        %v1294 = vsub.f32 %v822, %v1156
        %v1295 = vsub.f32 %v825, %v1159
        %v1296 = vsub.f32 %v830, %v1162
        %v1297 = vsub.f32 %v833, %v1165
        %v1298 = vsub.f32 %v838, %v1168
        %v1299 = vsub.f32 %v841, %v1171
        %v1300 = vsub.f32 %v950, %v1174
        %v1301 = vsub.f32 %v953, %v1177
        %v1302 = vsub.f32 %v958, %v1180
        %v1303 = vsub.f32 %v961, %v1183
        %v1304 = vsub.f32 %v966, %v1186
        %v1305 = vsub.f32 %v969, %v1189
        %v1306 = vsub.f32 %v974, %v1192
        %v1307 = vsub.f32 %v977, %v1195
        %v1308 = vsub.f32 %v982, %v1198
        %v1309 = vsub.f32 %v985, %v1201
        %v1310 = vsub.f32 %v990, %v1204
        %v1311 = vsub.f32 %v993, %v1207
        %v1312 = vsub.f32 %v998, %v1210
        %v1313 = vsub.f32 %v1001, %v1213
        %v1314 = vsub.f32 %v1006, %v1216
        %v1315 = vsub.f32 %v1009, %v1219
        %v1316 = vsub.f32 %v1014, %v1222
        %v1317 = vsub.f32 %v1017, %v1225
        %v1318 = vsub.f32 %v1022, %v1228
        %v1319 = vsub.f32 %v1025, %v1231
        %v1320 = vsub.f32 %v1030, %v1234
        %v1321 = vsub.f32 %v1033, %v1237
        %v1322 = vsub.f32 %v1038, %v1240
        %v1323 = vsub.f32 %v1041, %v1243
        %v1324 = vsub.f32 %v1046, %v1246
        %v1325 = vsub.f32 %v1049, %v1249
        %v1326 = vsub.f32 %v1054, %v1252
        %v1327 = vsub.f32 %v1057, %v1255
        %v1328 = vsub.f32 %v1062, %v1258
        %v1329 = vsub.f32 %v1065, %v1261
        %v1330 = vsub.f32 %v1070, %v1264
        %v1331 = vsub.f32 %v1073, %v1267
        %v1332 = vmul.f32 %v1268, 1.442695
        %v1333 = vpow.pop %v1332
        %v1334 = vmul.f32 %v1269, 1.442695
        %v1335 = vpow.pop %v1334
        %v1336 = vmul.f32 %v1270, 1.442695
        %v1337 = vpow.pop %v1336
        %v1338 = vmul.f32 %v1271, 1.442695
        %v1339 = vpow.pop %v1338
        %v1340 = vmul.f32 %v1272, 1.442695
        %v1341 = vpow.pop %v1340
        %v1342 = vmul.f32 %v1273, 1.442695
        %v1343 = vpow.pop %v1342
        %v1344 = vmul.f32 %v1274, 1.442695
        %v1345 = vpow.pop %v1344
        %v1346 = vmul.f32 %v1275, 1.442695
        %v1347 = vpow.pop %v1346
        %v1348 = vmul.f32 %v1276, 1.442695
        %v1349 = vpow.pop %v1348
        %v1350 = vmul.f32 %v1277, 1.442695
        %v1351 = vpow.pop %v1350
        %v1352 = vmul.f32 %v1278, 1.442695
        %v1353 = vpow.pop %v1352
        %v1354 = vmul.f32 %v1279, 1.442695
        %v1355 = vpow.pop %v1354
        %v1356 = vmul.f32 %v1280, 1.442695
        %v1357 = vpow.pop %v1356
        %v1358 = vmul.f32 %v1281, 1.442695
        %v1359 = vpow.pop %v1358
        %v1360 = vmul.f32 %v1282, 1.442695
        %v1361 = vpow.pop %v1360
        %v1362 = vmul.f32 %v1283, 1.442695
        %v1363 = vpow.pop %v1362
        %v1364 = vmul.f32 %v1284, 1.442695
        %v1365 = vpow.pop %v1364
        %v1366 = vmul.f32 %v1285, 1.442695
        %v1367 = vpow.pop %v1366
        %v1368 = vmul.f32 %v1286, 1.442695
        %v1369 = vpow.pop %v1368
        %v1370 = vmul.f32 %v1287, 1.442695
        %v1371 = vpow.pop %v1370
        %v1372 = vmul.f32 %v1288, 1.442695
        %v1373 = vpow.pop %v1372
        %v1374 = vmul.f32 %v1289, 1.442695
        %v1375 = vpow.pop %v1374
        %v1376 = vmul.f32 %v1290, 1.442695
        %v1377 = vpow.pop %v1376
        %v1378 = vmul.f32 %v1291, 1.442695
        %v1379 = vpow.pop %v1378
        %v1380 = vmul.f32 %v1292, 1.442695
        %v1381 = vpow.pop %v1380
        %v1382 = vmul.f32 %v1293, 1.442695
        %v1383 = vpow.pop %v1382
        %v1384 = vmul.f32 %v1294, 1.442695
        %v1385 = vpow.pop %v1384
        %v1386 = vmul.f32 %v1295, 1.442695
        %v1387 = vpow.pop %v1386
        %v1388 = vmul.f32 %v1296, 1.442695
        %v1389 = vpow.pop %v1388
        %v1390 = vmul.f32 %v1297, 1.442695
        %v1391 = vpow.pop %v1390
        %v1392 = vmul.f32 %v1298, 1.442695
        %v1393 = vpow.pop %v1392
        %v1394 = vmul.f32 %v1299, 1.442695
        %v1395 = vpow.pop %v1394
        %v1396 = vmul.f32 %v1300, 1.442695
        %v1397 = vpow.pop %v1396
        %v1398 = vmul.f32 %v1301, 1.442695
        %v1399 = vpow.pop %v1398
        %v1400 = vmul.f32 %v1302, 1.442695
        %v1401 = vpow.pop %v1400
        %v1402 = vmul.f32 %v1303, 1.442695
        %v1403 = vpow.pop %v1402
        %v1404 = vmul.f32 %v1304, 1.442695
        %v1405 = vpow.pop %v1404
        %v1406 = vmul.f32 %v1305, 1.442695
        %v1407 = vpow.pop %v1406
        %v1408 = vmul.f32 %v1306, 1.442695
        %v1409 = vpow.pop %v1408
        %v1410 = vmul.f32 %v1307, 1.442695
        %v1411 = vpow.pop %v1410
        %v1412 = vmul.f32 %v1308, 1.442695
        %v1413 = vpow.pop %v1412
        %v1414 = vmul.f32 %v1309, 1.442695
        %v1415 = vpow.pop %v1414
        %v1416 = vmul.f32 %v1310, 1.442695
        %v1417 = vpow.pop %v1416
        %v1418 = vmul.f32 %v1311, 1.442695
        %v1419 = vpow.pop %v1418
        %v1420 = vmul.f32 %v1312, 1.442695
        %v1421 = vpow.pop %v1420
        %v1422 = vmul.f32 %v1313, 1.442695
        %v1423 = vpow.pop %v1422
        %v1424 = vmul.f32 %v1314, 1.442695
        %v1425 = vpow.pop %v1424
        %v1426 = vmul.f32 %v1315, 1.442695
        %v1427 = vpow.pop %v1426
        %v1428 = vmul.f32 %v1316, 1.442695
        %v1429 = vpow.pop %v1428
        %v1430 = vmul.f32 %v1317, 1.442695
        %v1431 = vpow.pop %v1430
        %v1432 = vmul.f32 %v1318, 1.442695
        %v1433 = vpow.pop %v1432
        %v1434 = vmul.f32 %v1319, 1.442695
        %v1435 = vpow.pop %v1434
        %v1436 = vmul.f32 %v1320, 1.442695
        %v1437 = vpow.pop %v1436
        %v1438 = vmul.f32 %v1321, 1.442695
        %v1439 = vpow.pop %v1438
        %v1440 = vmul.f32 %v1322, 1.442695
        %v1441 = vpow.pop %v1440
        %v1442 = vmul.f32 %v1323, 1.442695
        %v1443 = vpow.pop %v1442
        %v1444 = vmul.f32 %v1324, 1.442695
        %v1445 = vpow.pop %v1444
        %v1446 = vmul.f32 %v1325, 1.442695
        %v1447 = vpow.pop %v1446
        %v1448 = vmul.f32 %v1326, 1.442695
        %v1449 = vpow.pop %v1448
        %v1450 = vmul.f32 %v1327, 1.442695
        %v1451 = vpow.pop %v1450
        %v1452 = vmul.f32 %v1328, 1.442695
        %v1453 = vpow.pop %v1452
        %v1454 = vmul.f32 %v1329, 1.442695
        %v1455 = vpow.pop %v1454
        %v1456 = vmul.f32 %v1330, 1.442695
        %v1457 = vpow.pop %v1456
        %v1458 = vmul.f32 %v1331, 1.442695
        %v1459 = vpow.pop %v1458
        %v1460 = vsel %vm634, %v1333, 0.0
        %1461 = vadd.xlane.f32.xlu0 %v1460
        %v1462 = vpop.xlane.xlu0 %1461
        %v1463 = vsel %vm634, %v1335, 0.0
        %1464 = vadd.xlane.f32.xlu0 %v1463
        %v1465 = vpop.xlane.xlu0 %1464
        %v1466 = vsel %vm634, %v1337, 0.0
        %1467 = vadd.xlane.f32.xlu0 %v1466
        %v1468 = vpop.xlane.xlu0 %1467
        %v1469 = vsel %vm634, %v1339, 0.0
        %1470 = vadd.xlane.f32.xlu0 %v1469
        %v1471 = vpop.xlane.xlu0 %1470
        %v1472 = vsel %vm634, %v1341, 0.0
        %1473 = vadd.xlane.f32.xlu0 %v1472
        %v1474 = vpop.xlane.xlu0 %1473
        %v1475 = vsel %vm634, %v1343, 0.0
        %1476 = vadd.xlane.f32.xlu0 %v1475
        %v1477 = vpop.xlane.xlu0 %1476
        %v1478 = vsel %vm634, %v1345, 0.0
        %1479 = vadd.xlane.f32.xlu0 %v1478
        %v1480 = vpop.xlane.xlu0 %1479
        %v1481 = vsel %vm634, %v1347, 0.0
        %1482 = vadd.xlane.f32.xlu0 %v1481
        %v1483 = vpop.xlane.xlu0 %1482
        %v1484 = vsel %vm634, %v1349, 0.0
        %1485 = vadd.xlane.f32.xlu0 %v1484
        %v1486 = vpop.xlane.xlu0 %1485
        %v1487 = vsel %vm634, %v1351, 0.0
        %1488 = vadd.xlane.f32.xlu0 %v1487
        %v1489 = vpop.xlane.xlu0 %1488
        %v1490 = vsel %vm634, %v1353, 0.0
        %1491 = vadd.xlane.f32.xlu0 %v1490
        %v1492 = vpop.xlane.xlu0 %1491
        %v1493 = vsel %vm634, %v1355, 0.0
        %1494 = vadd.xlane.f32.xlu0 %v1493
        %v1495 = vpop.xlane.xlu0 %1494
        %v1496 = vsel %vm634, %v1357, 0.0
        %1497 = vadd.xlane.f32.xlu0 %v1496
        %v1498 = vpop.xlane.xlu0 %1497
        %v1499 = vsel %vm634, %v1359, 0.0
        %1500 = vadd.xlane.f32.xlu0 %v1499
        %v1501 = vpop.xlane.xlu0 %1500
        %v1502 = vsel %vm634, %v1361, 0.0
        %1503 = vadd.xlane.f32.xlu0 %v1502
        %v1504 = vpop.xlane.xlu0 %1503
        %v1505 = vsel %vm634, %v1363, 0.0
        %1506 = vadd.xlane.f32.xlu0 %v1505
        %v1507 = vpop.xlane.xlu0 %1506
        %v1508 = vsel %vm634, %v1365, 0.0
        %1509 = vadd.xlane.f32.xlu0 %v1508
        %v1510 = vpop.xlane.xlu0 %1509
        %v1511 = vsel %vm634, %v1367, 0.0
        %1512 = vadd.xlane.f32.xlu0 %v1511
        %v1513 = vpop.xlane.xlu0 %1512
        %v1514 = vsel %vm634, %v1369, 0.0
        %1515 = vadd.xlane.f32.xlu0 %v1514
        %v1516 = vpop.xlane.xlu0 %1515
        %v1517 = vsel %vm634, %v1371, 0.0
        %1518 = vadd.xlane.f32.xlu0 %v1517
        %v1519 = vpop.xlane.xlu0 %1518
        %v1520 = vsel %vm634, %v1373, 0.0
        %1521 = vadd.xlane.f32.xlu0 %v1520
        %v1522 = vpop.xlane.xlu0 %1521
        %v1523 = vsel %vm634, %v1375, 0.0
        %1524 = vadd.xlane.f32.xlu0 %v1523
        %v1525 = vpop.xlane.xlu0 %1524
        %v1526 = vsel %vm634, %v1377, 0.0
        %1527 = vadd.xlane.f32.xlu0 %v1526
        %v1528 = vpop.xlane.xlu0 %1527
        %v1529 = vsel %vm634, %v1379, 0.0
        %1530 = vadd.xlane.f32.xlu0 %v1529
        %v1531 = vpop.xlane.xlu0 %1530
        %v1532 = vsel %vm634, %v1381, 0.0
        %1533 = vadd.xlane.f32.xlu0 %v1532
        %v1534 = vpop.xlane.xlu0 %1533
        %v1535 = vsel %vm634, %v1383, 0.0
        %1536 = vadd.xlane.f32.xlu0 %v1535
        %v1537 = vpop.xlane.xlu0 %1536
        %v1538 = vsel %vm634, %v1385, 0.0
        %1539 = vadd.xlane.f32.xlu0 %v1538
        %v1540 = vpop.xlane.xlu0 %1539
        %v1541 = vsel %vm634, %v1387, 0.0
        %1542 = vadd.xlane.f32.xlu0 %v1541
        %v1543 = vpop.xlane.xlu0 %1542
        %v1544 = vsel %vm634, %v1389, 0.0
        %1545 = vadd.xlane.f32.xlu0 %v1544
        %v1546 = vpop.xlane.xlu0 %1545
        %v1547 = vsel %vm634, %v1391, 0.0
        %1548 = vadd.xlane.f32.xlu0 %v1547
        %v1549 = vpop.xlane.xlu0 %1548
        %v1550 = vsel %vm634, %v1393, 0.0
        %1551 = vadd.xlane.f32.xlu0 %v1550
        %v1552 = vpop.xlane.xlu0 %1551
        %v1553 = vsel %vm634, %v1395, 0.0
        %1554 = vadd.xlane.f32.xlu0 %v1553
        %v1555 = vpop.xlane.xlu0 %1554
        %v1556 = vsel %vm634, %v1397, 0.0
        %1557 = vadd.xlane.f32.xlu0 %v1556
        %v1558 = vpop.xlane.xlu0 %1557
        %v1559 = vsel %vm634, %v1399, 0.0
        %1560 = vadd.xlane.f32.xlu0 %v1559
        %v1561 = vpop.xlane.xlu0 %1560
        %v1562 = vsel %vm634, %v1401, 0.0
        %1563 = vadd.xlane.f32.xlu0 %v1562
        %v1564 = vpop.xlane.xlu0 %1563
        %v1565 = vsel %vm634, %v1403, 0.0
        %1566 = vadd.xlane.f32.xlu0 %v1565
        %v1567 = vpop.xlane.xlu0 %1566
        %v1568 = vsel %vm634, %v1405, 0.0
        %1569 = vadd.xlane.f32.xlu0 %v1568
        %v1570 = vpop.xlane.xlu0 %1569
        %v1571 = vsel %vm634, %v1407, 0.0
        %1572 = vadd.xlane.f32.xlu0 %v1571
        %v1573 = vpop.xlane.xlu0 %1572
        %v1574 = vsel %vm634, %v1409, 0.0
        %1575 = vadd.xlane.f32.xlu0 %v1574
        %v1576 = vpop.xlane.xlu0 %1575
        %v1577 = vsel %vm634, %v1411, 0.0
        %1578 = vadd.xlane.f32.xlu0 %v1577
        %v1579 = vpop.xlane.xlu0 %1578
        %v1580 = vsel %vm634, %v1413, 0.0
        %1581 = vadd.xlane.f32.xlu0 %v1580
        %v1582 = vpop.xlane.xlu0 %1581
        %v1583 = vsel %vm634, %v1415, 0.0
        %1584 = vadd.xlane.f32.xlu0 %v1583
        %v1585 = vpop.xlane.xlu0 %1584
        %v1586 = vsel %vm634, %v1417, 0.0
        %1587 = vadd.xlane.f32.xlu0 %v1586
        %v1588 = vpop.xlane.xlu0 %1587
        %v1589 = vsel %vm634, %v1419, 0.0
        %1590 = vadd.xlane.f32.xlu0 %v1589
        %v1591 = vpop.xlane.xlu0 %1590
        %v1592 = vsel %vm634, %v1421, 0.0
        %1593 = vadd.xlane.f32.xlu0 %v1592
        %v1594 = vpop.xlane.xlu0 %1593
        %v1595 = vsel %vm634, %v1423, 0.0
        %1596 = vadd.xlane.f32.xlu0 %v1595
        %v1597 = vpop.xlane.xlu0 %1596
        %v1598 = vsel %vm634, %v1425, 0.0
        %1599 = vadd.xlane.f32.xlu0 %v1598
        %v1600 = vpop.xlane.xlu0 %1599
        %v1601 = vsel %vm634, %v1427, 0.0
        %1602 = vadd.xlane.f32.xlu0 %v1601
        %v1603 = vpop.xlane.xlu0 %1602
        %v1604 = vsel %vm634, %v1429, 0.0
        %1605 = vadd.xlane.f32.xlu0 %v1604
        %v1606 = vpop.xlane.xlu0 %1605
        %v1607 = vsel %vm634, %v1431, 0.0
        %1608 = vadd.xlane.f32.xlu0 %v1607
        %v1609 = vpop.xlane.xlu0 %1608
        %v1610 = vsel %vm634, %v1433, 0.0
        %1611 = vadd.xlane.f32.xlu0 %v1610
        %v1612 = vpop.xlane.xlu0 %1611
        %v1613 = vsel %vm634, %v1435, 0.0
        %1614 = vadd.xlane.f32.xlu0 %v1613
        %v1615 = vpop.xlane.xlu0 %1614
        %v1616 = vsel %vm634, %v1437, 0.0
        %1617 = vadd.xlane.f32.xlu0 %v1616
        %v1618 = vpop.xlane.xlu0 %1617
        %v1619 = vsel %vm634, %v1439, 0.0
        %1620 = vadd.xlane.f32.xlu0 %v1619
        %v1621 = vpop.xlane.xlu0 %1620
        %v1622 = vsel %vm634, %v1441, 0.0
        %1623 = vadd.xlane.f32.xlu0 %v1622
        %v1624 = vpop.xlane.xlu0 %1623
        %v1625 = vsel %vm634, %v1443, 0.0
        %1626 = vadd.xlane.f32.xlu0 %v1625
        %v1627 = vpop.xlane.xlu0 %1626
        %v1628 = vsel %vm634, %v1445, 0.0
        %1629 = vadd.xlane.f32.xlu0 %v1628
        %v1630 = vpop.xlane.xlu0 %1629
        %v1631 = vsel %vm634, %v1447, 0.0
        %1632 = vadd.xlane.f32.xlu0 %v1631
        %v1633 = vpop.xlane.xlu0 %1632
        %v1634 = vsel %vm634, %v1449, 0.0
        %1635 = vadd.xlane.f32.xlu0 %v1634
        %v1636 = vpop.xlane.xlu0 %1635
        %v1637 = vsel %vm634, %v1451, 0.0
        %1638 = vadd.xlane.f32.xlu0 %v1637
        %v1639 = vpop.xlane.xlu0 %1638
        %v1640 = vsel %vm634, %v1453, 0.0
        %1641 = vadd.xlane.f32.xlu0 %v1640
        %v1642 = vpop.xlane.xlu0 %1641
        %v1643 = vsel %vm634, %v1455, 0.0
        %1644 = vadd.xlane.f32.xlu0 %v1643
        %v1645 = vpop.xlane.xlu0 %1644
        %v1646 = vsel %vm634, %v1457, 0.0
        %1647 = vadd.xlane.f32.xlu0 %v1646
        %v1648 = vpop.xlane.xlu0 %1647
        %v1649 = vsel %vm634, %v1459, 0.0
        %1650 = vadd.xlane.f32.xlu0 %v1649
        %v1651 = vpop.xlane.xlu0 %1650
        %v1652 = vrcp.pop %v1462
        %v1653 = vmul.f32 %v1333, %v1652
        %v1654 = vrcp.pop %v1465
        %v1655 = vmul.f32 %v1335, %v1654
        %v1656 = vrcp.pop %v1468
        %v1657 = vmul.f32 %v1337, %v1656
        %v1658 = vrcp.pop %v1471
        %v1659 = vmul.f32 %v1339, %v1658
        %v1660 = vrcp.pop %v1474
        %v1661 = vmul.f32 %v1341, %v1660
        %v1662 = vrcp.pop %v1477
        %v1663 = vmul.f32 %v1343, %v1662
        %v1664 = vrcp.pop %v1480
        %v1665 = vmul.f32 %v1345, %v1664
        %v1666 = vrcp.pop %v1483
        %v1667 = vmul.f32 %v1347, %v1666
        %v1668 = vrcp.pop %v1486
        %v1669 = vmul.f32 %v1349, %v1668
        %v1670 = vrcp.pop %v1489
        %v1671 = vmul.f32 %v1351, %v1670
        %v1672 = vrcp.pop %v1492
        %v1673 = vmul.f32 %v1353, %v1672
        %v1674 = vrcp.pop %v1495
        %v1675 = vmul.f32 %v1355, %v1674
        %v1676 = vrcp.pop %v1498
        %v1677 = vmul.f32 %v1357, %v1676
        %v1678 = vrcp.pop %v1501
        %v1679 = vmul.f32 %v1359, %v1678
        %v1680 = vrcp.pop %v1504
        %v1681 = vmul.f32 %v1361, %v1680
        %v1682 = vrcp.pop %v1507
        %v1683 = vmul.f32 %v1363, %v1682
        %v1684 = vrcp.pop %v1510
        %v1685 = vmul.f32 %v1365, %v1684
        %v1686 = vrcp.pop %v1513
        %v1687 = vmul.f32 %v1367, %v1686
        %v1688 = vrcp.pop %v1516
        %v1689 = vmul.f32 %v1369, %v1688
        %v1690 = vrcp.pop %v1519
        %v1691 = vmul.f32 %v1371, %v1690
        %v1692 = vrcp.pop %v1522
        %v1693 = vmul.f32 %v1373, %v1692
        %v1694 = vrcp.pop %v1525
        %v1695 = vmul.f32 %v1375, %v1694
        %v1696 = vrcp.pop %v1528
        %v1697 = vmul.f32 %v1377, %v1696
        %v1698 = vrcp.pop %v1531
        %v1699 = vmul.f32 %v1379, %v1698
        %v1700 = vrcp.pop %v1534
        %v1701 = vmul.f32 %v1381, %v1700
        %v1702 = vrcp.pop %v1537
        %v1703 = vmul.f32 %v1383, %v1702
        %v1704 = vrcp.pop %v1540
        %v1705 = vmul.f32 %v1385, %v1704
        %v1706 = vrcp.pop %v1543
        %v1707 = vmul.f32 %v1387, %v1706
        %v1708 = vrcp.pop %v1546
        %v1709 = vmul.f32 %v1389, %v1708
        %v1710 = vrcp.pop %v1549
        %v1711 = vmul.f32 %v1391, %v1710
        %v1712 = vrcp.pop %v1552
        %v1713 = vmul.f32 %v1393, %v1712
        %v1714 = vrcp.pop %v1555
        %v1715 = vmul.f32 %v1395, %v1714
        %v1716 = vrcp.pop %v1558
        %v1717 = vmul.f32 %v1397, %v1716
        %v1718 = vrcp.pop %v1561
        %v1719 = vmul.f32 %v1399, %v1718
        %v1720 = vrcp.pop %v1564
        %v1721 = vmul.f32 %v1401, %v1720
        %v1722 = vrcp.pop %v1567
        %v1723 = vmul.f32 %v1403, %v1722
        %v1724 = vrcp.pop %v1570
        %v1725 = vmul.f32 %v1405, %v1724
        %v1726 = vrcp.pop %v1573
        %v1727 = vmul.f32 %v1407, %v1726
        %v1728 = vrcp.pop %v1576
        %v1729 = vmul.f32 %v1409, %v1728
        %v1730 = vrcp.pop %v1579
        %v1731 = vmul.f32 %v1411, %v1730
        %v1732 = vrcp.pop %v1582
        %v1733 = vmul.f32 %v1413, %v1732
        %v1734 = vrcp.pop %v1585
        %v1735 = vmul.f32 %v1415, %v1734
        %v1736 = vrcp.pop %v1588
        %v1737 = vmul.f32 %v1417, %v1736
        %v1738 = vrcp.pop %v1591
        %v1739 = vmul.f32 %v1419, %v1738
        %v1740 = vrcp.pop %v1594
        %v1741 = vmul.f32 %v1421, %v1740
        %v1742 = vrcp.pop %v1597
        %v1743 = vmul.f32 %v1423, %v1742
        %v1744 = vrcp.pop %v1600
        %v1745 = vmul.f32 %v1425, %v1744
        %v1746 = vrcp.pop %v1603
        %v1747 = vmul.f32 %v1427, %v1746
        %v1748 = vrcp.pop %v1606
        %v1749 = vmul.f32 %v1429, %v1748
        %v1750 = vrcp.pop %v1609
        %v1751 = vmul.f32 %v1431, %v1750
        %v1752 = vrcp.pop %v1612
        %v1753 = vmul.f32 %v1433, %v1752
        %v1754 = vrcp.pop %v1615
        %v1755 = vmul.f32 %v1435, %v1754
        %v1756 = vrcp.pop %v1618
        %v1757 = vmul.f32 %v1437, %v1756
        %v1758 = vrcp.pop %v1621
        %v1759 = vmul.f32 %v1439, %v1758
        %v1760 = vrcp.pop %v1624
        %v1761 = vmul.f32 %v1441, %v1760
        %v1762 = vrcp.pop %v1627
        %v1763 = vmul.f32 %v1443, %v1762
        %v1764 = vrcp.pop %v1630
        %v1765 = vmul.f32 %v1445, %v1764
        %v1766 = vrcp.pop %v1633
        %v1767 = vmul.f32 %v1447, %v1766
        %v1768 = vrcp.pop %v1636
        %v1769 = vmul.f32 %v1449, %v1768
        %v1770 = vrcp.pop %v1639
        %v1771 = vmul.f32 %v1451, %v1770
        %v1772 = vrcp.pop %v1642
        %v1773 = vmul.f32 %v1453, %v1772
        %v1774 = vrcp.pop %v1645
        %v1775 = vmul.f32 %v1455, %v1774
        %v1776 = vrcp.pop %v1648
        %v1777 = vmul.f32 %v1457, %v1776
        %v1778 = vrcp.pop %v1651
        %v1779 = vmul.f32 %v1459, %v1778
        %v1780 = vpack.c.bf16 %v1655, %v1653
        %v1781 = vpack.c.bf16 %v1659, %v1657
        %v1782 = vpack.c.bf16 %v1663, %v1661
        %v1783 = vpack.c.bf16 %v1667, %v1665
        %v1784 = vpack.c.bf16 %v1671, %v1669
        %v1785 = vpack.c.bf16 %v1675, %v1673
        %v1786 = vpack.c.bf16 %v1679, %v1677
        %v1787 = vpack.c.bf16 %v1683, %v1681
        %v1788 = vpack.c.bf16 %v1687, %v1685
        %v1789 = vpack.c.bf16 %v1691, %v1689
        %v1790 = vpack.c.bf16 %v1695, %v1693
        %v1791 = vpack.c.bf16 %v1699, %v1697
        %v1792 = vpack.c.bf16 %v1703, %v1701
        %v1793 = vpack.c.bf16 %v1707, %v1705
        %v1794 = vpack.c.bf16 %v1711, %v1709
        %v1795 = vpack.c.bf16 %v1715, %v1713
        %v1796 = vpack.c.bf16 %v1719, %v1717
        %v1797 = vpack.c.bf16 %v1723, %v1721
        %v1798 = vpack.c.bf16 %v1727, %v1725
        %v1799 = vpack.c.bf16 %v1731, %v1729
        %v1800 = vpack.c.bf16 %v1735, %v1733
        %v1801 = vpack.c.bf16 %v1739, %v1737
        %v1802 = vpack.c.bf16 %v1743, %v1741
        %v1803 = vpack.c.bf16 %v1747, %v1745
        %v1804 = vpack.c.bf16 %v1751, %v1749
        %v1805 = vpack.c.bf16 %v1755, %v1753
        %v1806 = vpack.c.bf16 %v1759, %v1757
        %v1807 = vpack.c.bf16 %v1763, %v1761
        %v1808 = vpack.c.bf16 %v1767, %v1765
        %v1809 = vpack.c.bf16 %v1771, %v1769
        %v1810 = vpack.c.bf16 %v1775, %v1773
        %v1811 = vpack.c.bf16 %v1779, %v1777
        %v1812 = vld [vmem:[#allocation9] sm:$0xf]
        %v1813 = vld [vmem:[#allocation9 + $0x4] sm:$0xf]
        %v1814 = vld [vmem:[#allocation9 + $0x8] sm:$0xf]
        %v1815 = vld [vmem:[#allocation9 + $0xc] sm:$0xf]
        %v1816 = vld [vmem:[#allocation10] sm:$0x1]
        %v1818 = vlaneseq
        %v1819 = vshrl.u32 %v1818, 7
        %v1820 = vsub.s32 0, %v1819
        %v1821 = vrot.slane %v1816, %v1820
        %v1827 = vunpack.c.l.b16 %v1812
        %v1828 = vunpack.c.l.b16 %v1813
        %v1829 = vunpack.c.l.b16 %v1814
        %v1830 = vunpack.c.l.b16 %v1815
        %v1831 = vpack.c.b16 %v1828, %v1827
        %v1832 = vpack.c.b16 %v1830, %v1829
        %v1836 = vsel %vm634, %v1780, 0
        %v1839 = vsel %vm634, %v1781, 0
        %v1842 = vsel %vm634, %v1782, 0
        %v1845 = vsel %vm634, %v1783, 0
        %v1848 = vsel %vm634, %v1784, 0
        %v1851 = vsel %vm634, %v1785, 0
        %v1854 = vsel %vm634, %v1786, 0
        %v1857 = vsel %vm634, %v1787, 0
        %v1860 = vsel %vm634, %v1788, 0
        %v1863 = vsel %vm634, %v1789, 0
        %v1866 = vsel %vm634, %v1790, 0
        %v1869 = vsel %vm634, %v1791, 0
        %v1872 = vsel %vm634, %v1792, 0
        %v1875 = vsel %vm634, %v1793, 0
        %v1878 = vsel %vm634, %v1794, 0
        %v1881 = vsel %vm634, %v1795, 0
        %v1884 = vsel %vm634, %v1796, 0
        %v1887 = vsel %vm634, %v1797, 0
        %v1890 = vsel %vm634, %v1798, 0
        %v1893 = vsel %vm634, %v1799, 0
        %v1896 = vsel %vm634, %v1800, 0
        %v1899 = vsel %vm634, %v1801, 0
        %v1902 = vsel %vm634, %v1802, 0
        %v1905 = vsel %vm634, %v1803, 0
        %v1908 = vsel %vm634, %v1804, 0
        %v1911 = vsel %vm634, %v1805, 0
        %v1914 = vsel %vm634, %v1806, 0
        %v1917 = vsel %vm634, %v1807, 0
        %v1920 = vsel %vm634, %v1808, 0
        %v1923 = vsel %vm634, %v1809, 0
        %v1926 = vsel %vm634, %v1810, 0
        %v1929 = vsel %vm634, %v1811, 0
        %1931 = vmatprep.subr.bf16.mxu0 0
        %1932 = vmatpush1.bf16.msra.mxu0 %v1831
        %1933 = vmatprep.subr.bf16.mxu0 0
        %1934 = vmatpush1.bf16.msra.mxu0 %v1832
        %1935 = vmatprep.subr.bf16.mxu0 0
        %1936 = vmatpush1.bf16.msra.mxu0 0
        %1937 = vmatprep.subr.bf16.mxu0 0
        %1938 = vmatpush1.bf16.msra.mxu0 0
        %1939 = vmatprep.subr.bf16.mxu0 0
        %1940 = vmatpush1.bf16.msra.mxu0 0
        %1941 = vmatprep.subr.bf16.mxu0 0
        %1942 = vmatpush1.bf16.msra.mxu0 0
        %1943 = vmatprep.subr.bf16.mxu0 0
        %1944 = vmatpush1.bf16.msra.mxu0 0
        %1945 = vmatprep.subr.bf16.mxu0 0
        %1946 = vmatpush1.bf16.msra.mxu0 0
        %1947 = vmatprep.subr.bf16.mxu0 0
        %1948 = vmatpush1.bf16.msra.mxu0 0
        %1949 = vmatprep.subr.bf16.mxu0 0
        %1950 = vmatpush1.bf16.msra.mxu0 0
        %1951 = vmatprep.subr.bf16.mxu0 0
        %1952 = vmatpush1.bf16.msra.mxu0 0
        %1953 = vmatprep.subr.bf16.mxu0 0
        %1954 = vmatpush1.bf16.msra.mxu0 0
        %1955 = vmatprep.subr.bf16.mxu0 0
        %1956 = vmatpush1.bf16.msra.mxu0 0
        %1957 = vmatprep.subr.bf16.mxu0 0
        %1958 = vmatpush1.bf16.msra.mxu0 0
        %1959 = vmatprep.subr.bf16.mxu0 0
        %1960 = vmatpush1.bf16.msra.mxu0 0
        %1961 = vmatprep.subr.bf16.mxu0 0
        %1962 = vmatpush1.bf16.msra.mxu0 0
        %1963 = vmatprep.mubr.bf16.mxu0 0
        %1964 = vmatmul.mubr.bf16.gmra.mrb[0].mxu0 %v1836
        %v1965 = vpop.f32.mrb[0].mxu0
        %v1966 = vadd.f32 %v1821, %v1965
        %v1967 = vpop.f32.mrb[0].mxu0
        %v1968 = vpop.f32.mrb[0].mxu0
        %v1969 = vadd.f32 %v1821, %v1968
        %v1970 = vpop.f32.mrb[0].mxu0
        %1971 = vmatprep.mubr.bf16.mxu0 0
        %1972 = vmatmul.mubr.bf16.gmra.mrb[0].mxu0 %v1839
        %v1973 = vpop.f32.mrb[0].mxu0
        %v1974 = vadd.f32 %v1821, %v1973
        %v1975 = vpop.f32.mrb[0].mxu0
        %v1976 = vpop.f32.mrb[0].mxu0
        %v1977 = vadd.f32 %v1821, %v1976
        %v1978 = vpop.f32.mrb[0].mxu0
        %1979 = vmatprep.mubr.bf16.mxu0 0
        %1980 = vmatmul.mubr.bf16.gmra.mrb[0].mxu0 %v1842
        %v1981 = vpop.f32.mrb[0].mxu0
        %v1982 = vadd.f32 %v1821, %v1981
        %v1983 = vpop.f32.mrb[0].mxu0
        %v1984 = vpop.f32.mrb[0].mxu0
        %v1985 = vadd.f32 %v1821, %v1984
        %v1986 = vpop.f32.mrb[0].mxu0
        %1987 = vmatprep.mubr.bf16.mxu0 0
        %1988 = vmatmul.mubr.bf16.gmra.mrb[0].mxu0 %v1845
        %v1989 = vpop.f32.mrb[0].mxu0
        %v1990 = vadd.f32 %v1821, %v1989
        %v1991 = vpop.f32.mrb[0].mxu0
        %v1992 = vpop.f32.mrb[0].mxu0
        %v1993 = vadd.f32 %v1821, %v1992
        %v1994 = vpop.f32.mrb[0].mxu0
        %1995 = vmatprep.mubr.bf16.mxu0 0
        %1996 = vmatmul.mubr.bf16.gmra.mrb[0].mxu0 %v1848
        %v1997 = vpop.f32.mrb[0].mxu0
        %v1998 = vadd.f32 %v1821, %v1997
        %v1999 = vpop.f32.mrb[0].mxu0
        %v2000 = vpop.f32.mrb[0].mxu0
        %v2001 = vadd.f32 %v1821, %v2000
        %v2002 = vpop.f32.mrb[0].mxu0
        %2003 = vmatprep.mubr.bf16.mxu0 0
        %2004 = vmatmul.mubr.bf16.gmra.mrb[0].mxu0 %v1851
        %v2005 = vpop.f32.mrb[0].mxu0
        %v2006 = vadd.f32 %v1821, %v2005
        %v2007 = vpop.f32.mrb[0].mxu0
        %v2008 = vpop.f32.mrb[0].mxu0
        %v2009 = vadd.f32 %v1821, %v2008
        %v2010 = vpop.f32.mrb[0].mxu0
        %2011 = vmatprep.mubr.bf16.mxu0 0
        %2012 = vmatmul.mubr.bf16.gmra.mrb[0].mxu0 %v1854
        %v2013 = vpop.f32.mrb[0].mxu0
        %v2014 = vadd.f32 %v1821, %v2013
        %v2015 = vpop.f32.mrb[0].mxu0
        %v2016 = vpop.f32.mrb[0].mxu0
        %v2017 = vadd.f32 %v1821, %v2016
        %v2018 = vpop.f32.mrb[0].mxu0
        %2019 = vmatprep.mubr.bf16.mxu0 0
        %2020 = vmatmul.mubr.bf16.gmra.mrb[0].mxu0 %v1857
        %v2021 = vpop.f32.mrb[0].mxu0
        %v2022 = vadd.f32 %v1821, %v2021
        %v2023 = vpop.f32.mrb[0].mxu0
        %v2024 = vpop.f32.mrb[0].mxu0
        %v2025 = vadd.f32 %v1821, %v2024
        %v2026 = vpop.f32.mrb[0].mxu0
        %2027 = vmatprep.mubr.bf16.mxu0 0
        %2028 = vmatmul.mubr.bf16.gmra.mrb[0].mxu0 %v1860
        %v2029 = vpop.f32.mrb[0].mxu0
        %v2030 = vadd.f32 %v1821, %v2029
        %v2031 = vpop.f32.mrb[0].mxu0
        %v2032 = vpop.f32.mrb[0].mxu0
        %v2033 = vadd.f32 %v1821, %v2032
        %v2034 = vpop.f32.mrb[0].mxu0
        %2035 = vmatprep.mubr.bf16.mxu0 0
        %2036 = vmatmul.mubr.bf16.gmra.mrb[0].mxu0 %v1863
        %v2037 = vpop.f32.mrb[0].mxu0
        %v2038 = vadd.f32 %v1821, %v2037
        %v2039 = vpop.f32.mrb[0].mxu0
        %v2040 = vpop.f32.mrb[0].mxu0
        %v2041 = vadd.f32 %v1821, %v2040
        %v2042 = vpop.f32.mrb[0].mxu0
        %2043 = vmatprep.mubr.bf16.mxu0 0
        %2044 = vmatmul.mubr.bf16.gmra.mrb[0].mxu0 %v1866
        %v2045 = vpop.f32.mrb[0].mxu0
        %v2046 = vadd.f32 %v1821, %v2045
        %v2047 = vpop.f32.mrb[0].mxu0
        %v2048 = vpop.f32.mrb[0].mxu0
        %v2049 = vadd.f32 %v1821, %v2048
        %v2050 = vpop.f32.mrb[0].mxu0
        %2051 = vmatprep.mubr.bf16.mxu0 0
        %2052 = vmatmul.mubr.bf16.gmra.mrb[0].mxu0 %v1869
        %v2053 = vpop.f32.mrb[0].mxu0
        %v2054 = vadd.f32 %v1821, %v2053
        %v2055 = vpop.f32.mrb[0].mxu0
        %v2056 = vpop.f32.mrb[0].mxu0
        %v2057 = vadd.f32 %v1821, %v2056
        %v2058 = vpop.f32.mrb[0].mxu0
        %2059 = vmatprep.mubr.bf16.mxu0 0
        %2060 = vmatmul.mubr.bf16.gmra.mrb[0].mxu0 %v1872
        %v2061 = vpop.f32.mrb[0].mxu0
        %v2062 = vadd.f32 %v1821, %v2061
        %v2063 = vpop.f32.mrb[0].mxu0
        %v2064 = vpop.f32.mrb[0].mxu0
        %v2065 = vadd.f32 %v1821, %v2064
        %v2066 = vpop.f32.mrb[0].mxu0
        %2067 = vmatprep.mubr.bf16.mxu0 0
        %2068 = vmatmul.mubr.bf16.gmra.mrb[0].mxu0 %v1875
        %v2069 = vpop.f32.mrb[0].mxu0
        %v2070 = vadd.f32 %v1821, %v2069
        %v2071 = vpop.f32.mrb[0].mxu0
        %v2072 = vpop.f32.mrb[0].mxu0
        %v2073 = vadd.f32 %v1821, %v2072
        %v2074 = vpop.f32.mrb[0].mxu0
        %2075 = vmatprep.mubr.bf16.mxu0 0
        %2076 = vmatmul.mubr.bf16.gmra.mrb[0].mxu0 %v1878
        %v2077 = vpop.f32.mrb[0].mxu0
        %v2078 = vadd.f32 %v1821, %v2077
        %v2079 = vpop.f32.mrb[0].mxu0
        %v2080 = vpop.f32.mrb[0].mxu0
        %v2081 = vadd.f32 %v1821, %v2080
        %v2082 = vpop.f32.mrb[0].mxu0
        %2083 = vmatprep.mubr.bf16.mxu0 0
        %2084 = vmatmul.mubr.bf16.gmra.mrb[0].mxu0 %v1881
        %v2085 = vpop.f32.mrb[0].mxu0
        %v2086 = vadd.f32 %v1821, %v2085
        %v2087 = vpop.f32.mrb[0].mxu0
        %v2088 = vpop.f32.mrb[0].mxu0
        %v2089 = vadd.f32 %v1821, %v2088
        %v2090 = vpop.f32.mrb[0].mxu0
        %2091 = vmatprep.mubr.bf16.mxu0 0
        %2092 = vmatmul.mubr.bf16.gmra.mrb[0].mxu0 %v1884
        %v2093 = vpop.f32.mrb[0].mxu0
        %v2094 = vadd.f32 %v1821, %v2093
        %v2095 = vpop.f32.mrb[0].mxu0
        %v2096 = vpop.f32.mrb[0].mxu0
        %v2097 = vadd.f32 %v1821, %v2096
        %v2098 = vpop.f32.mrb[0].mxu0
        %2099 = vmatprep.mubr.bf16.mxu0 0
        %2100 = vmatmul.mubr.bf16.gmra.mrb[0].mxu0 %v1887
        %v2101 = vpop.f32.mrb[0].mxu0
        %v2102 = vadd.f32 %v1821, %v2101
        %v2103 = vpop.f32.mrb[0].mxu0
        %v2104 = vpop.f32.mrb[0].mxu0
        %v2105 = vadd.f32 %v1821, %v2104
        %v2106 = vpop.f32.mrb[0].mxu0
        %2107 = vmatprep.mubr.bf16.mxu0 0
        %2108 = vmatmul.mubr.bf16.gmra.mrb[0].mxu0 %v1890
        %v2109 = vpop.f32.mrb[0].mxu0
        %v2110 = vadd.f32 %v1821, %v2109
        %v2111 = vpop.f32.mrb[0].mxu0
        %v2112 = vpop.f32.mrb[0].mxu0
        %v2113 = vadd.f32 %v1821, %v2112
        %v2114 = vpop.f32.mrb[0].mxu0
        %2115 = vmatprep.mubr.bf16.mxu0 0
        %2116 = vmatmul.mubr.bf16.gmra.mrb[0].mxu0 %v1893
        %v2117 = vpop.f32.mrb[0].mxu0
        %v2118 = vadd.f32 %v1821, %v2117
        %v2119 = vpop.f32.mrb[0].mxu0
        %v2120 = vpop.f32.mrb[0].mxu0
        %v2121 = vadd.f32 %v1821, %v2120
        %v2122 = vpop.f32.mrb[0].mxu0
        %2123 = vmatprep.mubr.bf16.mxu0 0
        %2124 = vmatmul.mubr.bf16.gmra.mrb[0].mxu0 %v1896
        %v2125 = vpop.f32.mrb[0].mxu0
        %v2126 = vadd.f32 %v1821, %v2125
        %v2127 = vpop.f32.mrb[0].mxu0
        %v2128 = vpop.f32.mrb[0].mxu0
        %v2129 = vadd.f32 %v1821, %v2128
        %v2130 = vpop.f32.mrb[0].mxu0
        %2131 = vmatprep.mubr.bf16.mxu0 0
        %2132 = vmatmul.mubr.bf16.gmra.mrb[0].mxu0 %v1899
        %v2133 = vpop.f32.mrb[0].mxu0
        %v2134 = vadd.f32 %v1821, %v2133
        %v2135 = vpop.f32.mrb[0].mxu0
        %v2136 = vpop.f32.mrb[0].mxu0
        %v2137 = vadd.f32 %v1821, %v2136
        %v2138 = vpop.f32.mrb[0].mxu0
        %2139 = vmatprep.mubr.bf16.mxu0 0
        %2140 = vmatmul.mubr.bf16.gmra.mrb[0].mxu0 %v1902
        %v2141 = vpop.f32.mrb[0].mxu0
        %v2142 = vadd.f32 %v1821, %v2141
        %v2143 = vpop.f32.mrb[0].mxu0
        %v2144 = vpop.f32.mrb[0].mxu0
        %v2145 = vadd.f32 %v1821, %v2144
        %v2146 = vpop.f32.mrb[0].mxu0
        %2147 = vmatprep.mubr.bf16.mxu0 0
        %2148 = vmatmul.mubr.bf16.gmra.mrb[0].mxu0 %v1905
        %v2149 = vpop.f32.mrb[0].mxu0
        %v2150 = vadd.f32 %v1821, %v2149
        %v2151 = vpop.f32.mrb[0].mxu0
        %v2152 = vpop.f32.mrb[0].mxu0
        %v2153 = vadd.f32 %v1821, %v2152
        %v2154 = vpop.f32.mrb[0].mxu0
        %2155 = vmatprep.mubr.bf16.mxu0 0
        %2156 = vmatmul.mubr.bf16.gmra.mrb[0].mxu0 %v1908
        %v2157 = vpop.f32.mrb[0].mxu0
        %v2158 = vadd.f32 %v1821, %v2157
        %v2159 = vpop.f32.mrb[0].mxu0
        %v2160 = vpop.f32.mrb[0].mxu0
        %v2161 = vadd.f32 %v1821, %v2160
        %v2162 = vpop.f32.mrb[0].mxu0
        %2163 = vmatprep.mubr.bf16.mxu0 0
        %2164 = vmatmul.mubr.bf16.gmra.mrb[0].mxu0 %v1911
        %v2165 = vpop.f32.mrb[0].mxu0
        %v2166 = vadd.f32 %v1821, %v2165
        %v2167 = vpop.f32.mrb[0].mxu0
        %v2168 = vpop.f32.mrb[0].mxu0
        %v2169 = vadd.f32 %v1821, %v2168
        %v2170 = vpop.f32.mrb[0].mxu0
        %2171 = vmatprep.mubr.bf16.mxu0 0
        %2172 = vmatmul.mubr.bf16.gmra.mrb[0].mxu0 %v1914
        %v2173 = vpop.f32.mrb[0].mxu0
        %v2174 = vadd.f32 %v1821, %v2173
        %v2175 = vpop.f32.mrb[0].mxu0
        %v2176 = vpop.f32.mrb[0].mxu0
        %v2177 = vadd.f32 %v1821, %v2176
        %v2178 = vpop.f32.mrb[0].mxu0
        %2179 = vmatprep.mubr.bf16.mxu0 0
        %2180 = vmatmul.mubr.bf16.gmra.mrb[0].mxu0 %v1917
        %v2181 = vpop.f32.mrb[0].mxu0
        %v2182 = vadd.f32 %v1821, %v2181
        %v2183 = vpop.f32.mrb[0].mxu0
        %v2184 = vpop.f32.mrb[0].mxu0
        %v2185 = vadd.f32 %v1821, %v2184
        %v2186 = vpop.f32.mrb[0].mxu0
        %2187 = vmatprep.mubr.bf16.mxu0 0
        %2188 = vmatmul.mubr.bf16.gmra.mrb[0].mxu0 %v1920
        %v2189 = vpop.f32.mrb[0].mxu0
        %v2190 = vadd.f32 %v1821, %v2189
        %v2191 = vpop.f32.mrb[0].mxu0
        %v2192 = vpop.f32.mrb[0].mxu0
        %v2193 = vadd.f32 %v1821, %v2192
        %v2194 = vpop.f32.mrb[0].mxu0
        %2195 = vmatprep.mubr.bf16.mxu0 0
        %2196 = vmatmul.mubr.bf16.gmra.mrb[0].mxu0 %v1923
        %v2197 = vpop.f32.mrb[0].mxu0
        %v2198 = vadd.f32 %v1821, %v2197
        %v2199 = vpop.f32.mrb[0].mxu0
        %v2200 = vpop.f32.mrb[0].mxu0
        %v2201 = vadd.f32 %v1821, %v2200
        %v2202 = vpop.f32.mrb[0].mxu0
        %2203 = vmatprep.mubr.bf16.mxu0 0
        %2204 = vmatmul.mubr.bf16.gmra.mrb[0].mxu0 %v1926
        %v2205 = vpop.f32.mrb[0].mxu0
        %v2206 = vadd.f32 %v1821, %v2205
        %v2207 = vpop.f32.mrb[0].mxu0
        %v2208 = vpop.f32.mrb[0].mxu0
        %v2209 = vadd.f32 %v1821, %v2208
        %v2210 = vpop.f32.mrb[0].mxu0
        %2211 = vmatprep.mubr.bf16.mxu0 0
        %2212 = vmatmul.mubr.bf16.gmra.mrb[0].mxu0 %v1929
        %v2213 = vpop.f32.mrb[0].mxu0
        %v2214 = vadd.f32 %v1821, %v2213
        %v2215 = vpop.f32.mrb[0].mxu0
        %v2216 = vpop.f32.mrb[0].mxu0
        %v2217 = vadd.f32 %v1821, %v2216
        %v2218 = vpop.f32.mrb[0].mxu0
        %2219 = vdwg.mxu0
        %v2220 = vsel %vm634, %v1966, -inf
        %2221 = vmax.xlane.f32.xlu0 %v2220
        %v2222 = vpop.xlane.xlu0 %2221
        %v2223 = vsel %vm634, %v1969, -inf
        %2224 = vmax.xlane.f32.xlu0 %v2223
        %v2225 = vpop.xlane.xlu0 %2224
        %v2226 = vsel %vm634, %v1974, -inf
        %2227 = vmax.xlane.f32.xlu0 %v2226
        %v2228 = vpop.xlane.xlu0 %2227
        %v2229 = vsel %vm634, %v1977, -inf
        %2230 = vmax.xlane.f32.xlu0 %v2229
        %v2231 = vpop.xlane.xlu0 %2230
        %v2232 = vsel %vm634, %v1982, -inf
        %2233 = vmax.xlane.f32.xlu0 %v2232
        %v2234 = vpop.xlane.xlu0 %2233
        %v2235 = vsel %vm634, %v1985, -inf
        %2236 = vmax.xlane.f32.xlu0 %v2235
        %v2237 = vpop.xlane.xlu0 %2236
        %v2238 = vsel %vm634, %v1990, -inf
        %2239 = vmax.xlane.f32.xlu0 %v2238
        %v2240 = vpop.xlane.xlu0 %2239
        %v2241 = vsel %vm634, %v1993, -inf
        %2242 = vmax.xlane.f32.xlu0 %v2241
        %v2243 = vpop.xlane.xlu0 %2242
        %v2244 = vsel %vm634, %v1998, -inf
        %2245 = vmax.xlane.f32.xlu0 %v2244
        %v2246 = vpop.xlane.xlu0 %2245
        %v2247 = vsel %vm634, %v2001, -inf
        %2248 = vmax.xlane.f32.xlu0 %v2247
        %v2249 = vpop.xlane.xlu0 %2248
        %v2250 = vsel %vm634, %v2006, -inf
        %2251 = vmax.xlane.f32.xlu0 %v2250
        %v2252 = vpop.xlane.xlu0 %2251
        %v2253 = vsel %vm634, %v2009, -inf
        %2254 = vmax.xlane.f32.xlu0 %v2253
        %v2255 = vpop.xlane.xlu0 %2254
        %v2256 = vsel %vm634, %v2014, -inf
        %2257 = vmax.xlane.f32.xlu0 %v2256
        %v2258 = vpop.xlane.xlu0 %2257
        %v2259 = vsel %vm634, %v2017, -inf
        %2260 = vmax.xlane.f32.xlu0 %v2259
        %v2261 = vpop.xlane.xlu0 %2260
        %v2262 = vsel %vm634, %v2022, -inf
        %2263 = vmax.xlane.f32.xlu0 %v2262
        %v2264 = vpop.xlane.xlu0 %2263
        %v2265 = vsel %vm634, %v2025, -inf
        %2266 = vmax.xlane.f32.xlu0 %v2265
        %v2267 = vpop.xlane.xlu0 %2266
        %v2268 = vsel %vm634, %v2030, -inf
        %2269 = vmax.xlane.f32.xlu0 %v2268
        %v2270 = vpop.xlane.xlu0 %2269
        %v2271 = vsel %vm634, %v2033, -inf
        %2272 = vmax.xlane.f32.xlu0 %v2271
        %v2273 = vpop.xlane.xlu0 %2272
        %v2274 = vsel %vm634, %v2038, -inf
        %2275 = vmax.xlane.f32.xlu0 %v2274
        %v2276 = vpop.xlane.xlu0 %2275
        %v2277 = vsel %vm634, %v2041, -inf
        %2278 = vmax.xlane.f32.xlu0 %v2277
        %v2279 = vpop.xlane.xlu0 %2278
        %v2280 = vsel %vm634, %v2046, -inf
        %2281 = vmax.xlane.f32.xlu0 %v2280
        %v2282 = vpop.xlane.xlu0 %2281
        %v2283 = vsel %vm634, %v2049, -inf
        %2284 = vmax.xlane.f32.xlu0 %v2283
        %v2285 = vpop.xlane.xlu0 %2284
        %v2286 = vsel %vm634, %v2054, -inf
        %2287 = vmax.xlane.f32.xlu0 %v2286
        %v2288 = vpop.xlane.xlu0 %2287
        %v2289 = vsel %vm634, %v2057, -inf
        %2290 = vmax.xlane.f32.xlu0 %v2289
        %v2291 = vpop.xlane.xlu0 %2290
        %v2292 = vsel %vm634, %v2062, -inf
        %2293 = vmax.xlane.f32.xlu0 %v2292
        %v2294 = vpop.xlane.xlu0 %2293
        %v2295 = vsel %vm634, %v2065, -inf
        %2296 = vmax.xlane.f32.xlu0 %v2295
        %v2297 = vpop.xlane.xlu0 %2296
        %v2298 = vsel %vm634, %v2070, -inf
        %2299 = vmax.xlane.f32.xlu0 %v2298
        %v2300 = vpop.xlane.xlu0 %2299
        %v2301 = vsel %vm634, %v2073, -inf
        %2302 = vmax.xlane.f32.xlu0 %v2301
        %v2303 = vpop.xlane.xlu0 %2302
        %v2304 = vsel %vm634, %v2078, -inf
        %2305 = vmax.xlane.f32.xlu0 %v2304
        %v2306 = vpop.xlane.xlu0 %2305
        %v2307 = vsel %vm634, %v2081, -inf
        %2308 = vmax.xlane.f32.xlu0 %v2307
        %v2309 = vpop.xlane.xlu0 %2308
        %v2310 = vsel %vm634, %v2086, -inf
        %2311 = vmax.xlane.f32.xlu0 %v2310
        %v2312 = vpop.xlane.xlu0 %2311
        %v2313 = vsel %vm634, %v2089, -inf
        %2314 = vmax.xlane.f32.xlu0 %v2313
        %v2315 = vpop.xlane.xlu0 %2314
        %v2316 = vsel %vm634, %v2094, -inf
        %2317 = vmax.xlane.f32.xlu0 %v2316
        %v2318 = vpop.xlane.xlu0 %2317
        %v2319 = vsel %vm634, %v2097, -inf
        %2320 = vmax.xlane.f32.xlu0 %v2319
        %v2321 = vpop.xlane.xlu0 %2320
        %v2322 = vsel %vm634, %v2102, -inf
        %2323 = vmax.xlane.f32.xlu0 %v2322
        %v2324 = vpop.xlane.xlu0 %2323
        %v2325 = vsel %vm634, %v2105, -inf
        %2326 = vmax.xlane.f32.xlu0 %v2325
        %v2327 = vpop.xlane.xlu0 %2326
        %v2328 = vsel %vm634, %v2110, -inf
        %2329 = vmax.xlane.f32.xlu0 %v2328
        %v2330 = vpop.xlane.xlu0 %2329
        %v2331 = vsel %vm634, %v2113, -inf
        %2332 = vmax.xlane.f32.xlu0 %v2331
        %v2333 = vpop.xlane.xlu0 %2332
        %v2334 = vsel %vm634, %v2118, -inf
        %2335 = vmax.xlane.f32.xlu0 %v2334
        %v2336 = vpop.xlane.xlu0 %2335
        %v2337 = vsel %vm634, %v2121, -inf
        %2338 = vmax.xlane.f32.xlu0 %v2337
        %v2339 = vpop.xlane.xlu0 %2338
        %v2340 = vsel %vm634, %v2126, -inf
        %2341 = vmax.xlane.f32.xlu0 %v2340
        %v2342 = vpop.xlane.xlu0 %2341
        %v2343 = vsel %vm634, %v2129, -inf
        %2344 = vmax.xlane.f32.xlu0 %v2343
        %v2345 = vpop.xlane.xlu0 %2344
        %v2346 = vsel %vm634, %v2134, -inf
        %2347 = vmax.xlane.f32.xlu0 %v2346
        %v2348 = vpop.xlane.xlu0 %2347
        %v2349 = vsel %vm634, %v2137, -inf
        %2350 = vmax.xlane.f32.xlu0 %v2349
        %v2351 = vpop.xlane.xlu0 %2350
        %v2352 = vsel %vm634, %v2142, -inf
        %2353 = vmax.xlane.f32.xlu0 %v2352
        %v2354 = vpop.xlane.xlu0 %2353
        %v2355 = vsel %vm634, %v2145, -inf
        %2356 = vmax.xlane.f32.xlu0 %v2355
        %v2357 = vpop.xlane.xlu0 %2356
        %v2358 = vsel %vm634, %v2150, -inf
        %2359 = vmax.xlane.f32.xlu0 %v2358
        %v2360 = vpop.xlane.xlu0 %2359
        %v2361 = vsel %vm634, %v2153, -inf
        %2362 = vmax.xlane.f32.xlu0 %v2361
        %v2363 = vpop.xlane.xlu0 %2362
        %v2364 = vsel %vm634, %v2158, -inf
        %2365 = vmax.xlane.f32.xlu0 %v2364
        %v2366 = vpop.xlane.xlu0 %2365
        %v2367 = vsel %vm634, %v2161, -inf
        %2368 = vmax.xlane.f32.xlu0 %v2367
        %v2369 = vpop.xlane.xlu0 %2368
        %v2370 = vsel %vm634, %v2166, -inf
        %2371 = vmax.xlane.f32.xlu0 %v2370
        %v2372 = vpop.xlane.xlu0 %2371
        %v2373 = vsel %vm634, %v2169, -inf
        %2374 = vmax.xlane.f32.xlu0 %v2373
        %v2375 = vpop.xlane.xlu0 %2374
        %v2376 = vsel %vm634, %v2174, -inf
        %2377 = vmax.xlane.f32.xlu0 %v2376
        %v2378 = vpop.xlane.xlu0 %2377
        %v2379 = vsel %vm634, %v2177, -inf
        %2380 = vmax.xlane.f32.xlu0 %v2379
        %v2381 = vpop.xlane.xlu0 %2380
        %v2382 = vsel %vm634, %v2182, -inf
        %2383 = vmax.xlane.f32.xlu0 %v2382
        %v2384 = vpop.xlane.xlu0 %2383
        %v2385 = vsel %vm634, %v2185, -inf
        %2386 = vmax.xlane.f32.xlu0 %v2385
        %v2387 = vpop.xlane.xlu0 %2386
        %v2388 = vsel %vm634, %v2190, -inf
        %2389 = vmax.xlane.f32.xlu0 %v2388
        %v2390 = vpop.xlane.xlu0 %2389
        %v2391 = vsel %vm634, %v2193, -inf
        %2392 = vmax.xlane.f32.xlu0 %v2391
        %v2393 = vpop.xlane.xlu0 %2392
        %v2394 = vsel %vm634, %v2198, -inf
        %2395 = vmax.xlane.f32.xlu0 %v2394
        %v2396 = vpop.xlane.xlu0 %2395
        %v2397 = vsel %vm634, %v2201, -inf
        %2398 = vmax.xlane.f32.xlu0 %v2397
        %v2399 = vpop.xlane.xlu0 %2398
        %v2400 = vsel %vm634, %v2206, -inf
        %2401 = vmax.xlane.f32.xlu0 %v2400
        %v2402 = vpop.xlane.xlu0 %2401
        %v2403 = vsel %vm634, %v2209, -inf
        %2404 = vmax.xlane.f32.xlu0 %v2403
        %v2405 = vpop.xlane.xlu0 %2404
        %v2406 = vsel %vm634, %v2214, -inf
        %2407 = vmax.xlane.f32.xlu0 %v2406
        %v2408 = vpop.xlane.xlu0 %2407
        %v2409 = vsel %vm634, %v2217, -inf
        %2410 = vmax.xlane.f32.xlu0 %v2409
        %v2411 = vpop.xlane.xlu0 %2410
        %v2412 = vsub.f32 %v1966, %v2222
        %v2413 = vsub.f32 %v1969, %v2225
        %v2414 = vsub.f32 %v1974, %v2228
        %v2415 = vsub.f32 %v1977, %v2231
        %v2416 = vsub.f32 %v1982, %v2234
        %v2417 = vsub.f32 %v1985, %v2237
        %v2418 = vsub.f32 %v1990, %v2240
        %v2419 = vsub.f32 %v1993, %v2243
        %v2420 = vsub.f32 %v1998, %v2246
        %v2421 = vsub.f32 %v2001, %v2249
        %v2422 = vsub.f32 %v2006, %v2252
        %v2423 = vsub.f32 %v2009, %v2255
        %v2424 = vsub.f32 %v2014, %v2258
        %v2425 = vsub.f32 %v2017, %v2261
        %v2426 = vsub.f32 %v2022, %v2264
        %v2427 = vsub.f32 %v2025, %v2267
        %v2428 = vsub.f32 %v2030, %v2270
        %v2429 = vsub.f32 %v2033, %v2273
        %v2430 = vsub.f32 %v2038, %v2276
        %v2431 = vsub.f32 %v2041, %v2279
        %v2432 = vsub.f32 %v2046, %v2282
        %v2433 = vsub.f32 %v2049, %v2285
        %v2434 = vsub.f32 %v2054, %v2288
        %v2435 = vsub.f32 %v2057, %v2291
        %v2436 = vsub.f32 %v2062, %v2294
        %v2437 = vsub.f32 %v2065, %v2297
        %v2438 = vsub.f32 %v2070, %v2300
        %v2439 = vsub.f32 %v2073, %v2303
        %v2440 = vsub.f32 %v2078, %v2306
        %v2441 = vsub.f32 %v2081, %v2309
        %v2442 = vsub.f32 %v2086, %v2312
        %v2443 = vsub.f32 %v2089, %v2315
        %v2444 = vsub.f32 %v2094, %v2318
        %v2445 = vsub.f32 %v2097, %v2321
        %v2446 = vsub.f32 %v2102, %v2324
        %v2447 = vsub.f32 %v2105, %v2327
        %v2448 = vsub.f32 %v2110, %v2330
        %v2449 = vsub.f32 %v2113, %v2333
        %v2450 = vsub.f32 %v2118, %v2336
        %v2451 = vsub.f32 %v2121, %v2339
        %v2452 = vsub.f32 %v2126, %v2342
        %v2453 = vsub.f32 %v2129, %v2345
        %v2454 = vsub.f32 %v2134, %v2348
        %v2455 = vsub.f32 %v2137, %v2351
        %v2456 = vsub.f32 %v2142, %v2354
        %v2457 = vsub.f32 %v2145, %v2357
        %v2458 = vsub.f32 %v2150, %v2360
        %v2459 = vsub.f32 %v2153, %v2363
        %v2460 = vsub.f32 %v2158, %v2366
        %v2461 = vsub.f32 %v2161, %v2369
        %v2462 = vsub.f32 %v2166, %v2372
        %v2463 = vsub.f32 %v2169, %v2375
        %v2464 = vsub.f32 %v2174, %v2378
        %v2465 = vsub.f32 %v2177, %v2381
        %v2466 = vsub.f32 %v2182, %v2384
        %v2467 = vsub.f32 %v2185, %v2387
        %v2468 = vsub.f32 %v2190, %v2390
        %v2469 = vsub.f32 %v2193, %v2393
        %v2470 = vsub.f32 %v2198, %v2396
        %v2471 = vsub.f32 %v2201, %v2399
        %v2472 = vsub.f32 %v2206, %v2402
        %v2473 = vsub.f32 %v2209, %v2405
        %v2474 = vsub.f32 %v2214, %v2408
        %v2475 = vsub.f32 %v2217, %v2411
        %v2476 = vmul.f32 %v2412, 1.442695
        %v2477 = vpow.pop %v2476
        %v2478 = vmul.f32 %v2413, 1.442695
        %v2479 = vpow.pop %v2478
        %v2480 = vmul.f32 %v2414, 1.442695
        %v2481 = vpow.pop %v2480
        %v2482 = vmul.f32 %v2415, 1.442695
        %v2483 = vpow.pop %v2482
        %v2484 = vmul.f32 %v2416, 1.442695
        %v2485 = vpow.pop %v2484
        %v2486 = vmul.f32 %v2417, 1.442695
        %v2487 = vpow.pop %v2486
        %v2488 = vmul.f32 %v2418, 1.442695
        %v2489 = vpow.pop %v2488
        %v2490 = vmul.f32 %v2419, 1.442695
        %v2491 = vpow.pop %v2490
        %v2492 = vmul.f32 %v2420, 1.442695
        %v2493 = vpow.pop %v2492
        %v2494 = vmul.f32 %v2421, 1.442695
        %v2495 = vpow.pop %v2494
        %v2496 = vmul.f32 %v2422, 1.442695
        %v2497 = vpow.pop %v2496
        %v2498 = vmul.f32 %v2423, 1.442695
        %v2499 = vpow.pop %v2498
        %v2500 = vmul.f32 %v2424, 1.442695
        %v2501 = vpow.pop %v2500
        %v2502 = vmul.f32 %v2425, 1.442695
        %v2503 = vpow.pop %v2502
        %v2504 = vmul.f32 %v2426, 1.442695
        %v2505 = vpow.pop %v2504
        %v2506 = vmul.f32 %v2427, 1.442695
        %v2507 = vpow.pop %v2506
        %v2508 = vmul.f32 %v2428, 1.442695
        %v2509 = vpow.pop %v2508
        %v2510 = vmul.f32 %v2429, 1.442695
        %v2511 = vpow.pop %v2510
        %v2512 = vmul.f32 %v2430, 1.442695
        %v2513 = vpow.pop %v2512
        %v2514 = vmul.f32 %v2431, 1.442695
        %v2515 = vpow.pop %v2514
        %v2516 = vmul.f32 %v2432, 1.442695
        %v2517 = vpow.pop %v2516
        %v2518 = vmul.f32 %v2433, 1.442695
        %v2519 = vpow.pop %v2518
        %v2520 = vmul.f32 %v2434, 1.442695
        %v2521 = vpow.pop %v2520
        %v2522 = vmul.f32 %v2435, 1.442695
        %v2523 = vpow.pop %v2522
        %v2524 = vmul.f32 %v2436, 1.442695
        %v2525 = vpow.pop %v2524
        %v2526 = vmul.f32 %v2437, 1.442695
        %v2527 = vpow.pop %v2526
        %v2528 = vmul.f32 %v2438, 1.442695
        %v2529 = vpow.pop %v2528
        %v2530 = vmul.f32 %v2439, 1.442695
        %v2531 = vpow.pop %v2530
        %v2532 = vmul.f32 %v2440, 1.442695
        %v2533 = vpow.pop %v2532
        %v2534 = vmul.f32 %v2441, 1.442695
        %v2535 = vpow.pop %v2534
        %v2536 = vmul.f32 %v2442, 1.442695
        %v2537 = vpow.pop %v2536
        %v2538 = vmul.f32 %v2443, 1.442695
        %v2539 = vpow.pop %v2538
        %v2540 = vmul.f32 %v2444, 1.442695
        %v2541 = vpow.pop %v2540
        %v2542 = vmul.f32 %v2445, 1.442695
        %v2543 = vpow.pop %v2542
        %v2544 = vmul.f32 %v2446, 1.442695
        %v2545 = vpow.pop %v2544
        %v2546 = vmul.f32 %v2447, 1.442695
        %v2547 = vpow.pop %v2546
        %v2548 = vmul.f32 %v2448, 1.442695
        %v2549 = vpow.pop %v2548
        %v2550 = vmul.f32 %v2449, 1.442695
        %v2551 = vpow.pop %v2550
        %v2552 = vmul.f32 %v2450, 1.442695
        %v2553 = vpow.pop %v2552
        %v2554 = vmul.f32 %v2451, 1.442695
        %v2555 = vpow.pop %v2554
        %v2556 = vmul.f32 %v2452, 1.442695
        %v2557 = vpow.pop %v2556
        %v2558 = vmul.f32 %v2453, 1.442695
        %v2559 = vpow.pop %v2558
        %v2560 = vmul.f32 %v2454, 1.442695
        %v2561 = vpow.pop %v2560
        %v2562 = vmul.f32 %v2455, 1.442695
        %v2563 = vpow.pop %v2562
        %v2564 = vmul.f32 %v2456, 1.442695
        %v2565 = vpow.pop %v2564
        %v2566 = vmul.f32 %v2457, 1.442695
        %v2567 = vpow.pop %v2566
        %v2568 = vmul.f32 %v2458, 1.442695
        %v2569 = vpow.pop %v2568
        %v2570 = vmul.f32 %v2459, 1.442695
        %v2571 = vpow.pop %v2570
        %v2572 = vmul.f32 %v2460, 1.442695
        %v2573 = vpow.pop %v2572
        %v2574 = vmul.f32 %v2461, 1.442695
        %v2575 = vpow.pop %v2574
        %v2576 = vmul.f32 %v2462, 1.442695
        %v2577 = vpow.pop %v2576
        %v2578 = vmul.f32 %v2463, 1.442695
        %v2579 = vpow.pop %v2578
        %v2580 = vmul.f32 %v2464, 1.442695
        %v2581 = vpow.pop %v2580
        %v2582 = vmul.f32 %v2465, 1.442695
        %v2583 = vpow.pop %v2582
        %v2584 = vmul.f32 %v2466, 1.442695
        %v2585 = vpow.pop %v2584
        %v2586 = vmul.f32 %v2467, 1.442695
        %v2587 = vpow.pop %v2586
        %v2588 = vmul.f32 %v2468, 1.442695
        %v2589 = vpow.pop %v2588
        %v2590 = vmul.f32 %v2469, 1.442695
        %v2591 = vpow.pop %v2590
        %v2592 = vmul.f32 %v2470, 1.442695
        %v2593 = vpow.pop %v2592
        %v2594 = vmul.f32 %v2471, 1.442695
        %v2595 = vpow.pop %v2594
        %v2596 = vmul.f32 %v2472, 1.442695
        %v2597 = vpow.pop %v2596
        %v2598 = vmul.f32 %v2473, 1.442695
        %v2599 = vpow.pop %v2598
        %v2600 = vmul.f32 %v2474, 1.442695
        %v2601 = vpow.pop %v2600
        %v2602 = vmul.f32 %v2475, 1.442695
        %v2603 = vpow.pop %v2602
        %v2604 = vsel %vm634, %v2477, 0.0
        %2605 = vadd.xlane.f32.xlu0 %v2604
        %v2606 = vpop.xlane.xlu0 %2605
        %v2607 = vsel %vm634, %v2479, 0.0
        %2608 = vadd.xlane.f32.xlu0 %v2607
        %v2609 = vpop.xlane.xlu0 %2608
        %v2610 = vsel %vm634, %v2481, 0.0
        %2611 = vadd.xlane.f32.xlu0 %v2610
        %v2612 = vpop.xlane.xlu0 %2611
        %v2613 = vsel %vm634, %v2483, 0.0
        %2614 = vadd.xlane.f32.xlu0 %v2613
        %v2615 = vpop.xlane.xlu0 %2614
        %v2616 = vsel %vm634, %v2485, 0.0
        %2617 = vadd.xlane.f32.xlu0 %v2616
        %v2618 = vpop.xlane.xlu0 %2617
        %v2619 = vsel %vm634, %v2487, 0.0
        %2620 = vadd.xlane.f32.xlu0 %v2619
        %v2621 = vpop.xlane.xlu0 %2620
        %v2622 = vsel %vm634, %v2489, 0.0
        %2623 = vadd.xlane.f32.xlu0 %v2622
        %v2624 = vpop.xlane.xlu0 %2623
        %v2625 = vsel %vm634, %v2491, 0.0
        %2626 = vadd.xlane.f32.xlu0 %v2625
        %v2627 = vpop.xlane.xlu0 %2626
        %v2628 = vsel %vm634, %v2493, 0.0
        %2629 = vadd.xlane.f32.xlu0 %v2628
        %v2630 = vpop.xlane.xlu0 %2629
        %v2631 = vsel %vm634, %v2495, 0.0
        %2632 = vadd.xlane.f32.xlu0 %v2631
        %v2633 = vpop.xlane.xlu0 %2632
        %v2634 = vsel %vm634, %v2497, 0.0
        %2635 = vadd.xlane.f32.xlu0 %v2634
        %v2636 = vpop.xlane.xlu0 %2635
        %v2637 = vsel %vm634, %v2499, 0.0
        %2638 = vadd.xlane.f32.xlu0 %v2637
        %v2639 = vpop.xlane.xlu0 %2638
        %v2640 = vsel %vm634, %v2501, 0.0
        %2641 = vadd.xlane.f32.xlu0 %v2640
        %v2642 = vpop.xlane.xlu0 %2641
        %v2643 = vsel %vm634, %v2503, 0.0
        %2644 = vadd.xlane.f32.xlu0 %v2643
        %v2645 = vpop.xlane.xlu0 %2644
        %v2646 = vsel %vm634, %v2505, 0.0
        %2647 = vadd.xlane.f32.xlu0 %v2646
        %v2648 = vpop.xlane.xlu0 %2647
        %v2649 = vsel %vm634, %v2507, 0.0
        %2650 = vadd.xlane.f32.xlu0 %v2649
        %v2651 = vpop.xlane.xlu0 %2650
        %v2652 = vsel %vm634, %v2509, 0.0
        %2653 = vadd.xlane.f32.xlu0 %v2652
        %v2654 = vpop.xlane.xlu0 %2653
        %v2655 = vsel %vm634, %v2511, 0.0
        %2656 = vadd.xlane.f32.xlu0 %v2655
        %v2657 = vpop.xlane.xlu0 %2656
        %v2658 = vsel %vm634, %v2513, 0.0
        %2659 = vadd.xlane.f32.xlu0 %v2658
        %v2660 = vpop.xlane.xlu0 %2659
        %v2661 = vsel %vm634, %v2515, 0.0
        %2662 = vadd.xlane.f32.xlu0 %v2661
        %v2663 = vpop.xlane.xlu0 %2662
        %v2664 = vsel %vm634, %v2517, 0.0
        %2665 = vadd.xlane.f32.xlu0 %v2664
        %v2666 = vpop.xlane.xlu0 %2665
        %v2667 = vsel %vm634, %v2519, 0.0
        %2668 = vadd.xlane.f32.xlu0 %v2667
        %v2669 = vpop.xlane.xlu0 %2668
        %v2670 = vsel %vm634, %v2521, 0.0
        %2671 = vadd.xlane.f32.xlu0 %v2670
        %v2672 = vpop.xlane.xlu0 %2671
        %v2673 = vsel %vm634, %v2523, 0.0
        %2674 = vadd.xlane.f32.xlu0 %v2673
        %v2675 = vpop.xlane.xlu0 %2674
        %v2676 = vsel %vm634, %v2525, 0.0
        %2677 = vadd.xlane.f32.xlu0 %v2676
        %v2678 = vpop.xlane.xlu0 %2677
        %v2679 = vsel %vm634, %v2527, 0.0
        %2680 = vadd.xlane.f32.xlu0 %v2679
        %v2681 = vpop.xlane.xlu0 %2680
        %v2682 = vsel %vm634, %v2529, 0.0
        %2683 = vadd.xlane.f32.xlu0 %v2682
        %v2684 = vpop.xlane.xlu0 %2683
        %v2685 = vsel %vm634, %v2531, 0.0
        %2686 = vadd.xlane.f32.xlu0 %v2685
        %v2687 = vpop.xlane.xlu0 %2686
        %v2688 = vsel %vm634, %v2533, 0.0
        %2689 = vadd.xlane.f32.xlu0 %v2688
        %v2690 = vpop.xlane.xlu0 %2689
        %v2691 = vsel %vm634, %v2535, 0.0
        %2692 = vadd.xlane.f32.xlu0 %v2691
        %v2693 = vpop.xlane.xlu0 %2692
        %v2694 = vsel %vm634, %v2537, 0.0
        %2695 = vadd.xlane.f32.xlu0 %v2694
        %v2696 = vpop.xlane.xlu0 %2695
        %v2697 = vsel %vm634, %v2539, 0.0
        %2698 = vadd.xlane.f32.xlu0 %v2697
        %v2699 = vpop.xlane.xlu0 %2698
        %v2700 = vsel %vm634, %v2541, 0.0
        %2701 = vadd.xlane.f32.xlu0 %v2700
        %v2702 = vpop.xlane.xlu0 %2701
        %v2703 = vsel %vm634, %v2543, 0.0
        %2704 = vadd.xlane.f32.xlu0 %v2703
        %v2705 = vpop.xlane.xlu0 %2704
        %v2706 = vsel %vm634, %v2545, 0.0
        %2707 = vadd.xlane.f32.xlu0 %v2706
        %v2708 = vpop.xlane.xlu0 %2707
        %v2709 = vsel %vm634, %v2547, 0.0
        %2710 = vadd.xlane.f32.xlu0 %v2709
        %v2711 = vpop.xlane.xlu0 %2710
        %v2712 = vsel %vm634, %v2549, 0.0
        %2713 = vadd.xlane.f32.xlu0 %v2712
        %v2714 = vpop.xlane.xlu0 %2713
        %v2715 = vsel %vm634, %v2551, 0.0
        %2716 = vadd.xlane.f32.xlu0 %v2715
        %v2717 = vpop.xlane.xlu0 %2716
        %v2718 = vsel %vm634, %v2553, 0.0
        %2719 = vadd.xlane.f32.xlu0 %v2718
        %v2720 = vpop.xlane.xlu0 %2719
        %v2721 = vsel %vm634, %v2555, 0.0
        %2722 = vadd.xlane.f32.xlu0 %v2721
        %v2723 = vpop.xlane.xlu0 %2722
        %v2724 = vsel %vm634, %v2557, 0.0
        %2725 = vadd.xlane.f32.xlu0 %v2724
        %v2726 = vpop.xlane.xlu0 %2725
        %v2727 = vsel %vm634, %v2559, 0.0
        %2728 = vadd.xlane.f32.xlu0 %v2727
        %v2729 = vpop.xlane.xlu0 %2728
        %v2730 = vsel %vm634, %v2561, 0.0
        %2731 = vadd.xlane.f32.xlu0 %v2730
        %v2732 = vpop.xlane.xlu0 %2731
        %v2733 = vsel %vm634, %v2563, 0.0
        %2734 = vadd.xlane.f32.xlu0 %v2733
        %v2735 = vpop.xlane.xlu0 %2734
        %v2736 = vsel %vm634, %v2565, 0.0
        %2737 = vadd.xlane.f32.xlu0 %v2736
        %v2738 = vpop.xlane.xlu0 %2737
        %v2739 = vsel %vm634, %v2567, 0.0
        %2740 = vadd.xlane.f32.xlu0 %v2739
        %v2741 = vpop.xlane.xlu0 %2740
        %v2742 = vsel %vm634, %v2569, 0.0
        %2743 = vadd.xlane.f32.xlu0 %v2742
        %v2744 = vpop.xlane.xlu0 %2743
        %v2745 = vsel %vm634, %v2571, 0.0
        %2746 = vadd.xlane.f32.xlu0 %v2745
        %v2747 = vpop.xlane.xlu0 %2746
        %v2748 = vsel %vm634, %v2573, 0.0
        %2749 = vadd.xlane.f32.xlu0 %v2748
        %v2750 = vpop.xlane.xlu0 %2749
        %v2751 = vsel %vm634, %v2575, 0.0
        %2752 = vadd.xlane.f32.xlu0 %v2751
        %v2753 = vpop.xlane.xlu0 %2752
        %v2754 = vsel %vm634, %v2577, 0.0
        %2755 = vadd.xlane.f32.xlu0 %v2754
        %v2756 = vpop.xlane.xlu0 %2755
        %v2757 = vsel %vm634, %v2579, 0.0
        %2758 = vadd.xlane.f32.xlu0 %v2757
        %v2759 = vpop.xlane.xlu0 %2758
        %v2760 = vsel %vm634, %v2581, 0.0
        %2761 = vadd.xlane.f32.xlu0 %v2760
        %v2762 = vpop.xlane.xlu0 %2761
        %v2763 = vsel %vm634, %v2583, 0.0
        %2764 = vadd.xlane.f32.xlu0 %v2763
        %v2765 = vpop.xlane.xlu0 %2764
        %v2766 = vsel %vm634, %v2585, 0.0
        %2767 = vadd.xlane.f32.xlu0 %v2766
        %v2768 = vpop.xlane.xlu0 %2767
        %v2769 = vsel %vm634, %v2587, 0.0
        %2770 = vadd.xlane.f32.xlu0 %v2769
        %v2771 = vpop.xlane.xlu0 %2770
        %v2772 = vsel %vm634, %v2589, 0.0
        %2773 = vadd.xlane.f32.xlu0 %v2772
        %v2774 = vpop.xlane.xlu0 %2773
        %v2775 = vsel %vm634, %v2591, 0.0
        %2776 = vadd.xlane.f32.xlu0 %v2775
        %v2777 = vpop.xlane.xlu0 %2776
        %v2778 = vsel %vm634, %v2593, 0.0
        %2779 = vadd.xlane.f32.xlu0 %v2778
        %v2780 = vpop.xlane.xlu0 %2779
        %v2781 = vsel %vm634, %v2595, 0.0
        %2782 = vadd.xlane.f32.xlu0 %v2781
        %v2783 = vpop.xlane.xlu0 %2782
        %v2784 = vsel %vm634, %v2597, 0.0
        %2785 = vadd.xlane.f32.xlu0 %v2784
        %v2786 = vpop.xlane.xlu0 %2785
        %v2787 = vsel %vm634, %v2599, 0.0
        %2788 = vadd.xlane.f32.xlu0 %v2787
        %v2789 = vpop.xlane.xlu0 %2788
        %v2790 = vsel %vm634, %v2601, 0.0
        %2791 = vadd.xlane.f32.xlu0 %v2790
        %v2792 = vpop.xlane.xlu0 %2791
        %v2793 = vsel %vm634, %v2603, 0.0
        %2794 = vadd.xlane.f32.xlu0 %v2793
        %v2795 = vpop.xlane.xlu0 %2794
        %v2796 = vrcp.pop %v2606
        %v2797 = vmul.f32 %v2477, %v2796
        %v2798 = vrcp.pop %v2609
        %v2799 = vmul.f32 %v2479, %v2798
        %v2800 = vrcp.pop %v2612
        %v2801 = vmul.f32 %v2481, %v2800
        %v2802 = vrcp.pop %v2615
        %v2803 = vmul.f32 %v2483, %v2802
        %v2804 = vrcp.pop %v2618
        %v2805 = vmul.f32 %v2485, %v2804
        %v2806 = vrcp.pop %v2621
        %v2807 = vmul.f32 %v2487, %v2806
        %v2808 = vrcp.pop %v2624
        %v2809 = vmul.f32 %v2489, %v2808
        %v2810 = vrcp.pop %v2627
        %v2811 = vmul.f32 %v2491, %v2810
        %v2812 = vrcp.pop %v2630
        %v2813 = vmul.f32 %v2493, %v2812
        %v2814 = vrcp.pop %v2633
        %v2815 = vmul.f32 %v2495, %v2814
        %v2816 = vrcp.pop %v2636
        %v2817 = vmul.f32 %v2497, %v2816
        %v2818 = vrcp.pop %v2639
        %v2819 = vmul.f32 %v2499, %v2818
        %v2820 = vrcp.pop %v2642
        %v2821 = vmul.f32 %v2501, %v2820
        %v2822 = vrcp.pop %v2645
        %v2823 = vmul.f32 %v2503, %v2822
        %v2824 = vrcp.pop %v2648
        %v2825 = vmul.f32 %v2505, %v2824
        %v2826 = vrcp.pop %v2651
        %v2827 = vmul.f32 %v2507, %v2826
        %v2828 = vrcp.pop %v2654
        %v2829 = vmul.f32 %v2509, %v2828
        %v2830 = vrcp.pop %v2657
        %v2831 = vmul.f32 %v2511, %v2830
        %v2832 = vrcp.pop %v2660
        %v2833 = vmul.f32 %v2513, %v2832
        %v2834 = vrcp.pop %v2663
        %v2835 = vmul.f32 %v2515, %v2834
        %v2836 = vrcp.pop %v2666
        %v2837 = vmul.f32 %v2517, %v2836
        %v2838 = vrcp.pop %v2669
        %v2839 = vmul.f32 %v2519, %v2838
        %v2840 = vrcp.pop %v2672
        %v2841 = vmul.f32 %v2521, %v2840
        %v2842 = vrcp.pop %v2675
        %v2843 = vmul.f32 %v2523, %v2842
        %v2844 = vrcp.pop %v2678
        %v2845 = vmul.f32 %v2525, %v2844
        %v2846 = vrcp.pop %v2681
        %v2847 = vmul.f32 %v2527, %v2846
        %v2848 = vrcp.pop %v2684
        %v2849 = vmul.f32 %v2529, %v2848
        %v2850 = vrcp.pop %v2687
        %v2851 = vmul.f32 %v2531, %v2850
        %v2852 = vrcp.pop %v2690
        %v2853 = vmul.f32 %v2533, %v2852
        %v2854 = vrcp.pop %v2693
        %v2855 = vmul.f32 %v2535, %v2854
        %v2856 = vrcp.pop %v2696
        %v2857 = vmul.f32 %v2537, %v2856
        %v2858 = vrcp.pop %v2699
        %v2859 = vmul.f32 %v2539, %v2858
        %v2860 = vrcp.pop %v2702
        %v2861 = vmul.f32 %v2541, %v2860
        %v2862 = vrcp.pop %v2705
        %v2863 = vmul.f32 %v2543, %v2862
        %v2864 = vrcp.pop %v2708
        %v2865 = vmul.f32 %v2545, %v2864
        %v2866 = vrcp.pop %v2711
        %v2867 = vmul.f32 %v2547, %v2866
        %v2868 = vrcp.pop %v2714
        %v2869 = vmul.f32 %v2549, %v2868
        %v2870 = vrcp.pop %v2717
        %v2871 = vmul.f32 %v2551, %v2870
        %v2872 = vrcp.pop %v2720
        %v2873 = vmul.f32 %v2553, %v2872
        %v2874 = vrcp.pop %v2723
        %v2875 = vmul.f32 %v2555, %v2874
        %v2876 = vrcp.pop %v2726
        %v2877 = vmul.f32 %v2557, %v2876
        %v2878 = vrcp.pop %v2729
        %v2879 = vmul.f32 %v2559, %v2878
        %v2880 = vrcp.pop %v2732
        %v2881 = vmul.f32 %v2561, %v2880
        %v2882 = vrcp.pop %v2735
        %v2883 = vmul.f32 %v2563, %v2882
        %v2884 = vrcp.pop %v2738
        %v2885 = vmul.f32 %v2565, %v2884
        %v2886 = vrcp.pop %v2741
        %v2887 = vmul.f32 %v2567, %v2886
        %v2888 = vrcp.pop %v2744
        %v2889 = vmul.f32 %v2569, %v2888
        %v2890 = vrcp.pop %v2747
        %v2891 = vmul.f32 %v2571, %v2890
        %v2892 = vrcp.pop %v2750
        %v2893 = vmul.f32 %v2573, %v2892
        %v2894 = vrcp.pop %v2753
        %v2895 = vmul.f32 %v2575, %v2894
        %v2896 = vrcp.pop %v2756
        %v2897 = vmul.f32 %v2577, %v2896
        %v2898 = vrcp.pop %v2759
        %v2899 = vmul.f32 %v2579, %v2898
        %v2900 = vrcp.pop %v2762
        %v2901 = vmul.f32 %v2581, %v2900
        %v2902 = vrcp.pop %v2765
        %v2903 = vmul.f32 %v2583, %v2902
        %v2904 = vrcp.pop %v2768
        %v2905 = vmul.f32 %v2585, %v2904
        %v2906 = vrcp.pop %v2771
        %v2907 = vmul.f32 %v2587, %v2906
        %v2908 = vrcp.pop %v2774
        %v2909 = vmul.f32 %v2589, %v2908
        %v2910 = vrcp.pop %v2777
        %v2911 = vmul.f32 %v2591, %v2910
        %v2912 = vrcp.pop %v2780
        %v2913 = vmul.f32 %v2593, %v2912
        %v2914 = vrcp.pop %v2783
        %v2915 = vmul.f32 %v2595, %v2914
        %v2916 = vrcp.pop %v2786
        %v2917 = vmul.f32 %v2597, %v2916
        %v2918 = vrcp.pop %v2789
        %v2919 = vmul.f32 %v2599, %v2918
        %v2920 = vrcp.pop %v2792
        %v2921 = vmul.f32 %v2601, %v2920
        %v2922 = vrcp.pop %v2795
        %v2923 = vmul.f32 %v2603, %v2922
        %v2924 = vmul.f32 %v2797, %v1653
        %v2925 = vmul.f32 %v2799, %v1655
        %v2926 = vmul.f32 %v2801, %v1657
        %v2927 = vmul.f32 %v2803, %v1659
        %v2928 = vmul.f32 %v2805, %v1661
        %v2929 = vmul.f32 %v2807, %v1663
        %v2930 = vmul.f32 %v2809, %v1665
        %v2931 = vmul.f32 %v2811, %v1667
        %v2932 = vmul.f32 %v2813, %v1669
        %v2933 = vmul.f32 %v2815, %v1671
        %v2934 = vmul.f32 %v2817, %v1673
        %v2935 = vmul.f32 %v2819, %v1675
        %v2936 = vmul.f32 %v2821, %v1677
        %v2937 = vmul.f32 %v2823, %v1679
        %v2938 = vmul.f32 %v2825, %v1681
        %v2939 = vmul.f32 %v2827, %v1683
        %v2940 = vmul.f32 %v2829, %v1685
        %v2941 = vmul.f32 %v2831, %v1687
        %v2942 = vmul.f32 %v2833, %v1689
        %v2943 = vmul.f32 %v2835, %v1691
        %v2944 = vmul.f32 %v2837, %v1693
        %v2945 = vmul.f32 %v2839, %v1695
        %v2946 = vmul.f32 %v2841, %v1697
        %v2947 = vmul.f32 %v2843, %v1699
        %v2948 = vmul.f32 %v2845, %v1701
        %v2949 = vmul.f32 %v2847, %v1703
        %v2950 = vmul.f32 %v2849, %v1705
        %v2951 = vmul.f32 %v2851, %v1707
        %v2952 = vmul.f32 %v2853, %v1709
        %v2953 = vmul.f32 %v2855, %v1711
        %v2954 = vmul.f32 %v2857, %v1713
        %v2955 = vmul.f32 %v2859, %v1715
        %v2956 = vmul.f32 %v2861, %v1717
        %v2957 = vmul.f32 %v2863, %v1719
        %v2958 = vmul.f32 %v2865, %v1721
        %v2959 = vmul.f32 %v2867, %v1723
        %v2960 = vmul.f32 %v2869, %v1725
        %v2961 = vmul.f32 %v2871, %v1727
        %v2962 = vmul.f32 %v2873, %v1729
        %v2963 = vmul.f32 %v2875, %v1731
        %v2964 = vmul.f32 %v2877, %v1733
        %v2965 = vmul.f32 %v2879, %v1735
        %v2966 = vmul.f32 %v2881, %v1737
        %v2967 = vmul.f32 %v2883, %v1739
        %v2968 = vmul.f32 %v2885, %v1741
        %v2969 = vmul.f32 %v2887, %v1743
        %v2970 = vmul.f32 %v2889, %v1745
        %v2971 = vmul.f32 %v2891, %v1747
        %v2972 = vmul.f32 %v2893, %v1749
        %v2973 = vmul.f32 %v2895, %v1751
        %v2974 = vmul.f32 %v2897, %v1753
        %v2975 = vmul.f32 %v2899, %v1755
        %v2976 = vmul.f32 %v2901, %v1757
        %v2977 = vmul.f32 %v2903, %v1759
        %v2978 = vmul.f32 %v2905, %v1761
        %v2979 = vmul.f32 %v2907, %v1763
        %v2980 = vmul.f32 %v2909, %v1765
        %v2981 = vmul.f32 %v2911, %v1767
        %v2982 = vmul.f32 %v2913, %v1769
        %v2983 = vmul.f32 %v2915, %v1771
        %v2984 = vmul.f32 %v2917, %v1773
        %v2985 = vmul.f32 %v2919, %v1775
        %v2986 = vmul.f32 %v2921, %v1777
        %v2987 = vmul.f32 %v2923, %v1779
        %v2988 = vadd.f32 %v2924, %v2928
        %v2989 = vadd.f32 %v2925, %v2929
        %v2990 = vadd.f32 %v2926, %v2930
        %v2991 = vadd.f32 %v2927, %v2931
        %v2992 = vadd.f32 %v2956, %v2960
        %v2993 = vadd.f32 %v2957, %v2961
        %v2994 = vadd.f32 %v2958, %v2962
        %v2995 = vadd.f32 %v2959, %v2963
        %v2996 = vadd.f32 %v2988, %v2932
        %v2997 = vadd.f32 %v2989, %v2933
        %v2998 = vadd.f32 %v2990, %v2934
        %v2999 = vadd.f32 %v2991, %v2935
        %v3000 = vadd.f32 %v2992, %v2964
        %v3001 = vadd.f32 %v2993, %v2965
        %v3002 = vadd.f32 %v2994, %v2966
        %v3003 = vadd.f32 %v2995, %v2967
        %v3004 = vadd.f32 %v2996, %v2936
        %v3005 = vadd.f32 %v2997, %v2937
        %v3006 = vadd.f32 %v2998, %v2938
        %v3007 = vadd.f32 %v2999, %v2939
        %v3008 = vadd.f32 %v3000, %v2968
        %v3009 = vadd.f32 %v3001, %v2969
        %v3010 = vadd.f32 %v3002, %v2970
        %v3011 = vadd.f32 %v3003, %v2971
        %v3012 = vadd.f32 %v3004, %v2940
        %v3013 = vadd.f32 %v3005, %v2941
        %v3014 = vadd.f32 %v3006, %v2942
        %v3015 = vadd.f32 %v3007, %v2943
        %v3016 = vadd.f32 %v3008, %v2972
        %v3017 = vadd.f32 %v3009, %v2973
        %v3018 = vadd.f32 %v3010, %v2974
        %v3019 = vadd.f32 %v3011, %v2975
        %v3020 = vadd.f32 %v3012, %v2944
        %v3021 = vadd.f32 %v3013, %v2945
        %v3022 = vadd.f32 %v3014, %v2946
        %v3023 = vadd.f32 %v3015, %v2947
        %v3024 = vadd.f32 %v3016, %v2976
        %v3025 = vadd.f32 %v3017, %v2977
        %v3026 = vadd.f32 %v3018, %v2978
        %v3027 = vadd.f32 %v3019, %v2979
        %v3028 = vadd.f32 %v3020, %v2948
        %v3029 = vadd.f32 %v3021, %v2949
        %v3030 = vadd.f32 %v3022, %v2950
        %v3031 = vadd.f32 %v3023, %v2951
        %v3032 = vadd.f32 %v3024, %v2980
        %v3033 = vadd.f32 %v3025, %v2981
        %v3034 = vadd.f32 %v3026, %v2982
        %v3035 = vadd.f32 %v3027, %v2983
        %v3036 = vadd.f32 %v3028, %v2952
        %v3037 = vadd.f32 %v3029, %v2953
        %v3038 = vadd.f32 %v3030, %v2954
        %v3039 = vadd.f32 %v3031, %v2955
        %v3040 = vadd.f32 %v3032, %v2984
        %v3041 = vadd.f32 %v3033, %v2985
        %v3042 = vadd.f32 %v3034, %v2986
        %v3043 = vadd.f32 %v3035, %v2987
        %v3044 = vld [vmem:[#allocation12] sm:$0xff]
        %v3045 = vld [vmem:[#allocation12 + $0x8] sm:$0xff]
        %v3046 = vld [vmem:[#allocation12 + $0x10] sm:$0xff]
        %v3047 = vld [vmem:[#allocation12 + $0x18] sm:$0xff]
        %v3048 = vld [vmem:[%s9] sm:$0xff]
        %v3049 = vld [vmem:[%s9 + $0x8] sm:$0xff]
        %v3050 = vld [vmem:[%s9 + $0x10] sm:$0xff]
        %v3051 = vld [vmem:[%s9 + $0x18] sm:$0xff]
        %v3053 = vsel %vm634, %v3040, 0
        %v3056 = vsel %vm634, %v3041, 0
        %v3059 = vsel %vm634, %v3042, 0
        %v3062 = vsel %vm634, %v3043, 0
        %3064 = vmatprep.subr.mxu0 0.0
        %3065 = vmatpush1.msra.mxu0 %v3048
        %3066 = vmatprep.subr.mxu0 0.0
        %3067 = vmatpush1.msra.mxu0 %v3049
        %3068 = vmatprep.subr.mxu0 0.0
        %3069 = vmatpush1.msra.mxu0 %v3050
        %3070 = vmatprep.subr.mxu0 0.0
        %3071 = vmatpush1.msra.mxu0 %v3051
        %3072 = vmatprep.subr.mxu0 0.0
        %3073 = vmatpush1.msra.mxu0 0.0
        %3074 = vmatprep.subr.mxu0 0.0
        %3075 = vmatpush1.msra.mxu0 0.0
        %3076 = vmatprep.subr.mxu0 0.0
        %3077 = vmatpush1.msra.mxu0 0.0
        %3078 = vmatprep.subr.mxu0 0.0
        %3079 = vmatpush1.msra.mxu0 0.0
        %3080 = vmatprep.subr.mxu0 0.0
        %3081 = vmatpush1.msra.mxu0 0.0
        %3082 = vmatprep.subr.mxu0 0.0
        %3083 = vmatpush1.msra.mxu0 0.0
        %3084 = vmatprep.subr.mxu0 0.0
        %3085 = vmatpush1.msra.mxu0 0.0
        %3086 = vmatprep.subr.mxu0 0.0
        %3087 = vmatpush1.msra.mxu0 0.0
        %3088 = vmatprep.subr.mxu0 0.0
        %3089 = vmatpush1.msra.mxu0 0.0
        %3090 = vmatprep.subr.mxu0 0.0
        %3091 = vmatpush1.msra.mxu0 0.0
        %3092 = vmatprep.subr.mxu0 0.0
        %3093 = vmatpush1.msra.mxu0 0.0
        %3094 = vmatprep.subr.mxu0 0.0
        %3095 = vmatpush1.msra.mxu0 0.0
        %3096 = vmatprep.subr.mxu0 0.0
        %3097 = vmatpush1.msra.mxu0 0.0
        %3098 = vmatprep.subr.mxu0 0.0
        %3099 = vmatpush1.msra.mxu0 0.0
        %3100 = vmatprep.subr.mxu0 0.0
        %3101 = vmatpush1.msra.mxu0 0.0
        %3102 = vmatprep.subr.mxu0 0.0
        %3103 = vmatpush1.msra.mxu0 0.0
        %3104 = vmatprep.subr.mxu0 0.0
        %3105 = vmatpush1.msra.mxu0 0.0
        %3106 = vmatprep.subr.mxu0 0.0
        %3107 = vmatpush1.msra.mxu0 0.0
        %3108 = vmatprep.subr.mxu0 0.0
        %3109 = vmatpush1.msra.mxu0 0.0
        %3110 = vmatprep.subr.mxu0 0.0
        %3111 = vmatpush1.msra.mxu0 0.0
        %3112 = vmatprep.subr.mxu0 0.0
        %3113 = vmatpush1.msra.mxu0 0.0
        %3114 = vmatprep.subr.mxu0 0.0
        %3115 = vmatpush1.msra.mxu0 0.0
        %3116 = vmatprep.subr.mxu0 0.0
        %3117 = vmatpush1.msra.mxu0 0.0
        %3118 = vmatprep.subr.mxu0 0.0
        %3119 = vmatpush1.msra.mxu0 0.0
        %3120 = vmatprep.subr.mxu0 0.0
        %3121 = vmatpush1.msra.mxu0 0.0
        %3122 = vmatprep.subr.mxu0 0.0
        %3123 = vmatpush1.msra.mxu0 0.0
        %3124 = vmatprep.subr.mxu0 0.0
        %3125 = vmatpush1.msra.mxu0 0.0
        %3126 = vmatprep.subr.mxu0 0.0
        %3127 = vmatpush1.msra.mxu0 0.0
        %3128 = vmatprep.mubr.f32.mxu0 0.0
        %3129 = vmatmul.mubr.f32.gmra.mrb[0].mxu0 %v3053
        %v3130 = vpop.f32.mrb[0].mxu0
        %v3131 = vadd.f32 0.0, %v3130
        %v3132 = vpop.f32.mrb[0].mxu0
        %3133 = vmatprep.mubr.f32.mxu0 0.0
        %3134 = vmatmul.mubr.f32.gmra.mrb[0].mxu0 %v3056
        %v3135 = vpop.f32.mrb[0].mxu0
        %v3136 = vadd.f32 0.0, %v3135
        %v3137 = vpop.f32.mrb[0].mxu0
        %3138 = vmatprep.mubr.f32.mxu0 0.0
        %3139 = vmatmul.mubr.f32.gmra.mrb[0].mxu0 %v3059
        %v3140 = vpop.f32.mrb[0].mxu0
        %v3141 = vadd.f32 0.0, %v3140
        %v3142 = vpop.f32.mrb[0].mxu0
        %3143 = vmatprep.mubr.f32.mxu0 0.0
        %3144 = vmatmul.mubr.f32.gmra.mrb[0].mxu0 %v3062
        %v3145 = vpop.f32.mrb[0].mxu0
        %v3146 = vadd.f32 0.0, %v3145
        %v3147 = vpop.f32.mrb[0].mxu0
        %3148 = vdwg.mxu0
        %v3150 = vsel %vm634, %v3036, 0
        %v3153 = vsel %vm634, %v3037, 0
        %v3156 = vsel %vm634, %v3038, 0
        %v3159 = vsel %vm634, %v3039, 0
        %3161 = vmatprep.subr.mxu0 0.0
        %3162 = vmatpush1.msra.mxu0 %v3044
        %3163 = vmatprep.subr.mxu0 0.0
        %3164 = vmatpush1.msra.mxu0 %v3045
        %3165 = vmatprep.subr.mxu0 0.0
        %3166 = vmatpush1.msra.mxu0 %v3046
        %3167 = vmatprep.subr.mxu0 0.0
        %3168 = vmatpush1.msra.mxu0 %v3047
        %3169 = vmatprep.subr.mxu0 0.0
        %3170 = vmatpush1.msra.mxu0 0.0
        %3171 = vmatprep.subr.mxu0 0.0
        %3172 = vmatpush1.msra.mxu0 0.0
        %3173 = vmatprep.subr.mxu0 0.0
        %3174 = vmatpush1.msra.mxu0 0.0
        %3175 = vmatprep.subr.mxu0 0.0
        %3176 = vmatpush1.msra.mxu0 0.0
        %3177 = vmatprep.subr.mxu0 0.0
        %3178 = vmatpush1.msra.mxu0 0.0
        %3179 = vmatprep.subr.mxu0 0.0
        %3180 = vmatpush1.msra.mxu0 0.0
        %3181 = vmatprep.subr.mxu0 0.0
        %3182 = vmatpush1.msra.mxu0 0.0
        %3183 = vmatprep.subr.mxu0 0.0
        %3184 = vmatpush1.msra.mxu0 0.0
        %3185 = vmatprep.subr.mxu0 0.0
        %3186 = vmatpush1.msra.mxu0 0.0
        %3187 = vmatprep.subr.mxu0 0.0
        %3188 = vmatpush1.msra.mxu0 0.0
        %3189 = vmatprep.subr.mxu0 0.0
        %3190 = vmatpush1.msra.mxu0 0.0
        %3191 = vmatprep.subr.mxu0 0.0
        %3192 = vmatpush1.msra.mxu0 0.0
        %3193 = vmatprep.subr.mxu0 0.0
        %3194 = vmatpush1.msra.mxu0 0.0
        %3195 = vmatprep.subr.mxu0 0.0
        %3196 = vmatpush1.msra.mxu0 0.0
        %3197 = vmatprep.subr.mxu0 0.0
        %3198 = vmatpush1.msra.mxu0 0.0
        %3199 = vmatprep.subr.mxu0 0.0
        %3200 = vmatpush1.msra.mxu0 0.0
        %3201 = vmatprep.subr.mxu0 0.0
        %3202 = vmatpush1.msra.mxu0 0.0
        %3203 = vmatprep.subr.mxu0 0.0
        %3204 = vmatpush1.msra.mxu0 0.0
        %3205 = vmatprep.subr.mxu0 0.0
        %3206 = vmatpush1.msra.mxu0 0.0
        %3207 = vmatprep.subr.mxu0 0.0
        %3208 = vmatpush1.msra.mxu0 0.0
        %3209 = vmatprep.subr.mxu0 0.0
        %3210 = vmatpush1.msra.mxu0 0.0
        %3211 = vmatprep.subr.mxu0 0.0
        %3212 = vmatpush1.msra.mxu0 0.0
        %3213 = vmatprep.subr.mxu0 0.0
        %3214 = vmatpush1.msra.mxu0 0.0
        %3215 = vmatprep.subr.mxu0 0.0
        %3216 = vmatpush1.msra.mxu0 0.0
        %3217 = vmatprep.subr.mxu0 0.0
        %3218 = vmatpush1.msra.mxu0 0.0
        %3219 = vmatprep.subr.mxu0 0.0
        %3220 = vmatpush1.msra.mxu0 0.0
        %3221 = vmatprep.subr.mxu0 0.0
        %3222 = vmatpush1.msra.mxu0 0.0
        %3223 = vmatprep.subr.mxu0 0.0
        %3224 = vmatpush1.msra.mxu0 0.0
        %3225 = vmatprep.mubr.f32.mxu0 0.0
        %3226 = vmatmul.mubr.f32.gmra.mrb[0].mxu0 %v3150
        %v3227 = vpop.f32.mrb[0].mxu0
        %v3228 = vadd.f32 %v3131, %v3227
        %v3229 = vpop.f32.mrb[0].mxu0
        %3230 = vmatprep.mubr.f32.mxu0 0.0
        %3231 = vmatmul.mubr.f32.gmra.mrb[0].mxu0 %v3153
        %v3232 = vpop.f32.mrb[0].mxu0
        %v3233 = vadd.f32 %v3136, %v3232
        %v3234 = vpop.f32.mrb[0].mxu0
        %3235 = vmatprep.mubr.f32.mxu0 0.0
        %3236 = vmatmul.mubr.f32.gmra.mrb[0].mxu0 %v3156
        %v3237 = vpop.f32.mrb[0].mxu0
        %v3238 = vadd.f32 %v3141, %v3237
        %v3239 = vpop.f32.mrb[0].mxu0
        %3240 = vmatprep.mubr.f32.mxu0 0.0
        %3241 = vmatmul.mubr.f32.gmra.mrb[0].mxu0 %v3159
        %v3242 = vpop.f32.mrb[0].mxu0
        %v3243 = vadd.f32 %v3146, %v3242
        %v3244 = vpop.f32.mrb[0].mxu0
        %3245 = vdwg.mxu0
        %v3246 = vld [vmem:[%s10] sm:$0x1]
        %v3248 = vlaneseq
        %v3249 = vshrl.u32 %v3248, 7
        %v3250 = vsub.s32 0, %v3249
        %v3251 = vrot.slane %v3246, %v3250
        %v3253 = vadd.f32 %v3228, %v3251
        %v3254 = vadd.f32 %v3233, %v3251
        %v3255 = vadd.f32 %v3238, %v3251
        %v3256 = vadd.f32 %v3243, %v3251
        %v3257 = vand.u32 2147483647, %v3253
        %v3258 = vand.u32 2147483647, %v3254
        %v3259 = vand.u32 2147483647, %v3255
        %v3260 = vand.u32 2147483647, %v3256
        %vm3261 = vcmp.eq.f32.partialorder %v3257, inf
        %vm3262 = vcmp.eq.f32.partialorder %v3258, inf
        %vm3263 = vcmp.eq.f32.partialorder %v3259, inf
        %vm3264 = vcmp.eq.f32.partialorder %v3260, inf
        %v3265 = vsel %vm3261, 100.0, %v3253
        %v3266 = vsel %vm3262, 100.0, %v3254
        %v3267 = vsel %vm3263, 100.0, %v3255
        %v3268 = vsel %vm3264, 100.0, %v3256
        %vm3269 = vcmp.ne.f32.partialorder %v3265, %v3265
        %vm3270 = vcmp.ne.f32.partialorder %v3266, %v3266
        %vm3271 = vcmp.ne.f32.partialorder %v3267, %v3267
        %vm3272 = vcmp.ne.f32.partialorder %v3268, %v3268
        %v3273 = vsel %vm3269, 0.0, %v3265
        %v3274 = vsel %vm3270, 0.0, %v3266
        %v3275 = vsel %vm3271, 0.0, %v3267
        %v3276 = vsel %vm3272, 0.0, %v3268
        %3277 = vst.msk [vmem:[%s520] sm:$0xff] %vm634, %v3273
        %3278 = vst.msk [vmem:[%s520 + $0x8] sm:$0xff] %vm634, %v3274
        %3279 = vst.msk [vmem:[%s520 + $0x10] sm:$0xff] %vm634, %v3275
        %3280 = vst.msk [vmem:[%s520 + $0x18] sm:$0xff] %vm634, %v3276
        %s3281 = smul.u32 4, %s30
        %p3282 = scmp.lt.s32.totalorder %s3281, 7
        %s3283 = scalar_select %p3282, %s3281, 7
        %s3284 = smul.addr %s3283, 8
        %s3285 = scalar_lea.vmem %s11, %s3284
        // Predicated region
        $region93: #{tpu_custom_call.1} parent=63 // pred_check
          %p3286 = pneg %p289
        $region94: #{tpu_custom_call.1} parent=63 // pred_check_branch
          %3288 = sbr.rel (%p3286) target = $region96
        $region95: #{tpu_custom_call.1} parent=63 // pred_region
          %s3289 = smul.u32 4, %s30
        $region96: #{tpu_custom_call.1} parent=63 // pred_fallthru
          _
      $region64: #{tpu_custom_call.1} parent=5 // pred_fallthru
        _
      %p3290 = scmp.le.s32.totalorder 2, %s25
      // Predicated region
      $region97: #{tpu_custom_call.1} parent=5 // pred_check
        %p3291 = pneg %p3290
      $region98: #{tpu_custom_call.1} parent=5 // pred_check_branch
        %3293 = sbr.rel (%p3291) target = $region100
      $region99: #{tpu_custom_call.1} parent=5 // pred_region
        %s3294 = ssub.s32 %s25, 2
        // Predicated region
        $region101: #{tpu_custom_call.1} parent=99 // pred_check
          %p3295 = pneg %p295
        $region102: #{tpu_custom_call.1} parent=99 // pred_check_branch
          %3297 = sbr.rel (%p3295) target = $region104
        $region103: #{tpu_custom_call.1} parent=99 // pred_region
          %s3298 = smul.u32 4, %s31
          %p3299 = scmp.lt.s32.totalorder %s3298, 7
          %s3300 = scalar_select %p3299, %s3298, 7
          %s3301 = smul.addr %s3300, 8
          %s3302 = scalar_lea.vmem %s11, %s3301
        $region104: #{tpu_custom_call.1} parent=99 // pred_fallthru
          _
      $region100: #{tpu_custom_call.1} parent=5 // pred_fallthru
        _
    $region6: #{tpu_custom_call.1} parent=1 // loop_footer
      %s29 = sadd.s32 1, %s25
    $region7: #{tpu_custom_call.1} parent=1 // loop_footer_branch
      %24 = sbr.rel target = $region3
    $region8: #{tpu_custom_call.1} parent=1 // loop_exit
      _
    %3303 = vsyncpa [#allocation3], 1
    %s3304 = scalar_lea.sflag [#allocation3], 1
    %3305 = vsyncpa %s3304, 1
    %3306 = vsyncpa [#allocation5], 1
    %s3307 = scalar_lea.sflag [#allocation5], 1
    %3308 = vsyncpa %s3307, 1
    %3309 = vsyncpa [#allocation8], 1
    %3310 = vsyncpa [#allocation11], 1

</llo_original>
